<compile_context>
chip_gen: v5e
topology: v5e:2x2
jax: 0.10.0
libtpu: 0.0.40
codegen_flags: <defaults>
</compile_context>

<pallas_src>
import math

import jax
import jax.numpy as jnp
from jax.experimental import pallas as pl
from jax.experimental.pallas import tpu as pltpu

K = 3            # conv kernel size (3x3, stride 1, padding 1)
LANES = 128      # TPU lane width: output channels padded to a multiple of this


def _round_up(x, m):
    return (x + m - 1) // m * m


def _convblock_kernel(x_ref, w1_ref, b1_ref, a1_ref, w2_ref, b2_ref, a2_ref,
                      o_ref):
    """Fused PReLU(conv3x3(PReLU(conv3x3(x)))) for one batch element.

    x_ref : (1, H, W, Cin) f32   un-padded NHWC input tile
    w1_ref: (9, Cin, Cp)   bf16  layer-1 weights, tap-major (dy*3 + dx)
    b1_ref: (1, Cp)        f32   layer-1 bias
    a1_ref: (1, Cp)        f32   layer-1 per-channel PReLU slope
    w2_ref: (9, Cp, Cp)    bf16  layer-2 weights
    b2_ref: (1, Cp)        f32
    a2_ref: (1, Cp)        f32
    o_ref : (1, H, W, Cp)  f32   channel-padded output tile (lane-dense)
    """
    _, H, W, Cp = o_ref.shape
    Cin = x_ref.shape[3]
    HW = H * W

    # Row / col index of every flattened pixel, shape (HW, 1) (2-D+ iota only).
    row = jax.lax.broadcasted_iota(jnp.int32, (H, W, 1), 0).reshape(HW, 1)
    col = jax.lax.broadcasted_iota(jnp.int32, (H, W, 1), 1).reshape(HW, 1)

    # Per-tap circular shift (np.roll convention: out[i] = in[i - shift]) and
    # 0/1 border mask.  The mask zeroes pixels whose source (h+dy-1, w+dx-1)
    # falls outside the image, which also kills the roll's wrap-around rows.
    shifts, masks = [], []
    for dy in range(K):
        for dx in range(K):
            shifts.append(((1 - dy) * W + (1 - dx)) % HW)
            cond = None
            if dy == 0:
                cond = row >= 1
            elif dy == K - 1:
                cond = row <= H - 2
            if dx == 0:
                c = col >= 1
                cond = c if cond is None else jnp.logical_and(cond, c)
            elif dx == K - 1:
                c = col <= W - 2
                cond = c if cond is None else jnp.logical_and(cond, c)
            masks.append(None if cond is None else cond.astype(jnp.float32))

    def conv3x3_prelu(act, w_ref, b_ref, a_ref):
        # act: (HW, C_layer_in) f32  ->  (HW, Cp) f32
        acc = jnp.zeros((HW, Cp), jnp.float32)
        for t in range(K * K):
            tap = act if shifts[t] == 0 else pltpu.roll(act, shifts[t], axis=0)
            if masks[t] is not None:
                tap = tap * masks[t]                     # zero halo pixels
            acc = acc + jnp.dot(tap.astype(jnp.bfloat16), w_ref[t],
                                preferred_element_type=jnp.float32)
        y = acc + b_ref[...]                             # (HW,Cp) + (1,Cp)
        return jnp.where(y > 0, y, a_ref[...] * y)       # per-channel PReLU

    # Flatten (layout preserving when W % 8 == 0, as it is here).
    x = x_ref[0].reshape(HW, Cin)
    y1 = conv3x3_prelu(x, w1_ref, b1_ref, a1_ref)
    y2 = conv3x3_prelu(y1, w2_ref, b2_ref, a2_ref)
    o_ref[0] = y2.reshape(H, W, Cp).astype(o_ref.dtype)


def prepare_params(params):
    """Pad channels to a lane-dense multiple of 128, flatten the 3x3 taps and
    cast the matmul operands to bf16.  (In production do this once at load.)"""
    w1, b1, a1, w2, b2, a2 = params            # natural HWIO / (Cout,) shapes
    cin, cout = w1.shape[2], w1.shape[3]
    cp = _round_up(cout, LANES)
    po = cp - cout

    w1p = jnp.pad(w1, ((0, 0), (0, 0), (0, 0), (0, po)))
    w1p = w1p.reshape(K * K, cin, cp).astype(jnp.bfloat16)
    w2p = jnp.pad(w2, ((0, 0), (0, 0), (0, po), (0, po)))
    w2p = w2p.reshape(K * K, cp, cp).astype(jnp.bfloat16)

    def vec(v):  # (Cout,) -> (1, Cp) f32
        return jnp.pad(v, (0, po)).reshape(1, cp).astype(jnp.float32)

    return (w1p, vec(b1), vec(a1), w2p, vec(b2), vec(a2)), cout, cp


def _conv_block_nhwc(x_nhwc, params):
    """NHWC fast path (no layout transposes). Returns NHWC, true Cout channels."""
    N, H, W, cin = x_nhwc.shape
    (w1p, b1p, a1p, w2p, b2p, a2p), cout, cp = prepare_params(params)

    out_padded = pl.pallas_call(
        _convblock_kernel,
        out_shape=jax.ShapeDtypeStruct((N, H, W, cp), jnp.float32),
        grid_spec=pltpu.PrefetchScalarGridSpec(
            num_scalar_prefetch=0,
            grid=(N,),
            in_specs=[
                pl.BlockSpec((1, H, W, cin), lambda n: (n, 0, 0, 0)),
                pl.BlockSpec((K * K, cin, cp), lambda n: (0, 0, 0)),
                pl.BlockSpec((1, cp), lambda n: (0, 0)),
                pl.BlockSpec((1, cp), lambda n: (0, 0)),
                pl.BlockSpec((K * K, cp, cp), lambda n: (0, 0, 0)),
                pl.BlockSpec((1, cp), lambda n: (0, 0)),
                pl.BlockSpec((1, cp), lambda n: (0, 0)),
            ],
            out_specs=pl.BlockSpec((1, H, W, cp), lambda n: (n, 0, 0, 0)),
        ),
        compiler_params=pltpu.CompilerParams(
            dimension_semantics=("parallel",)),
    )(x_nhwc, w1p, b1p, a1p, w2p, b2p, a2p)

    return out_padded[..., :cout]


@jax.jit
def conv_block_pallas(x_nchw, params):
    """PyTorch-layout entry point: (N, Cin, H, W) f32 -> (N, Cout, H, W) f32."""
    # TODO(synk): in NHWC pipelines call _conv_block_nhwc directly to drop the
    # two layout transposes (each is a full HBM round trip in XLA glue).
    x_nhwc = jnp.transpose(x_nchw, (0, 2, 3, 1))
    out_nhwc = _conv_block_nhwc(x_nhwc, params)
    return jnp.transpose(out_nhwc, (0, 3, 1, 2))


def init_params(key, in_dim, out_dim):
    """Synthetic params mirroring ConvBlock._init_weights:
    conv w ~ N(0, sqrt(2/(k*k*out_dim))), bias = 0, PReLU slope = 0.25 (PyTorch
    default).  Conv weights stored HWIO; bias / slope as (out_dim,) vectors."""
    k1, k2 = jax.random.split(key)
    std = math.sqrt(2.0 / (K * K * out_dim))
    w1 = std * jax.random.normal(k1, (K, K, in_dim, out_dim), jnp.float32)
    w2 = std * jax.random.normal(k2, (K, K, out_dim, out_dim), jnp.float32)
    b1 = jnp.zeros((out_dim,), jnp.float32)
    b2 = jnp.zeros((out_dim,), jnp.float32)
    a1 = jnp.full((out_dim,), 0.25, jnp.float32)
    a2 = jnp.full((out_dim,), 0.25, jnp.float32)
    return (w1, b1, a1, w2, b2, a2)


def conv_block_reference(x_nchw, params):
    """Pure-JAX f32 reference (lax.conv) for correctness checking."""
    w1, b1, a1, w2, b2, a2 = params

    def conv_prelu(x, w, b, a):
        y = jax.lax.conv_general_dilated(
            x, w, window_strides=(1, 1), padding=((1, 1), (1, 1)),
            dimension_numbers=("NCHW", "HWIO", "NCHW"))
        y = y + b[None, :, None, None]
        alpha = a[None, :, None, None]
        return jnp.where(y > 0, y, alpha * y)

    return conv_prelu(conv_prelu(x_nchw, w1, b1, a1), w2, b2, a2)


if __name__ == "__main__":
    key = jax.random.PRNGKey(0)
    kx, kp = jax.random.split(key)

    N, Cin, Cout, H, W = 2, 4, 8, 16, 16
    x = jax.random.normal(kx, (N, Cin, H, W), jnp.float32)
    params = init_params(kp, Cin, Cout)

    out = jax.block_until_ready(conv_block_pallas(x, params))
    ref = conv_block_reference(x, params)

    assert out.shape == (N, Cout, H, W)
    # bf16 MXU operands (f32 accumulation) vs. an all-f32 reference -> loose tol.
    err = float(jnp.max(jnp.abs(out - ref)))
    assert jnp.allclose(out, ref, atol=5e-2, rtol=5e-2), (
        f"mismatch vs reference (max abs err {err:.3e})")

    print("KERNEL_OK")
</pallas_src>

<mosaic_0001>
module attributes {stable_mosaic.version = 11 : i64} {
  func.func @_convblock_kernel(%arg0: i32, %arg1: memref<1x16x16x4xf32, #tpu.memory_space<vmem>>, %arg2: memref<9x4x128xbf16, #tpu.memory_space<vmem>>, %arg3: memref<1x128xf32, #tpu.memory_space<vmem>>, %arg4: memref<1x128xf32, #tpu.memory_space<vmem>>, %arg5: memref<9x128x128xbf16, #tpu.memory_space<vmem>>, %arg6: memref<1x128xf32, #tpu.memory_space<vmem>>, %arg7: memref<1x128xf32, #tpu.memory_space<vmem>>, %arg8: memref<1x16x16x128xf32, #tpu.memory_space<vmem>>) attributes {dimension_semantics = [#tpu.dimension_semantics<parallel>], iteration_bounds = array<i64: 2>, scalar_prefetch = 0 : i64, scratch_operands = 0 : i64, tpu.core_type = #tpu.core_type<tc>, window_params = [{transform_indices = @transform_0, window_bounds = array<i64: 1, 16, 16, 4>}, {pipeline_mode = #tpu.pipeline_mode<synchronous>, transform_indices = @transform_1, window_bounds = array<i64: 9, 4, 128>}, {pipeline_mode = #tpu.pipeline_mode<synchronous>, transform_indices = @transform_2, window_bounds = array<i64: 1, 128>}, {pipeline_mode = #tpu.pipeline_mode<synchronous>, transform_indices = @transform_3, window_bounds = array<i64: 1, 128>}, {pipeline_mode = #tpu.pipeline_mode<synchronous>, transform_indices = @transform_4, window_bounds = array<i64: 9, 128, 128>}, {pipeline_mode = #tpu.pipeline_mode<synchronous>, transform_indices = @transform_5, window_bounds = array<i64: 1, 128>}, {pipeline_mode = #tpu.pipeline_mode<synchronous>, transform_indices = @transform_6, window_bounds = array<i64: 1, 128>}, {transform_indices = @transform_7, window_bounds = array<i64: 1, 16, 16, 128>}]} {
    %0 = tpu.iota {dimensions = array<i32: 0>} : vector<16x16x1xi32>
    %1 = vector.shape_cast %0 : vector<16x16x1xi32> to vector<256x1xi32>
    %2 = tpu.iota {dimensions = array<i32: 1>} : vector<16x16x1xi32>
    %3 = vector.shape_cast %2 : vector<16x16x1xi32> to vector<256x1xi32>
    %c1_i32 = arith.constant 1 : i32
    %4 = vector.broadcast %c1_i32 : i32 to vector<256x1xi32>
    %5 = arith.cmpi sge, %1, %4 : vector<256x1xi32>
    %c1_i32_0 = arith.constant 1 : i32
    %6 = vector.broadcast %c1_i32_0 : i32 to vector<256x1xi32>
    %7 = arith.cmpi sge, %3, %6 : vector<256x1xi32>
    %8 = arith.andi %5, %7 : vector<256x1xi1>
    %9 = arith.extui %8 : vector<256x1xi1> to vector<256x1xi32>
    %10 = arith.sitofp %9 : vector<256x1xi32> to vector<256x1xf32>
    %c1_i32_1 = arith.constant 1 : i32
    %11 = vector.broadcast %c1_i32_1 : i32 to vector<256x1xi32>
    %12 = arith.cmpi sge, %1, %11 : vector<256x1xi32>
    %13 = arith.extui %12 : vector<256x1xi1> to vector<256x1xi32>
    %14 = arith.sitofp %13 : vector<256x1xi32> to vector<256x1xf32>
    %c1_i32_2 = arith.constant 1 : i32
    %15 = vector.broadcast %c1_i32_2 : i32 to vector<256x1xi32>
    %16 = arith.cmpi sge, %1, %15 : vector<256x1xi32>
    %c14_i32 = arith.constant 14 : i32
    %17 = vector.broadcast %c14_i32 : i32 to vector<256x1xi32>
    %18 = arith.cmpi sle, %3, %17 : vector<256x1xi32>
    %19 = arith.andi %16, %18 : vector<256x1xi1>
    %20 = arith.extui %19 : vector<256x1xi1> to vector<256x1xi32>
    %21 = arith.sitofp %20 : vector<256x1xi32> to vector<256x1xf32>
    %c1_i32_3 = arith.constant 1 : i32
    %22 = vector.broadcast %c1_i32_3 : i32 to vector<256x1xi32>
    %23 = arith.cmpi sge, %3, %22 : vector<256x1xi32>
    %24 = arith.extui %23 : vector<256x1xi1> to vector<256x1xi32>
    %25 = arith.sitofp %24 : vector<256x1xi32> to vector<256x1xf32>
    %c14_i32_4 = arith.constant 14 : i32
    %26 = vector.broadcast %c14_i32_4 : i32 to vector<256x1xi32>
    %27 = arith.cmpi sle, %3, %26 : vector<256x1xi32>
    %28 = arith.extui %27 : vector<256x1xi1> to vector<256x1xi32>
    %29 = arith.sitofp %28 : vector<256x1xi32> to vector<256x1xf32>
    %c14_i32_5 = arith.constant 14 : i32
    %30 = vector.broadcast %c14_i32_5 : i32 to vector<256x1xi32>
    %31 = arith.cmpi sle, %1, %30 : vector<256x1xi32>
    %c1_i32_6 = arith.constant 1 : i32
    %32 = vector.broadcast %c1_i32_6 : i32 to vector<256x1xi32>
    %33 = arith.cmpi sge, %3, %32 : vector<256x1xi32>
    %34 = arith.andi %31, %33 : vector<256x1xi1>
    %35 = arith.extui %34 : vector<256x1xi1> to vector<256x1xi32>
    %36 = arith.sitofp %35 : vector<256x1xi32> to vector<256x1xf32>
    %c14_i32_7 = arith.constant 14 : i32
    %37 = vector.broadcast %c14_i32_7 : i32 to vector<256x1xi32>
    %38 = arith.cmpi sle, %1, %37 : vector<256x1xi32>
    %39 = arith.extui %38 : vector<256x1xi1> to vector<256x1xi32>
    %40 = arith.sitofp %39 : vector<256x1xi32> to vector<256x1xf32>
    %c14_i32_8 = arith.constant 14 : i32
    %41 = vector.broadcast %c14_i32_8 : i32 to vector<256x1xi32>
    %42 = arith.cmpi sle, %1, %41 : vector<256x1xi32>
    %c14_i32_9 = arith.constant 14 : i32
    %43 = vector.broadcast %c14_i32_9 : i32 to vector<256x1xi32>
    %44 = arith.cmpi sle, %3, %43 : vector<256x1xi32>
    %45 = arith.andi %42, %44 : vector<256x1xi1>
    %46 = arith.extui %45 : vector<256x1xi1> to vector<256x1xi32>
    %47 = arith.sitofp %46 : vector<256x1xi32> to vector<256x1xf32>
    %c0 = arith.constant 0 : index
    %c0_10 = arith.constant 0 : index
    %c0_11 = arith.constant 0 : index
    %c0_12 = arith.constant 0 : index
    %48 = vector.load %arg1[%c0, %c0_10, %c0_11, %c0_12] : memref<1x16x16x4xf32, #tpu.memory_space<vmem>>, vector<1x16x16x4xf32>
    %49 = vector.shape_cast %48 : vector<1x16x16x4xf32> to vector<16x16x4xf32>
    %50 = vector.shape_cast %49 : vector<16x16x4xf32> to vector<256x4xf32>
    %cst = arith.constant 0.000000e+00 : f32
    %51 = vector.broadcast %cst : f32 to vector<256x128xf32>
    %c17_i32 = arith.constant 17 : i32
    %52 = tpu.dynamic_rotate %50 by %c17_i32 dim 0 : vector<256x4xf32>, i32 -> vector<256x4xf32>
    %53 = vector.broadcast %10 : vector<256x1xf32> to vector<256x4xf32>
    %54 = arith.mulf %52, %53 : vector<256x4xf32>
    %55 = arith.truncf %54 : vector<256x4xf32> to vector<256x4xbf16>
    %c0_13 = arith.constant 0 : index
    %c0_14 = arith.constant 0 : index
    %c0_15 = arith.constant 0 : index
    %56 = vector.load %arg2[%c0_13, %c0_14, %c0_15] : memref<9x4x128xbf16, #tpu.memory_space<vmem>>, vector<1x4x128xbf16>
    %57 = vector.shape_cast %56 : vector<1x4x128xbf16> to vector<4x128xbf16>
    %cst_16 = arith.constant dense<0.000000e+00> : vector<256x128xf32>
    %58 = tpu.matmul %55, %57, %cst_16 {dimension_numbers = #tpu.dot_dimension_numbers<[1], [0], [0], [1], [0, 0, 1, 1], [], []>} : vector<256x4xbf16>, vector<4x128xbf16>, vector<256x128xf32> -> vector<256x128xf32>
    %59 = arith.addf %51, %58 : vector<256x128xf32>
    %c16_i32 = arith.constant 16 : i32
    %60 = tpu.dynamic_rotate %50 by %c16_i32 dim 0 : vector<256x4xf32>, i32 -> vector<256x4xf32>
    %61 = vector.broadcast %14 : vector<256x1xf32> to vector<256x4xf32>
    %62 = arith.mulf %60, %61 : vector<256x4xf32>
    %63 = arith.truncf %62 : vector<256x4xf32> to vector<256x4xbf16>
    %c1 = arith.constant 1 : index
    %c0_17 = arith.constant 0 : index
    %c0_18 = arith.constant 0 : index
    %64 = vector.load %arg2[%c1, %c0_17, %c0_18] : memref<9x4x128xbf16, #tpu.memory_space<vmem>>, vector<1x4x128xbf16>
    %65 = vector.shape_cast %64 : vector<1x4x128xbf16> to vector<4x128xbf16>
    %cst_19 = arith.constant dense<0.000000e+00> : vector<256x128xf32>
    %66 = tpu.matmul %63, %65, %cst_19 {dimension_numbers = #tpu.dot_dimension_numbers<[1], [0], [0], [1], [0, 0, 1, 1], [], []>} : vector<256x4xbf16>, vector<4x128xbf16>, vector<256x128xf32> -> vector<256x128xf32>
    %67 = arith.addf %59, %66 : vector<256x128xf32>
    %c15_i32 = arith.constant 15 : i32
    %68 = tpu.dynamic_rotate %50 by %c15_i32 dim 0 : vector<256x4xf32>, i32 -> vector<256x4xf32>
    %69 = vector.broadcast %21 : vector<256x1xf32> to vector<256x4xf32>
    %70 = arith.mulf %68, %69 : vector<256x4xf32>
    %71 = arith.truncf %70 : vector<256x4xf32> to vector<256x4xbf16>
    %c2 = arith.constant 2 : index
    %c0_20 = arith.constant 0 : index
    %c0_21 = arith.constant 0 : index
    %72 = vector.load %arg2[%c2, %c0_20, %c0_21] : memref<9x4x128xbf16, #tpu.memory_space<vmem>>, vector<1x4x128xbf16>
    %73 = vector.shape_cast %72 : vector<1x4x128xbf16> to vector<4x128xbf16>
    %cst_22 = arith.constant dense<0.000000e+00> : vector<256x128xf32>
    %74 = tpu.matmul %71, %73, %cst_22 {dimension_numbers = #tpu.dot_dimension_numbers<[1], [0], [0], [1], [0, 0, 1, 1], [], []>} : vector<256x4xbf16>, vector<4x128xbf16>, vector<256x128xf32> -> vector<256x128xf32>
    %75 = arith.addf %67, %74 : vector<256x128xf32>
    %c1_i32_23 = arith.constant 1 : i32
    %76 = tpu.dynamic_rotate %50 by %c1_i32_23 dim 0 : vector<256x4xf32>, i32 -> vector<256x4xf32>
    %77 = vector.broadcast %25 : vector<256x1xf32> to vector<256x4xf32>
    %78 = arith.mulf %76, %77 : vector<256x4xf32>
    %79 = arith.truncf %78 : vector<256x4xf32> to vector<256x4xbf16>
    %c3 = arith.constant 3 : index
    %c0_24 = arith.constant 0 : index
    %c0_25 = arith.constant 0 : index
    %80 = vector.load %arg2[%c3, %c0_24, %c0_25] : memref<9x4x128xbf16, #tpu.memory_space<vmem>>, vector<1x4x128xbf16>
    %81 = vector.shape_cast %80 : vector<1x4x128xbf16> to vector<4x128xbf16>
    %cst_26 = arith.constant dense<0.000000e+00> : vector<256x128xf32>
    %82 = tpu.matmul %79, %81, %cst_26 {dimension_numbers = #tpu.dot_dimension_numbers<[1], [0], [0], [1], [0, 0, 1, 1], [], []>} : vector<256x4xbf16>, vector<4x128xbf16>, vector<256x128xf32> -> vector<256x128xf32>
    %83 = arith.addf %75, %82 : vector<256x128xf32>
    %84 = arith.truncf %50 : vector<256x4xf32> to vector<256x4xbf16>
    %c4 = arith.constant 4 : index
    %c0_27 = arith.constant 0 : index
    %c0_28 = arith.constant 0 : index
    %85 = vector.load %arg2[%c4, %c0_27, %c0_28] : memref<9x4x128xbf16, #tpu.memory_space<vmem>>, vector<1x4x128xbf16>
    %86 = vector.shape_cast %85 : vector<1x4x128xbf16> to vector<4x128xbf16>
    %cst_29 = arith.constant dense<0.000000e+00> : vector<256x128xf32>
    %87 = tpu.matmul %84, %86, %cst_29 {dimension_numbers = #tpu.dot_dimension_numbers<[1], [0], [0], [1], [0, 0, 1, 1], [], []>} : vector<256x4xbf16>, vector<4x128xbf16>, vector<256x128xf32> -> vector<256x128xf32>
    %88 = arith.addf %83, %87 : vector<256x128xf32>
    %c255_i32 = arith.constant 255 : i32
    %89 = tpu.dynamic_rotate %50 by %c255_i32 dim 0 : vector<256x4xf32>, i32 -> vector<256x4xf32>
    %90 = vector.broadcast %29 : vector<256x1xf32> to vector<256x4xf32>
    %91 = arith.mulf %89, %90 : vector<256x4xf32>
    %92 = arith.truncf %91 : vector<256x4xf32> to vector<256x4xbf16>
    %c5 = arith.constant 5 : index
    %c0_30 = arith.constant 0 : index
    %c0_31 = arith.constant 0 : index
    %93 = vector.load %arg2[%c5, %c0_30, %c0_31] : memref<9x4x128xbf16, #tpu.memory_space<vmem>>, vector<1x4x128xbf16>
    %94 = vector.shape_cast %93 : vector<1x4x128xbf16> to vector<4x128xbf16>
    %cst_32 = arith.constant dense<0.000000e+00> : vector<256x128xf32>
    %95 = tpu.matmul %92, %94, %cst_32 {dimension_numbers = #tpu.dot_dimension_numbers<[1], [0], [0], [1], [0, 0, 1, 1], [], []>} : vector<256x4xbf16>, vector<4x128xbf16>, vector<256x128xf32> -> vector<256x128xf32>
    %96 = arith.addf %88, %95 : vector<256x128xf32>
    %c241_i32 = arith.constant 241 : i32
    %97 = tpu.dynamic_rotate %50 by %c241_i32 dim 0 : vector<256x4xf32>, i32 -> vector<256x4xf32>
    %98 = vector.broadcast %36 : vector<256x1xf32> to vector<256x4xf32>
    %99 = arith.mulf %97, %98 : vector<256x4xf32>
    %100 = arith.truncf %99 : vector<256x4xf32> to vector<256x4xbf16>
    %c6 = arith.constant 6 : index
    %c0_33 = arith.constant 0 : index
    %c0_34 = arith.constant 0 : index
    %101 = vector.load %arg2[%c6, %c0_33, %c0_34] : memref<9x4x128xbf16, #tpu.memory_space<vmem>>, vector<1x4x128xbf16>
    %102 = vector.shape_cast %101 : vector<1x4x128xbf16> to vector<4x128xbf16>
    %cst_35 = arith.constant dense<0.000000e+00> : vector<256x128xf32>
    %103 = tpu.matmul %100, %102, %cst_35 {dimension_numbers = #tpu.dot_dimension_numbers<[1], [0], [0], [1], [0, 0, 1, 1], [], []>} : vector<256x4xbf16>, vector<4x128xbf16>, vector<256x128xf32> -> vector<256x128xf32>
    %104 = arith.addf %96, %103 : vector<256x128xf32>
    %c240_i32 = arith.constant 240 : i32
    %105 = tpu.dynamic_rotate %50 by %c240_i32 dim 0 : vector<256x4xf32>, i32 -> vector<256x4xf32>
    %106 = vector.broadcast %40 : vector<256x1xf32> to vector<256x4xf32>
    %107 = arith.mulf %105, %106 : vector<256x4xf32>
    %108 = arith.truncf %107 : vector<256x4xf32> to vector<256x4xbf16>
    %c7 = arith.constant 7 : index
    %c0_36 = arith.constant 0 : index
    %c0_37 = arith.constant 0 : index
    %109 = vector.load %arg2[%c7, %c0_36, %c0_37] : memref<9x4x128xbf16, #tpu.memory_space<vmem>>, vector<1x4x128xbf16>
    %110 = vector.shape_cast %109 : vector<1x4x128xbf16> to vector<4x128xbf16>
    %cst_38 = arith.constant dense<0.000000e+00> : vector<256x128xf32>
    %111 = tpu.matmul %108, %110, %cst_38 {dimension_numbers = #tpu.dot_dimension_numbers<[1], [0], [0], [1], [0, 0, 1, 1], [], []>} : vector<256x4xbf16>, vector<4x128xbf16>, vector<256x128xf32> -> vector<256x128xf32>
    %112 = arith.addf %104, %111 : vector<256x128xf32>
    %c239_i32 = arith.constant 239 : i32
    %113 = tpu.dynamic_rotate %50 by %c239_i32 dim 0 : vector<256x4xf32>, i32 -> vector<256x4xf32>
    %114 = vector.broadcast %47 : vector<256x1xf32> to vector<256x4xf32>
    %115 = arith.mulf %113, %114 : vector<256x4xf32>
    %116 = arith.truncf %115 : vector<256x4xf32> to vector<256x4xbf16>
    %c8 = arith.constant 8 : index
    %c0_39 = arith.constant 0 : index
    %c0_40 = arith.constant 0 : index
    %117 = vector.load %arg2[%c8, %c0_39, %c0_40] : memref<9x4x128xbf16, #tpu.memory_space<vmem>>, vector<1x4x128xbf16>
    %118 = vector.shape_cast %117 : vector<1x4x128xbf16> to vector<4x128xbf16>
    %cst_41 = arith.constant dense<0.000000e+00> : vector<256x128xf32>
    %119 = tpu.matmul %116, %118, %cst_41 {dimension_numbers = #tpu.dot_dimension_numbers<[1], [0], [0], [1], [0, 0, 1, 1], [], []>} : vector<256x4xbf16>, vector<4x128xbf16>, vector<256x128xf32> -> vector<256x128xf32>
    %120 = arith.addf %112, %119 : vector<256x128xf32>
    %c0_42 = arith.constant 0 : index
    %c0_43 = arith.constant 0 : index
    %121 = vector.load %arg3[%c0_42, %c0_43] : memref<1x128xf32, #tpu.memory_space<vmem>>, vector<1x128xf32>
    %122 = vector.broadcast %121 : vector<1x128xf32> to vector<256x128xf32>
    %123 = arith.addf %120, %122 : vector<256x128xf32>
    %cst_44 = arith.constant 0.000000e+00 : f32
    %124 = vector.broadcast %cst_44 : f32 to vector<256x128xf32>
    %125 = arith.cmpf ogt, %123, %124 : vector<256x128xf32>
    %c0_45 = arith.constant 0 : index
    %c0_46 = arith.constant 0 : index
    %126 = vector.load %arg4[%c0_45, %c0_46] : memref<1x128xf32, #tpu.memory_space<vmem>>, vector<1x128xf32>
    %127 = vector.broadcast %126 : vector<1x128xf32> to vector<256x128xf32>
    %128 = arith.mulf %127, %123 : vector<256x128xf32>
    %129 = arith.select %125, %123, %128 : vector<256x128xi1>, vector<256x128xf32>
    %cst_47 = arith.constant 0.000000e+00 : f32
    %130 = vector.broadcast %cst_47 : f32 to vector<256x128xf32>
    %c17_i32_48 = arith.constant 17 : i32
    %131 = tpu.dynamic_rotate %129 by %c17_i32_48 dim 0 : vector<256x128xf32>, i32 -> vector<256x128xf32>
    %132 = vector.broadcast %10 : vector<256x1xf32> to vector<256x128xf32>
    %133 = arith.mulf %131, %132 : vector<256x128xf32>
    %134 = arith.truncf %133 : vector<256x128xf32> to vector<256x128xbf16>
    %c0_49 = arith.constant 0 : index
    %c0_50 = arith.constant 0 : index
    %c0_51 = arith.constant 0 : index
    %135 = vector.load %arg5[%c0_49, %c0_50, %c0_51] : memref<9x128x128xbf16, #tpu.memory_space<vmem>>, vector<1x128x128xbf16>
    %136 = vector.shape_cast %135 : vector<1x128x128xbf16> to vector<128x128xbf16>
    %cst_52 = arith.constant dense<0.000000e+00> : vector<256x128xf32>
    %137 = tpu.matmul %134, %136, %cst_52 {dimension_numbers = #tpu.dot_dimension_numbers<[1], [0], [0], [1], [0, 0, 1, 1], [], []>} : vector<256x128xbf16>, vector<128x128xbf16>, vector<256x128xf32> -> vector<256x128xf32>
    %138 = arith.addf %130, %137 : vector<256x128xf32>
    %c16_i32_53 = arith.constant 16 : i32
    %139 = tpu.dynamic_rotate %129 by %c16_i32_53 dim 0 : vector<256x128xf32>, i32 -> vector<256x128xf32>
    %140 = vector.broadcast %14 : vector<256x1xf32> to vector<256x128xf32>
    %141 = arith.mulf %139, %140 : vector<256x128xf32>
    %142 = arith.truncf %141 : vector<256x128xf32> to vector<256x128xbf16>
    %c1_54 = arith.constant 1 : index
    %c0_55 = arith.constant 0 : index
    %c0_56 = arith.constant 0 : index
    %143 = vector.load %arg5[%c1_54, %c0_55, %c0_56] : memref<9x128x128xbf16, #tpu.memory_space<vmem>>, vector<1x128x128xbf16>
    %144 = vector.shape_cast %143 : vector<1x128x128xbf16> to vector<128x128xbf16>
    %cst_57 = arith.constant dense<0.000000e+00> : vector<256x128xf32>
    %145 = tpu.matmul %142, %144, %cst_57 {dimension_numbers = #tpu.dot_dimension_numbers<[1], [0], [0], [1], [0, 0, 1, 1], [], []>} : vector<256x128xbf16>, vector<128x128xbf16>, vector<256x128xf32> -> vector<256x128xf32>
    %146 = arith.addf %138, %145 : vector<256x128xf32>
    %c15_i32_58 = arith.constant 15 : i32
    %147 = tpu.dynamic_rotate %129 by %c15_i32_58 dim 0 : vector<256x128xf32>, i32 -> vector<256x128xf32>
    %148 = vector.broadcast %21 : vector<256x1xf32> to vector<256x128xf32>
    %149 = arith.mulf %147, %148 : vector<256x128xf32>
    %150 = arith.truncf %149 : vector<256x128xf32> to vector<256x128xbf16>
    %c2_59 = arith.constant 2 : index
    %c0_60 = arith.constant 0 : index
    %c0_61 = arith.constant 0 : index
    %151 = vector.load %arg5[%c2_59, %c0_60, %c0_61] : memref<9x128x128xbf16, #tpu.memory_space<vmem>>, vector<1x128x128xbf16>
    %152 = vector.shape_cast %151 : vector<1x128x128xbf16> to vector<128x128xbf16>
    %cst_62 = arith.constant dense<0.000000e+00> : vector<256x128xf32>
    %153 = tpu.matmul %150, %152, %cst_62 {dimension_numbers = #tpu.dot_dimension_numbers<[1], [0], [0], [1], [0, 0, 1, 1], [], []>} : vector<256x128xbf16>, vector<128x128xbf16>, vector<256x128xf32> -> vector<256x128xf32>
    %154 = arith.addf %146, %153 : vector<256x128xf32>
    %c1_i32_63 = arith.constant 1 : i32
    %155 = tpu.dynamic_rotate %129 by %c1_i32_63 dim 0 : vector<256x128xf32>, i32 -> vector<256x128xf32>
    %156 = vector.broadcast %25 : vector<256x1xf32> to vector<256x128xf32>
    %157 = arith.mulf %155, %156 : vector<256x128xf32>
    %158 = arith.truncf %157 : vector<256x128xf32> to vector<256x128xbf16>
    %c3_64 = arith.constant 3 : index
    %c0_65 = arith.constant 0 : index
    %c0_66 = arith.constant 0 : index
    %159 = vector.load %arg5[%c3_64, %c0_65, %c0_66] : memref<9x128x128xbf16, #tpu.memory_space<vmem>>, vector<1x128x128xbf16>
    %160 = vector.shape_cast %159 : vector<1x128x128xbf16> to vector<128x128xbf16>
    %cst_67 = arith.constant dense<0.000000e+00> : vector<256x128xf32>
    %161 = tpu.matmul %158, %160, %cst_67 {dimension_numbers = #tpu.dot_dimension_numbers<[1], [0], [0], [1], [0, 0, 1, 1], [], []>} : vector<256x128xbf16>, vector<128x128xbf16>, vector<256x128xf32> -> vector<256x128xf32>
    %162 = arith.addf %154, %161 : vector<256x128xf32>
    %163 = arith.truncf %129 : vector<256x128xf32> to vector<256x128xbf16>
    %c4_68 = arith.constant 4 : index
    %c0_69 = arith.constant 0 : index
    %c0_70 = arith.constant 0 : index
    %164 = vector.load %arg5[%c4_68, %c0_69, %c0_70] : memref<9x128x128xbf16, #tpu.memory_space<vmem>>, vector<1x128x128xbf16>
    %165 = vector.shape_cast %164 : vector<1x128x128xbf16> to vector<128x128xbf16>
    %cst_71 = arith.constant dense<0.000000e+00> : vector<256x128xf32>
    %166 = tpu.matmul %163, %165, %cst_71 {dimension_numbers = #tpu.dot_dimension_numbers<[1], [0], [0], [1], [0, 0, 1, 1], [], []>} : vector<256x128xbf16>, vector<128x128xbf16>, vector<256x128xf32> -> vector<256x128xf32>
    %167 = arith.addf %162, %166 : vector<256x128xf32>
    %c255_i32_72 = arith.constant 255 : i32
    %168 = tpu.dynamic_rotate %129 by %c255_i32_72 dim 0 : vector<256x128xf32>, i32 -> vector<256x128xf32>
    %169 = vector.broadcast %29 : vector<256x1xf32> to vector<256x128xf32>
    %170 = arith.mulf %168, %169 : vector<256x128xf32>
    %171 = arith.truncf %170 : vector<256x128xf32> to vector<256x128xbf16>
    %c5_73 = arith.constant 5 : index
    %c0_74 = arith.constant 0 : index
    %c0_75 = arith.constant 0 : index
    %172 = vector.load %arg5[%c5_73, %c0_74, %c0_75] : memref<9x128x128xbf16, #tpu.memory_space<vmem>>, vector<1x128x128xbf16>
    %173 = vector.shape_cast %172 : vector<1x128x128xbf16> to vector<128x128xbf16>
    %cst_76 = arith.constant dense<0.000000e+00> : vector<256x128xf32>
    %174 = tpu.matmul %171, %173, %cst_76 {dimension_numbers = #tpu.dot_dimension_numbers<[1], [0], [0], [1], [0, 0, 1, 1], [], []>} : vector<256x128xbf16>, vector<128x128xbf16>, vector<256x128xf32> -> vector<256x128xf32>
    %175 = arith.addf %167, %174 : vector<256x128xf32>
    %c241_i32_77 = arith.constant 241 : i32
    %176 = tpu.dynamic_rotate %129 by %c241_i32_77 dim 0 : vector<256x128xf32>, i32 -> vector<256x128xf32>
    %177 = vector.broadcast %36 : vector<256x1xf32> to vector<256x128xf32>
    %178 = arith.mulf %176, %177 : vector<256x128xf32>
    %179 = arith.truncf %178 : vector<256x128xf32> to vector<256x128xbf16>
    %c6_78 = arith.constant 6 : index
    %c0_79 = arith.constant 0 : index
    %c0_80 = arith.constant 0 : index
    %180 = vector.load %arg5[%c6_78, %c0_79, %c0_80] : memref<9x128x128xbf16, #tpu.memory_space<vmem>>, vector<1x128x128xbf16>
    %181 = vector.shape_cast %180 : vector<1x128x128xbf16> to vector<128x128xbf16>
    %cst_81 = arith.constant dense<0.000000e+00> : vector<256x128xf32>
    %182 = tpu.matmul %179, %181, %cst_81 {dimension_numbers = #tpu.dot_dimension_numbers<[1], [0], [0], [1], [0, 0, 1, 1], [], []>} : vector<256x128xbf16>, vector<128x128xbf16>, vector<256x128xf32> -> vector<256x128xf32>
    %183 = arith.addf %175, %182 : vector<256x128xf32>
    %c240_i32_82 = arith.constant 240 : i32
    %184 = tpu.dynamic_rotate %129 by %c240_i32_82 dim 0 : vector<256x128xf32>, i32 -> vector<256x128xf32>
    %185 = vector.broadcast %40 : vector<256x1xf32> to vector<256x128xf32>
    %186 = arith.mulf %184, %185 : vector<256x128xf32>
    %187 = arith.truncf %186 : vector<256x128xf32> to vector<256x128xbf16>
    %c7_83 = arith.constant 7 : index
    %c0_84 = arith.constant 0 : index
    %c0_85 = arith.constant 0 : index
    %188 = vector.load %arg5[%c7_83, %c0_84, %c0_85] : memref<9x128x128xbf16, #tpu.memory_space<vmem>>, vector<1x128x128xbf16>
    %189 = vector.shape_cast %188 : vector<1x128x128xbf16> to vector<128x128xbf16>
    %cst_86 = arith.constant dense<0.000000e+00> : vector<256x128xf32>
    %190 = tpu.matmul %187, %189, %cst_86 {dimension_numbers = #tpu.dot_dimension_numbers<[1], [0], [0], [1], [0, 0, 1, 1], [], []>} : vector<256x128xbf16>, vector<128x128xbf16>, vector<256x128xf32> -> vector<256x128xf32>
    %191 = arith.addf %183, %190 : vector<256x128xf32>
    %c239_i32_87 = arith.constant 239 : i32
    %192 = tpu.dynamic_rotate %129 by %c239_i32_87 dim 0 : vector<256x128xf32>, i32 -> vector<256x128xf32>
    %193 = vector.broadcast %47 : vector<256x1xf32> to vector<256x128xf32>
    %194 = arith.mulf %192, %193 : vector<256x128xf32>
    %195 = arith.truncf %194 : vector<256x128xf32> to vector<256x128xbf16>
    %c8_88 = arith.constant 8 : index
    %c0_89 = arith.constant 0 : index
    %c0_90 = arith.constant 0 : index
    %196 = vector.load %arg5[%c8_88, %c0_89, %c0_90] : memref<9x128x128xbf16, #tpu.memory_space<vmem>>, vector<1x128x128xbf16>
    %197 = vector.shape_cast %196 : vector<1x128x128xbf16> to vector<128x128xbf16>
    %cst_91 = arith.constant dense<0.000000e+00> : vector<256x128xf32>
    %198 = tpu.matmul %195, %197, %cst_91 {dimension_numbers = #tpu.dot_dimension_numbers<[1], [0], [0], [1], [0, 0, 1, 1], [], []>} : vector<256x128xbf16>, vector<128x128xbf16>, vector<256x128xf32> -> vector<256x128xf32>
    %199 = arith.addf %191, %198 : vector<256x128xf32>
    %c0_92 = arith.constant 0 : index
    %c0_93 = arith.constant 0 : index
    %200 = vector.load %arg6[%c0_92, %c0_93] : memref<1x128xf32, #tpu.memory_space<vmem>>, vector<1x128xf32>
    %201 = vector.broadcast %200 : vector<1x128xf32> to vector<256x128xf32>
    %202 = arith.addf %199, %201 : vector<256x128xf32>
    %cst_94 = arith.constant 0.000000e+00 : f32
    %203 = vector.broadcast %cst_94 : f32 to vector<256x128xf32>
    %204 = arith.cmpf ogt, %202, %203 : vector<256x128xf32>
    %c0_95 = arith.constant 0 : index
    %c0_96 = arith.constant 0 : index
    %205 = vector.load %arg7[%c0_95, %c0_96] : memref<1x128xf32, #tpu.memory_space<vmem>>, vector<1x128xf32>
    %206 = vector.broadcast %205 : vector<1x128xf32> to vector<256x128xf32>
    %207 = arith.mulf %206, %202 : vector<256x128xf32>
    %208 = arith.select %204, %202, %207 : vector<256x128xi1>, vector<256x128xf32>
    %209 = vector.shape_cast %208 : vector<256x128xf32> to vector<16x16x128xf32>
    %c0_97 = arith.constant 0 : index
    %c0_98 = arith.constant 0 : index
    %c0_99 = arith.constant 0 : index
    %c0_100 = arith.constant 0 : index
    %210 = vector.load %arg8[%c0_97, %c0_98, %c0_99, %c0_100] : memref<1x16x16x128xf32, #tpu.memory_space<vmem>>, vector<1x16x16x128xf32>
    %211 = vector.shape_cast %210 : vector<1x16x16x128xf32> to vector<16x16x128xf32>
    %212 = vector.shape_cast %209 : vector<16x16x128xf32> to vector<1x16x16x128xf32>
    tpu.vector_store %arg8[%c0_97, %c0_98, %c0_99, %c0_100], %212 {strides = array<i32>} : memref<1x16x16x128xf32, #tpu.memory_space<vmem>>, vector<1x16x16x128xf32>,
    return
  }
  func.func @transform_0(%arg0: i32) -> (i32, i32, i32, i32) {
    %c0_i32 = arith.constant 0 : i32
    %c0_i32_0 = arith.constant 0 : i32
    %c0_i32_1 = arith.constant 0 : i32
    %c0_i32_2 = arith.constant 0 : i32
    return %arg0, %c0_i32, %c0_i32_0, %c0_i32_1 : i32, i32, i32, i32
  }
  func.func @transform_1(%arg0: i32) -> (i32, i32, i32) {
    %c0_i32 = arith.constant 0 : i32
    %c0_i32_0 = arith.constant 0 : i32
    %c0_i32_1 = arith.constant 0 : i32
    %c0_i32_2 = arith.constant 0 : i32
    return %c0_i32, %c0_i32_0, %c0_i32_1 : i32, i32, i32
  }
  func.func @transform_2(%arg0: i32) -> (i32, i32) {
    %c0_i32 = arith.constant 0 : i32
    %c0_i32_0 = arith.constant 0 : i32
    %c0_i32_1 = arith.constant 0 : i32
    return %c0_i32, %c0_i32_0 : i32, i32
  }
  func.func @transform_3(%arg0: i32) -> (i32, i32) {
    %c0_i32 = arith.constant 0 : i32
    %c0_i32_0 = arith.constant 0 : i32
    %c0_i32_1 = arith.constant 0 : i32
    return %c0_i32, %c0_i32_0 : i32, i32
  }
  func.func @transform_4(%arg0: i32) -> (i32, i32, i32) {
    %c0_i32 = arith.constant 0 : i32
    %c0_i32_0 = arith.constant 0 : i32
    %c0_i32_1 = arith.constant 0 : i32
    %c0_i32_2 = arith.constant 0 : i32
    return %c0_i32, %c0_i32_0, %c0_i32_1 : i32, i32, i32
  }
  func.func @transform_5(%arg0: i32) -> (i32, i32) {
    %c0_i32 = arith.constant 0 : i32
    %c0_i32_0 = arith.constant 0 : i32
    %c0_i32_1 = arith.constant 0 : i32
    return %c0_i32, %c0_i32_0 : i32, i32
  }
  func.func @transform_6(%arg0: i32) -> (i32, i32) {
    %c0_i32 = arith.constant 0 : i32
    %c0_i32_0 = arith.constant 0 : i32
    %c0_i32_1 = arith.constant 0 : i32
    return %c0_i32, %c0_i32_0 : i32, i32
  }
  func.func @transform_7(%arg0: i32) -> (i32, i32, i32, i32) {
    %c0_i32 = arith.constant 0 : i32
    %c0_i32_0 = arith.constant 0 : i32
    %c0_i32_1 = arith.constant 0 : i32
    %c0_i32_2 = arith.constant 0 : i32
    return %arg0, %c0_i32, %c0_i32_0, %c0_i32_1 : i32, i32, i32, i32
  }
}

</mosaic_0001>

<llo_original>
// kernel: conv_block_pallas.1
$region0: #{conv_block_pallas.1}
  #allocation0 [shape = 'u32[]', space=smem, size = 0x4, offset = 0x4, fixed_abs, tag = 'smem constant byte address 0x4 - core index']
  #allocation1 [shape = 'u32[72,128]{1,0:T(1,128)}', space=vmem, size = 0x9000, scoped, tag = 'internal scratch']
  %s0 = inlined_call_operand.vmem [shape: f32[2,16,16,4], index: 0, kind: input, shape index: {}]
  %s1 = inlined_call_operand.vmem [shape: bf16[9,4,128], index: 1, kind: input, shape index: {}]
  %s2 = inlined_call_operand.vmem [shape: f32[1,128], index: 2, kind: input, shape index: {}]
  %s3 = inlined_call_operand.vmem [shape: f32[1,128], index: 3, kind: input, shape index: {}]
  %s4 = inlined_call_operand.vmem [shape: bf16[9,128,128], index: 4, kind: input, shape index: {}]
  %s5 = inlined_call_operand.vmem [shape: f32[1,128], index: 5, kind: input, shape index: {}]
  %s6 = inlined_call_operand.vmem [shape: f32[1,128], index: 6, kind: input, shape index: {}]
  %s7 = inlined_call_operand.vmem [shape: f32[2,16,16,128], index: 7, kind: output, shape index: {}]
  %s8 = sld [smem:[#allocation0]]
  $region61: #{conv_block_pallas.1} parent=0
    _
  %s10 = ssub.s32 1, %s8
  %s11 = scalar_select 0, %s10, %s8
  loop: start=0, step=1, limit=4
  $region2: #{conv_block_pallas.1} parent=0 // loop_pre_header
    _
  $region3: #{conv_block_pallas.1} parent=0 // loop_header
    %s13 = sphi 0, %s17
    %p14 = scmp.ge.s32.totalorder %s13, 4
    %s23 = sphi 0, %s25
    %s26 = sphi 0, %s23
    %s27 = sphi 0, %s26
    %s43 = sphi 0, %s27
    %s47 = sphi 0, %s47
    %s49 = sphi 0, %s47
    %s50 = sphi 0, %s49
    %s64 = sphi 0, %s50
    %s68 = sphi 0, %s68
    %s70 = sphi 0, %s68
    %s71 = sphi 0, %s70
    %s85 = sphi 0, %s71
    %s89 = sphi 0, %s89
    %s91 = sphi 0, %s89
    %s92 = sphi 0, %s91
    %s106 = sphi 0, %s92
    %s110 = sphi 0, %s110
    %s112 = sphi 0, %s110
    %s113 = sphi 0, %s112
    %s127 = sphi 0, %s113
    %s131 = sphi 0, %s131
    %s133 = sphi 0, %s131
    %s134 = sphi 0, %s133
    %s148 = sphi 0, %s134
    %s152 = sphi 0, %s152
    %s154 = sphi 0, %s152
    %s155 = sphi 0, %s154
    %s169 = sphi 0, %s155
    %s175 = sphi 0, %s177
    %s178 = sphi 0, %s175
    %s179 = sphi 0, %s178
    %s195 = sphi 0, %s179
  $region4: #{conv_block_pallas.1} parent=0 // loop_header_branch
    %16 = sbr.rel (%p14) target = $region8
  $region5: #{conv_block_pallas.1} parent=0 // loop_body
    %s18 = ssub.s32 %s13, 1
    %s19 = ssub.s32 %s13, 2
    %s20 = sadd.s32 %s13, 1
    %s21 = ssub.s32 %s13, %s20
    %p22 = scmp.eq.s32.totalorder %s21, 0
    %s24 = sadd.s32 %s23, 1
    %s25 = scalar_select %p22, %s23, %s24
    %p28 = pneg %p22
    %p29 = scmp.eq.s32.totalorder %s13, 1
    %p30 = por %p28, %p29
    %p31 = scmp.ne.s32.totalorder %s23, %s26
    %p32 = scmp.eq.s32.totalorder %s13, 0
    %p33 = por %p31, %p32
    %p34 = scmp.ne.s32.totalorder %s23, %s26
    %p35 = scmp.eq.s32.totalorder %s18, 1
    %p36 = por %p34, %p35
    %p37 = scmp.ne.s32.totalorder %s26, %s27
    %p38 = scmp.eq.s32.totalorder %s18, 0
    %p39 = por %p37, %p38
    %p40 = scmp.ne.s32.totalorder %s26, %s27
    %p41 = scmp.eq.s32.totalorder %s19, 1
    %p42 = por %p40, %p41
    %p44 = scmp.ne.s32.totalorder %s27, %s43
    %p45 = scmp.eq.s32.totalorder %s19, 0
    %p46 = por %p44, %p45
    %s48 = sadd.s32 %s47, 1
    %p51 = scmp.eq.s32.totalorder %s13, 1
    %p52 = scmp.ne.s32.totalorder %s47, %s49
    %p53 = scmp.eq.s32.totalorder %s13, 0
    %p54 = por %p52, %p53
    %p55 = scmp.ne.s32.totalorder %s47, %s49
    %p56 = scmp.eq.s32.totalorder %s18, 1
    %p57 = por %p55, %p56
    %p58 = scmp.ne.s32.totalorder %s49, %s50
    %p59 = scmp.eq.s32.totalorder %s18, 0
    %p60 = por %p58, %p59
    %p61 = scmp.ne.s32.totalorder %s49, %s50
    %p62 = scmp.eq.s32.totalorder %s19, 1
    %p63 = por %p61, %p62
    %p65 = scmp.ne.s32.totalorder %s50, %s64
    %p66 = scmp.eq.s32.totalorder %s19, 0
    %p67 = por %p65, %p66
    %s69 = sadd.s32 %s68, 1
    %p72 = scmp.eq.s32.totalorder %s13, 1
    %p73 = scmp.ne.s32.totalorder %s68, %s70
    %p74 = scmp.eq.s32.totalorder %s13, 0
    %p75 = por %p73, %p74
    %p76 = scmp.ne.s32.totalorder %s68, %s70
    %p77 = scmp.eq.s32.totalorder %s18, 1
    %p78 = por %p76, %p77
    %p79 = scmp.ne.s32.totalorder %s70, %s71
    %p80 = scmp.eq.s32.totalorder %s18, 0
    %p81 = por %p79, %p80
    %p82 = scmp.ne.s32.totalorder %s70, %s71
    %p83 = scmp.eq.s32.totalorder %s19, 1
    %p84 = por %p82, %p83
    %p86 = scmp.ne.s32.totalorder %s71, %s85
    %p87 = scmp.eq.s32.totalorder %s19, 0
    %p88 = por %p86, %p87
    %s90 = sadd.s32 %s89, 1
    %p93 = scmp.eq.s32.totalorder %s13, 1
    %p94 = scmp.ne.s32.totalorder %s89, %s91
    %p95 = scmp.eq.s32.totalorder %s13, 0
    %p96 = por %p94, %p95
    %p97 = scmp.ne.s32.totalorder %s89, %s91
    %p98 = scmp.eq.s32.totalorder %s18, 1
    %p99 = por %p97, %p98
    %p100 = scmp.ne.s32.totalorder %s91, %s92
    %p101 = scmp.eq.s32.totalorder %s18, 0
    %p102 = por %p100, %p101
    %p103 = scmp.ne.s32.totalorder %s91, %s92
    %p104 = scmp.eq.s32.totalorder %s19, 1
    %p105 = por %p103, %p104
    %p107 = scmp.ne.s32.totalorder %s92, %s106
    %p108 = scmp.eq.s32.totalorder %s19, 0
    %p109 = por %p107, %p108
    %s111 = sadd.s32 %s110, 1
    %p114 = scmp.eq.s32.totalorder %s13, 1
    %p115 = scmp.ne.s32.totalorder %s110, %s112
    %p116 = scmp.eq.s32.totalorder %s13, 0
    %p117 = por %p115, %p116
    %p118 = scmp.ne.s32.totalorder %s110, %s112
    %p119 = scmp.eq.s32.totalorder %s18, 1
    %p120 = por %p118, %p119
    %p121 = scmp.ne.s32.totalorder %s112, %s113
    %p122 = scmp.eq.s32.totalorder %s18, 0
    %p123 = por %p121, %p122
    %p124 = scmp.ne.s32.totalorder %s112, %s113
    %p125 = scmp.eq.s32.totalorder %s19, 1
    %p126 = por %p124, %p125
    %p128 = scmp.ne.s32.totalorder %s113, %s127
    %p129 = scmp.eq.s32.totalorder %s19, 0
    %p130 = por %p128, %p129
    %s132 = sadd.s32 %s131, 1
    %p135 = scmp.eq.s32.totalorder %s13, 1
    %p136 = scmp.ne.s32.totalorder %s131, %s133
    %p137 = scmp.eq.s32.totalorder %s13, 0
    %p138 = por %p136, %p137
    %p139 = scmp.ne.s32.totalorder %s131, %s133
    %p140 = scmp.eq.s32.totalorder %s18, 1
    %p141 = por %p139, %p140
    %p142 = scmp.ne.s32.totalorder %s133, %s134
    %p143 = scmp.eq.s32.totalorder %s18, 0
    %p144 = por %p142, %p143
    %p145 = scmp.ne.s32.totalorder %s133, %s134
    %p146 = scmp.eq.s32.totalorder %s19, 1
    %p147 = por %p145, %p146
    %p149 = scmp.ne.s32.totalorder %s134, %s148
    %p150 = scmp.eq.s32.totalorder %s19, 0
    %p151 = por %p149, %p150
    %s153 = sadd.s32 %s152, 1
    %p156 = scmp.eq.s32.totalorder %s13, 1
    %p157 = scmp.ne.s32.totalorder %s152, %s154
    %p158 = scmp.eq.s32.totalorder %s13, 0
    %p159 = por %p157, %p158
    %p160 = scmp.ne.s32.totalorder %s152, %s154
    %p161 = scmp.eq.s32.totalorder %s18, 1
    %p162 = por %p160, %p161
    %p163 = scmp.ne.s32.totalorder %s154, %s155
    %p164 = scmp.eq.s32.totalorder %s18, 0
    %p165 = por %p163, %p164
    %p166 = scmp.ne.s32.totalorder %s154, %s155
    %p167 = scmp.eq.s32.totalorder %s19, 1
    %p168 = por %p166, %p167
    %p170 = scmp.ne.s32.totalorder %s155, %s169
    %p171 = scmp.eq.s32.totalorder %s19, 0
    %p172 = por %p170, %p171
    %s173 = ssub.s32 %s13, %s20
    %p174 = scmp.eq.s32.totalorder %s173, 0
    %s176 = sadd.s32 %s175, 1
    %s177 = scalar_select %p174, %s175, %s176
    %p180 = pneg %p174
    %p181 = scmp.eq.s32.totalorder %s13, 1
    %p182 = por %p180, %p181
    %p183 = scmp.ne.s32.totalorder %s175, %s178
    %p184 = scmp.eq.s32.totalorder %s13, 0
    %p185 = por %p183, %p184
    %p186 = scmp.ne.s32.totalorder %s175, %s178
    %p187 = scmp.eq.s32.totalorder %s18, 1
    %p188 = por %p186, %p187
    %p189 = scmp.ne.s32.totalorder %s178, %s179
    %p190 = scmp.eq.s32.totalorder %s18, 0
    %p191 = por %p189, %p190
    %p192 = scmp.ne.s32.totalorder %s178, %s179
    %p193 = scmp.eq.s32.totalorder %s19, 1
    %p194 = por %p192, %p193
    %p196 = scmp.ne.s32.totalorder %s179, %s195
    %p197 = scmp.eq.s32.totalorder %s19, 0
    %p198 = por %p196, %p197
    %p199 = scmp.le.s32.totalorder 1, %s13
    %p200 = scmp.lt.s32.totalorder %s13, 3
    %p201 = pnand %p199, %p200
    %p202 = pneg %p201
    // Predicated region
    $region9: #{conv_block_pallas.1} parent=5 // pred_check
      _
    $region10: #{conv_block_pallas.1} parent=5 // pred_check_branch
      %204 = sbr.rel (%p201) target = $region12
    $region11: #{conv_block_pallas.1} parent=5 // pred_region
      %s205 = ssub.s32 %s13, 1
      // Predicated region
      $region13: #{conv_block_pallas.1} parent=11 // pred_check
        %p206 = pneg %p60
      $region14: #{conv_block_pallas.1} parent=11 // pred_check_branch
        %208 = sbr.rel (%p206) target = $region16
      $region15: #{conv_block_pallas.1} parent=11 // pred_region
        _
      $region16: #{conv_block_pallas.1} parent=11 // pred_fallthru
        _
      // Predicated region
      $region17: #{conv_block_pallas.1} parent=11 // pred_check
        %p209 = pneg %p81
      $region18: #{conv_block_pallas.1} parent=11 // pred_check_branch
        %211 = sbr.rel (%p209) target = $region20
      $region19: #{conv_block_pallas.1} parent=11 // pred_region
        _
      $region20: #{conv_block_pallas.1} parent=11 // pred_fallthru
        _
      // Predicated region
      $region21: #{conv_block_pallas.1} parent=11 // pred_check
        %p212 = pneg %p102
      $region22: #{conv_block_pallas.1} parent=11 // pred_check_branch
        %214 = sbr.rel (%p212) target = $region24
      $region23: #{conv_block_pallas.1} parent=11 // pred_region
        _
      $region24: #{conv_block_pallas.1} parent=11 // pred_fallthru
        _
      // Predicated region
      $region25: #{conv_block_pallas.1} parent=11 // pred_check
        %p215 = pneg %p123
      $region26: #{conv_block_pallas.1} parent=11 // pred_check_branch
        %217 = sbr.rel (%p215) target = $region28
      $region27: #{conv_block_pallas.1} parent=11 // pred_region
        _
      $region28: #{conv_block_pallas.1} parent=11 // pred_fallthru
        _
      // Predicated region
      $region29: #{conv_block_pallas.1} parent=11 // pred_check
        %p218 = pneg %p144
      $region30: #{conv_block_pallas.1} parent=11 // pred_check_branch
        %220 = sbr.rel (%p218) target = $region32
      $region31: #{conv_block_pallas.1} parent=11 // pred_region
        _
      $region32: #{conv_block_pallas.1} parent=11 // pred_fallthru
        _
      // Predicated region
      $region33: #{conv_block_pallas.1} parent=11 // pred_check
        %p221 = pneg %p165
      $region34: #{conv_block_pallas.1} parent=11 // pred_check_branch
        %223 = sbr.rel (%p221) target = $region36
      $region35: #{conv_block_pallas.1} parent=11 // pred_region
        _
      $region36: #{conv_block_pallas.1} parent=11 // pred_fallthru
        _
    $region12: #{conv_block_pallas.1} parent=5 // pred_fallthru
      _
    %p224 = scmp.lt.s32.totalorder %s13, 2
    // Predicated region
    $region37: #{conv_block_pallas.1} parent=5 // pred_check
      %p225 = pneg %p224
    $region38: #{conv_block_pallas.1} parent=5 // pred_check_branch
      %227 = sbr.rel (%p225) target = $region40
    $region39: #{conv_block_pallas.1} parent=5 // pred_region
      // Predicated region
      $region41: #{conv_block_pallas.1} parent=39 // pred_check
        %p228 = pneg %p33
      $region42: #{conv_block_pallas.1} parent=39 // pred_check_branch
        %230 = sbr.rel (%p228) target = $region44
      $region43: #{conv_block_pallas.1} parent=39 // pred_region
        %p231 = scmp.lt.s32.totalorder %s13, 1
        %s232 = scalar_select %p231, %s13, 1
        %s233 = smul.addr %s232, 32
        %s234 = smul.addr %s233, 8
        %s235 = scalar_lea.vmem %s0, %s234
      $region44: #{conv_block_pallas.1} parent=39 // pred_fallthru
        _
    $region40: #{conv_block_pallas.1} parent=5 // pred_fallthru
      _
    %p236 = scmp.le.s32.totalorder 1, %s13
    %p237 = scmp.lt.s32.totalorder %s13, 3
    %p238 = pnand %p236, %p237
    %p239 = pneg %p238
    // Predicated region
    $region45: #{conv_block_pallas.1} parent=5 // pred_check
      _
    $region46: #{conv_block_pallas.1} parent=5 // pred_check_branch
      %241 = sbr.rel (%p238) target = $region48
    $region47: #{conv_block_pallas.1} parent=5 // pred_region
      %s242 = ssub.s32 %s13, 1
      %p243 = scmp.lt.s32.totalorder %s18, 1
      %s244 = scalar_select %p243, %s18, 1
      %s245 = smul.addr %s244, 32
      %s246 = smul.addr %s245, 8
      %s247 = scalar_lea.vmem %s0, %s246
      %p248 = pneg %p39
      %p249 = pneg %p36
      %p250 = pneg %p60
      %p251 = pneg %p57
      %p252 = pneg %p81
      %p253 = pneg %p78
      %p254 = pneg %p102
      %p255 = pneg %p99
      %p256 = pneg %p123
      %p257 = pneg %p120
      %p258 = pneg %p144
      %p259 = pneg %p141
      %p260 = pneg %p165
      %p261 = pneg %p162
      %p262 = pneg %p191
      %p263 = pneg %p188
      %p264 = scmp.lt.s32.totalorder %s18, 1
      %s265 = scalar_select %p264, %s18, 1
      %s266 = smul.addr %s265, 32
      %s267 = smul.addr %s266, 8
      %s268 = scalar_lea.vmem %s7, %s267
      %p269 = scmp.lt.s32.totalorder %s18, 1
      %s270 = scalar_select %p269, %s18, 1
      %s271 = smul.addr %s270, 32
      %s272 = smul.addr %s271, 8
      %s273 = scalar_lea.vmem %s0, %s272
      %p274 = scmp.lt.s32.totalorder %s18, 1
      %s275 = scalar_select %p274, %s18, 1
      %s276 = smul.addr %s275, 32
      %s277 = smul.addr %s276, 8
      %s278 = scalar_lea.vmem %s7, %s277
      %v280 = vlaneseq
      %v281 = vshrl.u32 %v280, 7
      %v282 = vadd.s32 %v281, 8
      %vm283 = vcmp.ge.s32.totalorder %v281, 1
      %vm284 = vcmp.ge.s32.totalorder %v282, 1
      %v285 = vsel %vm283, 1, 0
      %v286 = vsel %vm284, 1, 0
      %v287 = vcvt.s32.f32 0
      %v288 = vcvt.s32.f32 %v285
      %v289 = vcvt.s32.f32 %v286
      %v290 = vcvt.s32.f32 1
      %vm291 = vcmp.le.s32.totalorder %v281, 14
      %vm292 = vcmp.le.s32.totalorder %v282, 14
      %v293 = vsel %vm291, 1, 0
      %v294 = vsel %vm292, 1, 0
      %v295 = vcvt.s32.f32 %v293
      %v296 = vcvt.s32.f32 %v294
      %v297 = vld [vmem:[%s273] sm:$0xff]
      %v298 = vld [vmem:[%s273 + $0x8] sm:$0xff]
      %v299 = vld [vmem:[%s273 + $0x10] sm:$0xff]
      %v300 = vld [vmem:[%s273 + $0x18] sm:$0xff]
      %v301 = vld [vmem:[%s273 + $0x20] sm:$0xff]
      %v302 = vld [vmem:[%s273 + $0x28] sm:$0xff]
      %v303 = vld [vmem:[%s273 + $0x30] sm:$0xff]
      %v304 = vld [vmem:[%s273 + $0x38] sm:$0xff]
      %v305 = vld [vmem:[%s273 + $0x40] sm:$0xff]
      %v306 = vld [vmem:[%s273 + $0x48] sm:$0xff]
      %v307 = vld [vmem:[%s273 + $0x50] sm:$0xff]
      %v308 = vld [vmem:[%s273 + $0x58] sm:$0xff]
      %v309 = vld [vmem:[%s273 + $0x60] sm:$0xff]
      %v310 = vld [vmem:[%s273 + $0x68] sm:$0xff]
      %v311 = vld [vmem:[%s273 + $0x70] sm:$0xff]
      %v312 = vld [vmem:[%s273 + $0x78] sm:$0xff]
      %v313 = vld [vmem:[%s273 + $0x80] sm:$0xff]
      %v314 = vld [vmem:[%s273 + $0x88] sm:$0xff]
      %v315 = vld [vmem:[%s273 + $0x90] sm:$0xff]
      %v316 = vld [vmem:[%s273 + $0x98] sm:$0xff]
      %v317 = vld [vmem:[%s273 + $0xa0] sm:$0xff]
      %v318 = vld [vmem:[%s273 + $0xa8] sm:$0xff]
      %v319 = vld [vmem:[%s273 + $0xb0] sm:$0xff]
      %v320 = vld [vmem:[%s273 + $0xb8] sm:$0xff]
      %v321 = vld [vmem:[%s273 + $0xc0] sm:$0xff]
      %v322 = vld [vmem:[%s273 + $0xc8] sm:$0xff]
      %v323 = vld [vmem:[%s273 + $0xd0] sm:$0xff]
      %v324 = vld [vmem:[%s273 + $0xd8] sm:$0xff]
      %v325 = vld [vmem:[%s273 + $0xe0] sm:$0xff]
      %v326 = vld [vmem:[%s273 + $0xe8] sm:$0xff]
      %v327 = vld [vmem:[%s273 + $0xf0] sm:$0xff]
      %v328 = vld [vmem:[%s273 + $0xf8] sm:$0xff]
      %v329 = vrot.slane %v297, 7
      %v330 = vrot.slane %v298, 7
      %v331 = vrot.slane %v299, 7
      %v332 = vrot.slane %v300, 7
      %v333 = vrot.slane %v301, 7
      %v334 = vrot.slane %v302, 7
      %v335 = vrot.slane %v303, 7
      %v336 = vrot.slane %v304, 7
      %v337 = vrot.slane %v305, 7
      %v338 = vrot.slane %v306, 7
      %v339 = vrot.slane %v307, 7
      %v340 = vrot.slane %v308, 7
      %v341 = vrot.slane %v309, 7
      %v342 = vrot.slane %v310, 7
      %v343 = vrot.slane %v311, 7
      %v344 = vrot.slane %v312, 7
      %v345 = vrot.slane %v313, 7
      %v346 = vrot.slane %v314, 7
      %v347 = vrot.slane %v315, 7
      %v348 = vrot.slane %v316, 7
      %v349 = vrot.slane %v317, 7
      %v350 = vrot.slane %v318, 7
      %v351 = vrot.slane %v319, 7
      %v352 = vrot.slane %v320, 7
      %v353 = vrot.slane %v321, 7
      %v354 = vrot.slane %v322, 7
      %v355 = vrot.slane %v323, 7
      %v356 = vrot.slane %v324, 7
      %v357 = vrot.slane %v325, 7
      %v358 = vrot.slane %v326, 7
      %v359 = vrot.slane %v327, 7
      %v360 = vrot.slane %v328, 7
      %vm361 = vcmp.lt.s32.totalorder %v281, 1
      %v362 = vsel %vm361, %v359, %v360
      %v363 = vsel %vm361, %v358, %v359
      %v364 = vsel %vm361, %v357, %v358
      %v365 = vsel %vm361, %v356, %v357
      %v366 = vsel %vm361, %v355, %v356
      %v367 = vsel %vm361, %v354, %v355
      %v368 = vsel %vm361, %v353, %v354
      %v369 = vsel %vm361, %v352, %v353
      %v370 = vsel %vm361, %v351, %v352
      %v371 = vsel %vm361, %v350, %v351
      %v372 = vsel %vm361, %v349, %v350
      %v373 = vsel %vm361, %v348, %v349
      %v374 = vsel %vm361, %v347, %v348
      %v375 = vsel %vm361, %v346, %v347
      %v376 = vsel %vm361, %v345, %v346
      %v377 = vsel %vm361, %v344, %v345
      %v378 = vsel %vm361, %v343, %v344
      %v379 = vsel %vm361, %v342, %v343
      %v380 = vsel %vm361, %v341, %v342
      %v381 = vsel %vm361, %v340, %v341
      %v382 = vsel %vm361, %v339, %v340
      %v383 = vsel %vm361, %v338, %v339
      %v384 = vsel %vm361, %v337, %v338
      %v385 = vsel %vm361, %v336, %v337
      %v386 = vsel %vm361, %v335, %v336
      %v387 = vsel %vm361, %v334, %v335
      %v388 = vsel %vm361, %v333, %v334
      %v389 = vsel %vm361, %v332, %v333
      %v390 = vsel %vm361, %v331, %v332
      %v391 = vsel %vm361, %v330, %v331
      %v392 = vsel %vm361, %v329, %v330
      %v393 = vsel %vm361, %v360, %v329
      %v394 = vmul.f32 %v363, %v287
      %v395 = vmul.f32 %v362, %v287
      %v396 = vmul.f32 %v393, %v288
      %v397 = vmul.f32 %v392, %v289
      %v398 = vmul.f32 %v391, %v288
      %v399 = vmul.f32 %v390, %v289
      %v400 = vmul.f32 %v389, %v288
      %v401 = vmul.f32 %v388, %v289
      %v402 = vmul.f32 %v387, %v288
      %v403 = vmul.f32 %v386, %v289
      %v404 = vmul.f32 %v385, %v288
      %v405 = vmul.f32 %v384, %v289
      %v406 = vmul.f32 %v383, %v288
      %v407 = vmul.f32 %v382, %v289
      %v408 = vmul.f32 %v381, %v288
      %v409 = vmul.f32 %v380, %v289
      %v410 = vmul.f32 %v379, %v288
      %v411 = vmul.f32 %v378, %v289
      %v412 = vmul.f32 %v377, %v288
      %v413 = vmul.f32 %v376, %v289
      %v414 = vmul.f32 %v375, %v288
      %v415 = vmul.f32 %v374, %v289
      %v416 = vmul.f32 %v373, %v288
      %v417 = vmul.f32 %v372, %v289
      %v418 = vmul.f32 %v371, %v288
      %v419 = vmul.f32 %v370, %v289
      %v420 = vmul.f32 %v369, %v288
      %v421 = vmul.f32 %v368, %v289
      %v422 = vmul.f32 %v367, %v288
      %v423 = vmul.f32 %v366, %v289
      %v424 = vmul.f32 %v365, %v288
      %v425 = vmul.f32 %v364, %v289
      %v426 = vpack.c.bf16 %v395, %v394
      %v427 = vpack.c.bf16 %v397, %v396
      %v428 = vpack.c.bf16 %v399, %v398
      %v429 = vpack.c.bf16 %v401, %v400
      %v430 = vpack.c.bf16 %v403, %v402
      %v431 = vpack.c.bf16 %v405, %v404
      %v432 = vpack.c.bf16 %v407, %v406
      %v433 = vpack.c.bf16 %v409, %v408
      %v434 = vpack.c.bf16 %v411, %v410
      %v435 = vpack.c.bf16 %v413, %v412
      %v436 = vpack.c.bf16 %v415, %v414
      %v437 = vpack.c.bf16 %v417, %v416
      %v438 = vpack.c.bf16 %v419, %v418
      %v439 = vpack.c.bf16 %v421, %v420
      %v440 = vpack.c.bf16 %v423, %v422
      %v441 = vpack.c.bf16 %v425, %v424
      %v442 = vld [vmem:[%s1] sm:$0x3]
      %v443 = vmul.f32 %v327, %v287
      %v444 = vmul.f32 %v328, %v287
      %v445 = vmul.f32 %v297, %v290
      %v446 = vmul.f32 %v298, %v290
      %v447 = vmul.f32 %v299, %v290
      %v448 = vmul.f32 %v300, %v290
      %v449 = vmul.f32 %v301, %v290
      %v450 = vmul.f32 %v302, %v290
      %v451 = vmul.f32 %v303, %v290
      %v452 = vmul.f32 %v304, %v290
      %v453 = vmul.f32 %v305, %v290
      %v454 = vmul.f32 %v306, %v290
      %v455 = vmul.f32 %v307, %v290
      %v456 = vmul.f32 %v308, %v290
      %v457 = vmul.f32 %v309, %v290
      %v458 = vmul.f32 %v310, %v290
      %v459 = vmul.f32 %v311, %v290
      %v460 = vmul.f32 %v312, %v290
      %v461 = vmul.f32 %v313, %v290
      %v462 = vmul.f32 %v314, %v290
      %v463 = vmul.f32 %v315, %v290
      %v464 = vmul.f32 %v316, %v290
      %v465 = vmul.f32 %v317, %v290
      %v466 = vmul.f32 %v318, %v290
      %v467 = vmul.f32 %v319, %v290
      %v468 = vmul.f32 %v320, %v290
      %v469 = vmul.f32 %v321, %v290
      %v470 = vmul.f32 %v322, %v290
      %v471 = vmul.f32 %v323, %v290
      %v472 = vmul.f32 %v324, %v290
      %v473 = vmul.f32 %v325, %v290
      %v474 = vmul.f32 %v326, %v290
      %v475 = vpack.c.bf16 %v444, %v443
      %v476 = vpack.c.bf16 %v446, %v445
      %v477 = vpack.c.bf16 %v448, %v447
      %v478 = vpack.c.bf16 %v450, %v449
      %v479 = vpack.c.bf16 %v452, %v451
      %v480 = vpack.c.bf16 %v454, %v453
      %v481 = vpack.c.bf16 %v456, %v455
      %v482 = vpack.c.bf16 %v458, %v457
      %v483 = vpack.c.bf16 %v460, %v459
      %v484 = vpack.c.bf16 %v462, %v461
      %v485 = vpack.c.bf16 %v464, %v463
      %v486 = vpack.c.bf16 %v466, %v465
      %v487 = vpack.c.bf16 %v468, %v467
      %v488 = vpack.c.bf16 %v470, %v469
      %v489 = vpack.c.bf16 %v472, %v471
      %v490 = vpack.c.bf16 %v474, %v473
      %s491 = scalar_lea.vmem %s1, 2
      %v492 = vld [vmem:[%s491] sm:$0x3]
      %vm493 = vcmask 31744
      %v495 = vsel %vm493, %v475, 0
      %v498 = vsel %vm493, %v476, 0
      %v501 = vsel %vm493, %v477, 0
      %v504 = vsel %vm493, %v478, 0
      %v507 = vsel %vm493, %v479, 0
      %v510 = vsel %vm493, %v480, 0
      %v513 = vsel %vm493, %v481, 0
      %v516 = vsel %vm493, %v482, 0
      %v519 = vsel %vm493, %v483, 0
      %v522 = vsel %vm493, %v484, 0
      %v525 = vsel %vm493, %v485, 0
      %v528 = vsel %vm493, %v486, 0
      %v531 = vsel %vm493, %v487, 0
      %v534 = vsel %vm493, %v488, 0
      %v537 = vsel %vm493, %v489, 0
      %v540 = vsel %vm493, %v490, 0
      %vm542 = vcmask 1041408
      %v544 = vsel %vm542, %v492, 0
      %546 = vmatpush.bf16.msra.mxu0 0
      %547 = vmatpush.bf16.msra.mxu0 0
      %548 = vmatpush.bf16.msra.mxu0 0
      %549 = vmatpush.bf16.msra.mxu0 0
      %550 = vmatpush.bf16.msra.mxu0 0
      %551 = vmatpush.bf16.msra.mxu0 0
      %552 = vmatpush.bf16.msra.mxu0 0
      %553 = vmatpush.bf16.msra.mxu0 %v544
      %554 = vmatmul.bf16.gmra.mxu0 %v495
      %v555 = vpop.f32.mrf.mxu0
      %v556 = vadd.f32 0.0, %v555
      %v557 = vpop.f32.mrf.mxu0
      %v558 = vadd.f32 0.0, %v557
      %559 = vmatmul.bf16.gmra.mxu0 %v498
      %v560 = vpop.f32.mrf.mxu0
      %v561 = vadd.f32 0.0, %v560
      %v562 = vpop.f32.mrf.mxu0
      %v563 = vadd.f32 0.0, %v562
      %564 = vmatmul.bf16.gmra.mxu0 %v501
      %v565 = vpop.f32.mrf.mxu0
      %v566 = vadd.f32 0.0, %v565
      %v567 = vpop.f32.mrf.mxu0
      %v568 = vadd.f32 0.0, %v567
      %569 = vmatmul.bf16.gmra.mxu0 %v504
      %v570 = vpop.f32.mrf.mxu0
      %v571 = vadd.f32 0.0, %v570
      %v572 = vpop.f32.mrf.mxu0
      %v573 = vadd.f32 0.0, %v572
      %574 = vmatmul.bf16.gmra.mxu0 %v507
      %v575 = vpop.f32.mrf.mxu0
      %v576 = vadd.f32 0.0, %v575
      %v577 = vpop.f32.mrf.mxu0
      %v578 = vadd.f32 0.0, %v577
      %579 = vmatmul.bf16.gmra.mxu0 %v510
      %v580 = vpop.f32.mrf.mxu0
      %v581 = vadd.f32 0.0, %v580
      %v582 = vpop.f32.mrf.mxu0
      %v583 = vadd.f32 0.0, %v582
      %584 = vmatmul.bf16.gmra.mxu0 %v513
      %v585 = vpop.f32.mrf.mxu0
      %v586 = vadd.f32 0.0, %v585
      %v587 = vpop.f32.mrf.mxu0
      %v588 = vadd.f32 0.0, %v587
      %589 = vmatmul.bf16.gmra.mxu0 %v516
      %v590 = vpop.f32.mrf.mxu0
      %v591 = vadd.f32 0.0, %v590
      %v592 = vpop.f32.mrf.mxu0
      %v593 = vadd.f32 0.0, %v592
      %594 = vmatmul.bf16.gmra.mxu0 %v519
      %v595 = vpop.f32.mrf.mxu0
      %v596 = vadd.f32 0.0, %v595
      %v597 = vpop.f32.mrf.mxu0
      %v598 = vadd.f32 0.0, %v597
      %599 = vmatmul.bf16.gmra.mxu0 %v522
      %v600 = vpop.f32.mrf.mxu0
      %v601 = vadd.f32 0.0, %v600
      %v602 = vpop.f32.mrf.mxu0
      %v603 = vadd.f32 0.0, %v602
      %604 = vmatmul.bf16.gmra.mxu0 %v525
      %v605 = vpop.f32.mrf.mxu0
      %v606 = vadd.f32 0.0, %v605
      %v607 = vpop.f32.mrf.mxu0
      %v608 = vadd.f32 0.0, %v607
      %609 = vmatmul.bf16.gmra.mxu0 %v528
      %v610 = vpop.f32.mrf.mxu0
      %v611 = vadd.f32 0.0, %v610
      %v612 = vpop.f32.mrf.mxu0
      %v613 = vadd.f32 0.0, %v612
      %614 = vmatmul.bf16.gmra.mxu0 %v531
      %v615 = vpop.f32.mrf.mxu0
      %v616 = vadd.f32 0.0, %v615
      %v617 = vpop.f32.mrf.mxu0
      %v618 = vadd.f32 0.0, %v617
      %619 = vmatmul.bf16.gmra.mxu0 %v534
      %v620 = vpop.f32.mrf.mxu0
      %v621 = vadd.f32 0.0, %v620
      %v622 = vpop.f32.mrf.mxu0
      %v623 = vadd.f32 0.0, %v622
      %624 = vmatmul.bf16.gmra.mxu0 %v537
      %v625 = vpop.f32.mrf.mxu0
      %v626 = vadd.f32 0.0, %v625
      %v627 = vpop.f32.mrf.mxu0
      %v628 = vadd.f32 0.0, %v627
      %629 = vmatmul.bf16.gmra.mxu0 %v540
      %v630 = vpop.f32.mrf.mxu0
      %v631 = vadd.f32 0.0, %v630
      %v632 = vpop.f32.mrf.mxu0
      %v633 = vadd.f32 0.0, %v632
      %634 = vdwg.mxu0
      %v636 = vsel %vm493, %v426, 0
      %v639 = vsel %vm493, %v427, 0
      %v642 = vsel %vm493, %v428, 0
      %v645 = vsel %vm493, %v429, 0
      %v648 = vsel %vm493, %v430, 0
      %v651 = vsel %vm493, %v431, 0
      %v654 = vsel %vm493, %v432, 0
      %v657 = vsel %vm493, %v433, 0
      %v660 = vsel %vm493, %v434, 0
      %v663 = vsel %vm493, %v435, 0
      %v666 = vsel %vm493, %v436, 0
      %v669 = vsel %vm493, %v437, 0
      %v672 = vsel %vm493, %v438, 0
      %v675 = vsel %vm493, %v439, 0
      %v678 = vsel %vm493, %v440, 0
      %v681 = vsel %vm493, %v441, 0
      %v684 = vsel %vm542, %v442, 0
      %686 = vmatpush.bf16.msra.mxu0 0
      %687 = vmatpush.bf16.msra.mxu0 0
      %688 = vmatpush.bf16.msra.mxu0 0
      %689 = vmatpush.bf16.msra.mxu0 0
      %690 = vmatpush.bf16.msra.mxu0 0
      %691 = vmatpush.bf16.msra.mxu0 0
      %692 = vmatpush.bf16.msra.mxu0 0
      %693 = vmatpush.bf16.msra.mxu0 %v684
      %694 = vmatmul.bf16.gmra.mxu0 %v636
      %v695 = vpop.f32.mrf.mxu0
      %v696 = vadd.f32 %v556, %v695
      %v697 = vpop.f32.mrf.mxu0
      %v698 = vadd.f32 %v558, %v697
      %699 = vmatmul.bf16.gmra.mxu0 %v639
      %v700 = vpop.f32.mrf.mxu0
      %v701 = vadd.f32 %v561, %v700
      %v702 = vpop.f32.mrf.mxu0
      %v703 = vadd.f32 %v563, %v702
      %704 = vmatmul.bf16.gmra.mxu0 %v642
      %v705 = vpop.f32.mrf.mxu0
      %v706 = vadd.f32 %v566, %v705
      %v707 = vpop.f32.mrf.mxu0
      %v708 = vadd.f32 %v568, %v707
      %709 = vmatmul.bf16.gmra.mxu0 %v645
      %v710 = vpop.f32.mrf.mxu0
      %v711 = vadd.f32 %v571, %v710
      %v712 = vpop.f32.mrf.mxu0
      %v713 = vadd.f32 %v573, %v712
      %714 = vmatmul.bf16.gmra.mxu0 %v648
      %v715 = vpop.f32.mrf.mxu0
      %v716 = vadd.f32 %v576, %v715
      %v717 = vpop.f32.mrf.mxu0
      %v718 = vadd.f32 %v578, %v717
      %719 = vmatmul.bf16.gmra.mxu0 %v651
      %v720 = vpop.f32.mrf.mxu0
      %v721 = vadd.f32 %v581, %v720
      %v722 = vpop.f32.mrf.mxu0
      %v723 = vadd.f32 %v583, %v722
      %724 = vmatmul.bf16.gmra.mxu0 %v654
      %v725 = vpop.f32.mrf.mxu0
      %v726 = vadd.f32 %v586, %v725
      %v727 = vpop.f32.mrf.mxu0
      %v728 = vadd.f32 %v588, %v727
      %729 = vmatmul.bf16.gmra.mxu0 %v657
      %v730 = vpop.f32.mrf.mxu0
      %v731 = vadd.f32 %v591, %v730
      %v732 = vpop.f32.mrf.mxu0
      %v733 = vadd.f32 %v593, %v732
      %734 = vmatmul.bf16.gmra.mxu0 %v660
      %v735 = vpop.f32.mrf.mxu0
      %v736 = vadd.f32 %v596, %v735
      %v737 = vpop.f32.mrf.mxu0
      %v738 = vadd.f32 %v598, %v737
      %739 = vmatmul.bf16.gmra.mxu0 %v663
      %v740 = vpop.f32.mrf.mxu0
      %v741 = vadd.f32 %v601, %v740
      %v742 = vpop.f32.mrf.mxu0
      %v743 = vadd.f32 %v603, %v742
      %744 = vmatmul.bf16.gmra.mxu0 %v666
      %v745 = vpop.f32.mrf.mxu0
      %v746 = vadd.f32 %v606, %v745
      %v747 = vpop.f32.mrf.mxu0
      %v748 = vadd.f32 %v608, %v747
      %749 = vmatmul.bf16.gmra.mxu0 %v669
      %v750 = vpop.f32.mrf.mxu0
      %v751 = vadd.f32 %v611, %v750
      %v752 = vpop.f32.mrf.mxu0
      %v753 = vadd.f32 %v613, %v752
      %754 = vmatmul.bf16.gmra.mxu0 %v672
      %v755 = vpop.f32.mrf.mxu0
      %v756 = vadd.f32 %v616, %v755
      %v757 = vpop.f32.mrf.mxu0
      %v758 = vadd.f32 %v618, %v757
      %759 = vmatmul.bf16.gmra.mxu0 %v675
      %v760 = vpop.f32.mrf.mxu0
      %v761 = vadd.f32 %v621, %v760
      %v762 = vpop.f32.mrf.mxu0
      %v763 = vadd.f32 %v623, %v762
      %764 = vmatmul.bf16.gmra.mxu0 %v678
      %v765 = vpop.f32.mrf.mxu0
      %v766 = vadd.f32 %v626, %v765
      %v767 = vpop.f32.mrf.mxu0
      %v768 = vadd.f32 %v628, %v767
      %769 = vmatmul.bf16.gmra.mxu0 %v681
      %v770 = vpop.f32.mrf.mxu0
      %v771 = vadd.f32 %v631, %v770
      %v772 = vpop.f32.mrf.mxu0
      %v773 = vadd.f32 %v633, %v772
      %774 = vdwg.mxu0
      %v775 = vrot.slane %v297, 1
      %v776 = vrot.slane %v298, 1
      %v777 = vrot.slane %v299, 1
      %v778 = vrot.slane %v300, 1
      %v779 = vrot.slane %v301, 1
      %v780 = vrot.slane %v302, 1
      %v781 = vrot.slane %v303, 1
      %v782 = vrot.slane %v304, 1
      %v783 = vrot.slane %v305, 1
      %v784 = vrot.slane %v306, 1
      %v785 = vrot.slane %v307, 1
      %v786 = vrot.slane %v308, 1
      %v787 = vrot.slane %v309, 1
      %v788 = vrot.slane %v310, 1
      %v789 = vrot.slane %v311, 1
      %v790 = vrot.slane %v312, 1
      %v791 = vrot.slane %v313, 1
      %v792 = vrot.slane %v314, 1
      %v793 = vrot.slane %v315, 1
      %v794 = vrot.slane %v316, 1
      %v795 = vrot.slane %v317, 1
      %v796 = vrot.slane %v318, 1
      %v797 = vrot.slane %v319, 1
      %v798 = vrot.slane %v320, 1
      %v799 = vrot.slane %v321, 1
      %v800 = vrot.slane %v322, 1
      %v801 = vrot.slane %v323, 1
      %v802 = vrot.slane %v324, 1
      %v803 = vrot.slane %v325, 1
      %v804 = vrot.slane %v326, 1
      %v805 = vrot.slane %v327, 1
      %v806 = vrot.slane %v328, 1
      %vm807 = vcmp.lt.s32.totalorder %v281, 7
      %v808 = vsel %vm807, %v805, %v806
      %v809 = vsel %vm807, %v804, %v805
      %v810 = vsel %vm807, %v803, %v804
      %v811 = vsel %vm807, %v802, %v803
      %v812 = vsel %vm807, %v801, %v802
      %v813 = vsel %vm807, %v800, %v801
      %v814 = vsel %vm807, %v799, %v800
      %v815 = vsel %vm807, %v798, %v799
      %v816 = vsel %vm807, %v797, %v798
      %v817 = vsel %vm807, %v796, %v797
      %v818 = vsel %vm807, %v795, %v796
      %v819 = vsel %vm807, %v794, %v795
      %v820 = vsel %vm807, %v793, %v794
      %v821 = vsel %vm807, %v792, %v793
      %v822 = vsel %vm807, %v791, %v792
      %v823 = vsel %vm807, %v790, %v791
      %v824 = vsel %vm807, %v789, %v790
      %v825 = vsel %vm807, %v788, %v789
      %v826 = vsel %vm807, %v787, %v788
      %v827 = vsel %vm807, %v786, %v787
      %v828 = vsel %vm807, %v785, %v786
      %v829 = vsel %vm807, %v784, %v785
      %v830 = vsel %vm807, %v783, %v784
      %v831 = vsel %vm807, %v782, %v783
      %v832 = vsel %vm807, %v781, %v782
      %v833 = vsel %vm807, %v780, %v781
      %v834 = vsel %vm807, %v779, %v780
      %v835 = vsel %vm807, %v778, %v779
      %v836 = vsel %vm807, %v777, %v778
      %v837 = vsel %vm807, %v776, %v777
      %v838 = vsel %vm807, %v775, %v776
      %v839 = vsel %vm807, %v806, %v775
      %v840 = vmul.f32 %v808, %v287
      %v841 = vmul.f32 %v839, %v287
      %v842 = vmul.f32 %v838, %v295
      %v843 = vmul.f32 %v837, %v296
      %v844 = vmul.f32 %v836, %v295
      %v845 = vmul.f32 %v835, %v296
      %v846 = vmul.f32 %v834, %v295
      %v847 = vmul.f32 %v833, %v296
      %v848 = vmul.f32 %v832, %v295
      %v849 = vmul.f32 %v831, %v296
      %v850 = vmul.f32 %v830, %v295
      %v851 = vmul.f32 %v829, %v296
      %v852 = vmul.f32 %v828, %v295
      %v853 = vmul.f32 %v827, %v296
      %v854 = vmul.f32 %v826, %v295
      %v855 = vmul.f32 %v825, %v296
      %v856 = vmul.f32 %v824, %v295
      %v857 = vmul.f32 %v823, %v296
      %v858 = vmul.f32 %v822, %v295
      %v859 = vmul.f32 %v821, %v296
      %v860 = vmul.f32 %v820, %v295
      %v861 = vmul.f32 %v819, %v296
      %v862 = vmul.f32 %v818, %v295
      %v863 = vmul.f32 %v817, %v296
      %v864 = vmul.f32 %v816, %v295
      %v865 = vmul.f32 %v815, %v296
      %v866 = vmul.f32 %v814, %v295
      %v867 = vmul.f32 %v813, %v296
      %v868 = vmul.f32 %v812, %v295
      %v869 = vmul.f32 %v811, %v296
      %v870 = vmul.f32 %v810, %v295
      %v871 = vmul.f32 %v809, %v296
      %v872 = vpack.c.bf16 %v841, %v840
      %v873 = vpack.c.bf16 %v843, %v842
      %v874 = vpack.c.bf16 %v845, %v844
      %v875 = vpack.c.bf16 %v847, %v846
      %v876 = vpack.c.bf16 %v849, %v848
      %v877 = vpack.c.bf16 %v851, %v850
      %v878 = vpack.c.bf16 %v853, %v852
      %v879 = vpack.c.bf16 %v855, %v854
      %v880 = vpack.c.bf16 %v857, %v856
      %v881 = vpack.c.bf16 %v859, %v858
      %v882 = vpack.c.bf16 %v861, %v860
      %v883 = vpack.c.bf16 %v863, %v862
      %v884 = vpack.c.bf16 %v865, %v864
      %v885 = vpack.c.bf16 %v867, %v866
      %v886 = vpack.c.bf16 %v869, %v868
      %v887 = vpack.c.bf16 %v871, %v870
      %s888 = scalar_lea.vmem %s1, 4
      %v889 = vld [vmem:[%s888] sm:$0x3]
      %v891 = vsel %vm493, %v872, 0
      %v894 = vsel %vm493, %v873, 0
      %v897 = vsel %vm493, %v874, 0
      %v900 = vsel %vm493, %v875, 0
      %v903 = vsel %vm493, %v876, 0
      %v906 = vsel %vm493, %v877, 0
      %v909 = vsel %vm493, %v878, 0
      %v912 = vsel %vm493, %v879, 0
      %v915 = vsel %vm493, %v880, 0
      %v918 = vsel %vm493, %v881, 0
      %v921 = vsel %vm493, %v882, 0
      %v924 = vsel %vm493, %v883, 0
      %v927 = vsel %vm493, %v884, 0
      %v930 = vsel %vm493, %v885, 0
      %v933 = vsel %vm493, %v886, 0
      %v936 = vsel %vm493, %v887, 0
      %v939 = vsel %vm542, %v889, 0
      %941 = vmatpush.bf16.msra.mxu0 0
      %942 = vmatpush.bf16.msra.mxu0 0
      %943 = vmatpush.bf16.msra.mxu0 0
      %944 = vmatpush.bf16.msra.mxu0 0
      %945 = vmatpush.bf16.msra.mxu0 0
      %946 = vmatpush.bf16.msra.mxu0 0
      %947 = vmatpush.bf16.msra.mxu0 0
      %948 = vmatpush.bf16.msra.mxu0 %v939
      %949 = vmatmul.bf16.gmra.mxu0 %v891
      %v950 = vpop.f32.mrf.mxu0
      %v951 = vadd.f32 0.0, %v950
      %v952 = vpop.f32.mrf.mxu0
      %v953 = vadd.f32 0.0, %v952
      %954 = vmatmul.bf16.gmra.mxu0 %v894
      %v955 = vpop.f32.mrf.mxu0
      %v956 = vadd.f32 0.0, %v955
      %v957 = vpop.f32.mrf.mxu0
      %v958 = vadd.f32 0.0, %v957
      %959 = vmatmul.bf16.gmra.mxu0 %v897
      %v960 = vpop.f32.mrf.mxu0
      %v961 = vadd.f32 0.0, %v960
      %v962 = vpop.f32.mrf.mxu0
      %v963 = vadd.f32 0.0, %v962
      %964 = vmatmul.bf16.gmra.mxu0 %v900
      %v965 = vpop.f32.mrf.mxu0
      %v966 = vadd.f32 0.0, %v965
      %v967 = vpop.f32.mrf.mxu0
      %v968 = vadd.f32 0.0, %v967
      %969 = vmatmul.bf16.gmra.mxu0 %v903
      %v970 = vpop.f32.mrf.mxu0
      %v971 = vadd.f32 0.0, %v970
      %v972 = vpop.f32.mrf.mxu0
      %v973 = vadd.f32 0.0, %v972
      %974 = vmatmul.bf16.gmra.mxu0 %v906
      %v975 = vpop.f32.mrf.mxu0
      %v976 = vadd.f32 0.0, %v975
      %v977 = vpop.f32.mrf.mxu0
      %v978 = vadd.f32 0.0, %v977
      %979 = vmatmul.bf16.gmra.mxu0 %v909
      %v980 = vpop.f32.mrf.mxu0
      %v981 = vadd.f32 0.0, %v980
      %v982 = vpop.f32.mrf.mxu0
      %v983 = vadd.f32 0.0, %v982
      %984 = vmatmul.bf16.gmra.mxu0 %v912
      %v985 = vpop.f32.mrf.mxu0
      %v986 = vadd.f32 0.0, %v985
      %v987 = vpop.f32.mrf.mxu0
      %v988 = vadd.f32 0.0, %v987
      %989 = vmatmul.bf16.gmra.mxu0 %v915
      %v990 = vpop.f32.mrf.mxu0
      %v991 = vadd.f32 0.0, %v990
      %v992 = vpop.f32.mrf.mxu0
      %v993 = vadd.f32 0.0, %v992
      %994 = vmatmul.bf16.gmra.mxu0 %v918
      %v995 = vpop.f32.mrf.mxu0
      %v996 = vadd.f32 0.0, %v995
      %v997 = vpop.f32.mrf.mxu0
      %v998 = vadd.f32 0.0, %v997
      %999 = vmatmul.bf16.gmra.mxu0 %v921
      %v1000 = vpop.f32.mrf.mxu0
      %v1001 = vadd.f32 0.0, %v1000
      %v1002 = vpop.f32.mrf.mxu0
      %v1003 = vadd.f32 0.0, %v1002
      %1004 = vmatmul.bf16.gmra.mxu0 %v924
      %v1005 = vpop.f32.mrf.mxu0
      %v1006 = vadd.f32 0.0, %v1005
      %v1007 = vpop.f32.mrf.mxu0
      %v1008 = vadd.f32 0.0, %v1007
      %1009 = vmatmul.bf16.gmra.mxu0 %v927
      %v1010 = vpop.f32.mrf.mxu0
      %v1011 = vadd.f32 0.0, %v1010
      %v1012 = vpop.f32.mrf.mxu0
      %v1013 = vadd.f32 0.0, %v1012
      %1014 = vmatmul.bf16.gmra.mxu0 %v930
      %v1015 = vpop.f32.mrf.mxu0
      %v1016 = vadd.f32 0.0, %v1015
      %v1017 = vpop.f32.mrf.mxu0
      %v1018 = vadd.f32 0.0, %v1017
      %1019 = vmatmul.bf16.gmra.mxu0 %v933
      %v1020 = vpop.f32.mrf.mxu0
      %v1021 = vadd.f32 0.0, %v1020
      %v1022 = vpop.f32.mrf.mxu0
      %v1023 = vadd.f32 0.0, %v1022
      %1024 = vmatmul.bf16.gmra.mxu0 %v936
      %v1025 = vpop.f32.mrf.mxu0
      %v1026 = vadd.f32 0.0, %v1025
      %v1027 = vpop.f32.mrf.mxu0
      %v1028 = vadd.f32 0.0, %v1027
      %1029 = vdwg.mxu0
      %v1030 = vadd.f32 %v696, %v951
      %v1031 = vadd.f32 %v698, %v953
      %v1032 = vadd.f32 %v701, %v956
      %v1033 = vadd.f32 %v703, %v958
      %v1034 = vadd.f32 %v706, %v961
      %v1035 = vadd.f32 %v708, %v963
      %v1036 = vadd.f32 %v711, %v966
      %v1037 = vadd.f32 %v713, %v968
      %v1038 = vadd.f32 %v716, %v971
      %v1039 = vadd.f32 %v718, %v973
      %v1040 = vadd.f32 %v721, %v976
      %v1041 = vadd.f32 %v723, %v978
      %v1042 = vadd.f32 %v726, %v981
      %v1043 = vadd.f32 %v728, %v983
      %v1044 = vadd.f32 %v731, %v986
      %v1045 = vadd.f32 %v733, %v988
      %v1046 = vadd.f32 %v736, %v991
      %v1047 = vadd.f32 %v738, %v993
      %v1048 = vadd.f32 %v741, %v996
      %v1049 = vadd.f32 %v743, %v998
      %v1050 = vadd.f32 %v746, %v1001
      %v1051 = vadd.f32 %v748, %v1003
      %v1052 = vadd.f32 %v751, %v1006
      %v1053 = vadd.f32 %v753, %v1008
      %v1054 = vadd.f32 %v756, %v1011
      %v1055 = vadd.f32 %v758, %v1013
      %v1056 = vadd.f32 %v761, %v1016
      %v1057 = vadd.f32 %v763, %v1018
      %v1058 = vadd.f32 %v766, %v1021
      %v1059 = vadd.f32 %v768, %v1023
      %v1060 = vadd.f32 %v771, %v1026
      %v1061 = vadd.f32 %v773, %v1028
      %v1062 = vmul.f32 %v363, %v288
      %v1063 = vmul.f32 %v362, %v289
      %v1064 = vpack.c.bf16 %v1063, %v1062
      %s1065 = scalar_lea.vmem %s1, 6
      %v1066 = vld [vmem:[%s1065] sm:$0x3]
      %v1068 = vsel %vm493, %v1064, 0
      %v1071 = vsel %vm542, %v1066, 0
      %1073 = vmatpush.bf16.msra.mxu0 0
      %1074 = vmatpush.bf16.msra.mxu0 0
      %1075 = vmatpush.bf16.msra.mxu0 0
      %1076 = vmatpush.bf16.msra.mxu0 0
      %1077 = vmatpush.bf16.msra.mxu0 0
      %1078 = vmatpush.bf16.msra.mxu0 0
      %1079 = vmatpush.bf16.msra.mxu0 0
      %1080 = vmatpush.bf16.msra.mxu0 %v1071
      %1081 = vmatmul.bf16.gmra.mxu0 %v639
      %v1082 = vpop.f32.mrf.mxu0
      %v1083 = vadd.f32 0.0, %v1082
      %v1084 = vpop.f32.mrf.mxu0
      %v1085 = vadd.f32 0.0, %v1084
      %1086 = vmatmul.bf16.gmra.mxu0 %v642
      %v1087 = vpop.f32.mrf.mxu0
      %v1088 = vadd.f32 0.0, %v1087
      %v1089 = vpop.f32.mrf.mxu0
      %v1090 = vadd.f32 0.0, %v1089
      %1091 = vmatmul.bf16.gmra.mxu0 %v645
      %v1092 = vpop.f32.mrf.mxu0
      %v1093 = vadd.f32 0.0, %v1092
      %v1094 = vpop.f32.mrf.mxu0
      %v1095 = vadd.f32 0.0, %v1094
      %1096 = vmatmul.bf16.gmra.mxu0 %v648
      %v1097 = vpop.f32.mrf.mxu0
      %v1098 = vadd.f32 0.0, %v1097
      %v1099 = vpop.f32.mrf.mxu0
      %v1100 = vadd.f32 0.0, %v1099
      %1101 = vmatmul.bf16.gmra.mxu0 %v651
      %v1102 = vpop.f32.mrf.mxu0
      %v1103 = vadd.f32 0.0, %v1102
      %v1104 = vpop.f32.mrf.mxu0
      %v1105 = vadd.f32 0.0, %v1104
      %1106 = vmatmul.bf16.gmra.mxu0 %v654
      %v1107 = vpop.f32.mrf.mxu0
      %v1108 = vadd.f32 0.0, %v1107
      %v1109 = vpop.f32.mrf.mxu0
      %v1110 = vadd.f32 0.0, %v1109
      %1111 = vmatmul.bf16.gmra.mxu0 %v657
      %v1112 = vpop.f32.mrf.mxu0
      %v1113 = vadd.f32 0.0, %v1112
      %v1114 = vpop.f32.mrf.mxu0
      %v1115 = vadd.f32 0.0, %v1114
      %1116 = vmatmul.bf16.gmra.mxu0 %v660
      %v1117 = vpop.f32.mrf.mxu0
      %v1118 = vadd.f32 0.0, %v1117
      %v1119 = vpop.f32.mrf.mxu0
      %v1120 = vadd.f32 0.0, %v1119
      %1121 = vmatmul.bf16.gmra.mxu0 %v663
      %v1122 = vpop.f32.mrf.mxu0
      %v1123 = vadd.f32 0.0, %v1122
      %v1124 = vpop.f32.mrf.mxu0
      %v1125 = vadd.f32 0.0, %v1124
      %1126 = vmatmul.bf16.gmra.mxu0 %v666
      %v1127 = vpop.f32.mrf.mxu0
      %v1128 = vadd.f32 0.0, %v1127
      %v1129 = vpop.f32.mrf.mxu0
      %v1130 = vadd.f32 0.0, %v1129
      %1131 = vmatmul.bf16.gmra.mxu0 %v669
      %v1132 = vpop.f32.mrf.mxu0
      %v1133 = vadd.f32 0.0, %v1132
      %v1134 = vpop.f32.mrf.mxu0
      %v1135 = vadd.f32 0.0, %v1134
      %1136 = vmatmul.bf16.gmra.mxu0 %v672
      %v1137 = vpop.f32.mrf.mxu0
      %v1138 = vadd.f32 0.0, %v1137
      %v1139 = vpop.f32.mrf.mxu0
      %v1140 = vadd.f32 0.0, %v1139
      %1141 = vmatmul.bf16.gmra.mxu0 %v675
      %v1142 = vpop.f32.mrf.mxu0
      %v1143 = vadd.f32 0.0, %v1142
      %v1144 = vpop.f32.mrf.mxu0
      %v1145 = vadd.f32 0.0, %v1144
      %1146 = vmatmul.bf16.gmra.mxu0 %v678
      %v1147 = vpop.f32.mrf.mxu0
      %v1148 = vadd.f32 0.0, %v1147
      %v1149 = vpop.f32.mrf.mxu0
      %v1150 = vadd.f32 0.0, %v1149
      %1151 = vmatmul.bf16.gmra.mxu0 %v681
      %v1152 = vpop.f32.mrf.mxu0
      %v1153 = vadd.f32 0.0, %v1152
      %v1154 = vpop.f32.mrf.mxu0
      %v1155 = vadd.f32 0.0, %v1154
      %1156 = vmatmul.bf16.gmra.mxu0 %v1068
      %v1157 = vpop.f32.mrf.mxu0
      %v1158 = vadd.f32 0.0, %v1157
      %v1159 = vpop.f32.mrf.mxu0
      %v1160 = vadd.f32 0.0, %v1159
      %1161 = vdwg.mxu0
      %v1162 = vadd.f32 %v1030, %v1083
      %v1163 = vadd.f32 %v1031, %v1085
      %v1164 = vadd.f32 %v1032, %v1088
      %v1165 = vadd.f32 %v1033, %v1090
      %v1166 = vadd.f32 %v1034, %v1093
      %v1167 = vadd.f32 %v1035, %v1095
      %v1168 = vadd.f32 %v1036, %v1098
      %v1169 = vadd.f32 %v1037, %v1100
      %v1170 = vadd.f32 %v1038, %v1103
      %v1171 = vadd.f32 %v1039, %v1105
      %v1172 = vadd.f32 %v1040, %v1108
      %v1173 = vadd.f32 %v1041, %v1110
      %v1174 = vadd.f32 %v1042, %v1113
      %v1175 = vadd.f32 %v1043, %v1115
      %v1176 = vadd.f32 %v1044, %v1118
      %v1177 = vadd.f32 %v1045, %v1120
      %v1178 = vadd.f32 %v1046, %v1123
      %v1179 = vadd.f32 %v1047, %v1125
      %v1180 = vadd.f32 %v1048, %v1128
      %v1181 = vadd.f32 %v1049, %v1130
      %v1182 = vadd.f32 %v1050, %v1133
      %v1183 = vadd.f32 %v1051, %v1135
      %v1184 = vadd.f32 %v1052, %v1138
      %v1185 = vadd.f32 %v1053, %v1140
      %v1186 = vadd.f32 %v1054, %v1143
      %v1187 = vadd.f32 %v1055, %v1145
      %v1188 = vadd.f32 %v1056, %v1148
      %v1189 = vadd.f32 %v1057, %v1150
      %v1190 = vadd.f32 %v1058, %v1153
      %v1191 = vadd.f32 %v1059, %v1155
      %v1192 = vadd.f32 %v1060, %v1158
      %v1193 = vadd.f32 %v1061, %v1160
      %v1194 = vpack.c.bf16 %v298, %v297
      %v1195 = vpack.c.bf16 %v300, %v299
      %v1196 = vpack.c.bf16 %v302, %v301
      %v1197 = vpack.c.bf16 %v304, %v303
      %v1198 = vpack.c.bf16 %v306, %v305
      %v1199 = vpack.c.bf16 %v308, %v307
      %v1200 = vpack.c.bf16 %v310, %v309
      %v1201 = vpack.c.bf16 %v312, %v311
      %v1202 = vpack.c.bf16 %v314, %v313
      %v1203 = vpack.c.bf16 %v316, %v315
      %v1204 = vpack.c.bf16 %v318, %v317
      %v1205 = vpack.c.bf16 %v320, %v319
      %v1206 = vpack.c.bf16 %v322, %v321
      %v1207 = vpack.c.bf16 %v324, %v323
      %v1208 = vpack.c.bf16 %v326, %v325
      %v1209 = vpack.c.bf16 %v328, %v327
      %s1210 = scalar_lea.vmem %s1, 8
      %v1211 = vld [vmem:[%s1210] sm:$0x3]
      %v1213 = vsel %vm493, %v1194, 0
      %v1216 = vsel %vm493, %v1195, 0
      %v1219 = vsel %vm493, %v1196, 0
      %v1222 = vsel %vm493, %v1197, 0
      %v1225 = vsel %vm493, %v1198, 0
      %v1228 = vsel %vm493, %v1199, 0
      %v1231 = vsel %vm493, %v1200, 0
      %v1234 = vsel %vm493, %v1201, 0
      %v1237 = vsel %vm493, %v1202, 0
      %v1240 = vsel %vm493, %v1203, 0
      %v1243 = vsel %vm493, %v1204, 0
      %v1246 = vsel %vm493, %v1205, 0
      %v1249 = vsel %vm493, %v1206, 0
      %v1252 = vsel %vm493, %v1207, 0
      %v1255 = vsel %vm493, %v1208, 0
      %v1258 = vsel %vm493, %v1209, 0
      %v1261 = vsel %vm542, %v1211, 0
      %1263 = vmatpush.bf16.msra.mxu0 0
      %1264 = vmatpush.bf16.msra.mxu0 0
      %1265 = vmatpush.bf16.msra.mxu0 0
      %1266 = vmatpush.bf16.msra.mxu0 0
      %1267 = vmatpush.bf16.msra.mxu0 0
      %1268 = vmatpush.bf16.msra.mxu0 0
      %1269 = vmatpush.bf16.msra.mxu0 0
      %1270 = vmatpush.bf16.msra.mxu0 %v1261
      %1271 = vmatmul.bf16.gmra.mxu0 %v1213
      %v1272 = vpop.f32.mrf.mxu0
      %v1273 = vadd.f32 0.0, %v1272
      %v1274 = vpop.f32.mrf.mxu0
      %v1275 = vadd.f32 0.0, %v1274
      %1276 = vmatmul.bf16.gmra.mxu0 %v1216
      %v1277 = vpop.f32.mrf.mxu0
      %v1278 = vadd.f32 0.0, %v1277
      %v1279 = vpop.f32.mrf.mxu0
      %v1280 = vadd.f32 0.0, %v1279
      %1281 = vmatmul.bf16.gmra.mxu0 %v1219
      %v1282 = vpop.f32.mrf.mxu0
      %v1283 = vadd.f32 0.0, %v1282
      %v1284 = vpop.f32.mrf.mxu0
      %v1285 = vadd.f32 0.0, %v1284
      %1286 = vmatmul.bf16.gmra.mxu0 %v1222
      %v1287 = vpop.f32.mrf.mxu0
      %v1288 = vadd.f32 0.0, %v1287
      %v1289 = vpop.f32.mrf.mxu0
      %v1290 = vadd.f32 0.0, %v1289
      %1291 = vmatmul.bf16.gmra.mxu0 %v1225
      %v1292 = vpop.f32.mrf.mxu0
      %v1293 = vadd.f32 0.0, %v1292
      %v1294 = vpop.f32.mrf.mxu0
      %v1295 = vadd.f32 0.0, %v1294
      %1296 = vmatmul.bf16.gmra.mxu0 %v1228
      %v1297 = vpop.f32.mrf.mxu0
      %v1298 = vadd.f32 0.0, %v1297
      %v1299 = vpop.f32.mrf.mxu0
      %v1300 = vadd.f32 0.0, %v1299
      %1301 = vmatmul.bf16.gmra.mxu0 %v1231
      %v1302 = vpop.f32.mrf.mxu0
      %v1303 = vadd.f32 0.0, %v1302
      %v1304 = vpop.f32.mrf.mxu0
      %v1305 = vadd.f32 0.0, %v1304
      %1306 = vmatmul.bf16.gmra.mxu0 %v1234
      %v1307 = vpop.f32.mrf.mxu0
      %v1308 = vadd.f32 0.0, %v1307
      %v1309 = vpop.f32.mrf.mxu0
      %v1310 = vadd.f32 0.0, %v1309
      %1311 = vmatmul.bf16.gmra.mxu0 %v1237
      %v1312 = vpop.f32.mrf.mxu0
      %v1313 = vadd.f32 0.0, %v1312
      %v1314 = vpop.f32.mrf.mxu0
      %v1315 = vadd.f32 0.0, %v1314
      %1316 = vmatmul.bf16.gmra.mxu0 %v1240
      %v1317 = vpop.f32.mrf.mxu0
      %v1318 = vadd.f32 0.0, %v1317
      %v1319 = vpop.f32.mrf.mxu0
      %v1320 = vadd.f32 0.0, %v1319
      %1321 = vmatmul.bf16.gmra.mxu0 %v1243
      %v1322 = vpop.f32.mrf.mxu0
      %v1323 = vadd.f32 0.0, %v1322
      %v1324 = vpop.f32.mrf.mxu0
      %v1325 = vadd.f32 0.0, %v1324
      %1326 = vmatmul.bf16.gmra.mxu0 %v1246
      %v1327 = vpop.f32.mrf.mxu0
      %v1328 = vadd.f32 0.0, %v1327
      %v1329 = vpop.f32.mrf.mxu0
      %v1330 = vadd.f32 0.0, %v1329
      %1331 = vmatmul.bf16.gmra.mxu0 %v1249
      %v1332 = vpop.f32.mrf.mxu0
      %v1333 = vadd.f32 0.0, %v1332
      %v1334 = vpop.f32.mrf.mxu0
      %v1335 = vadd.f32 0.0, %v1334
      %1336 = vmatmul.bf16.gmra.mxu0 %v1252
      %v1337 = vpop.f32.mrf.mxu0
      %v1338 = vadd.f32 0.0, %v1337
      %v1339 = vpop.f32.mrf.mxu0
      %v1340 = vadd.f32 0.0, %v1339
      %1341 = vmatmul.bf16.gmra.mxu0 %v1255
      %v1342 = vpop.f32.mrf.mxu0
      %v1343 = vadd.f32 0.0, %v1342
      %v1344 = vpop.f32.mrf.mxu0
      %v1345 = vadd.f32 0.0, %v1344
      %1346 = vmatmul.bf16.gmra.mxu0 %v1258
      %v1347 = vpop.f32.mrf.mxu0
      %v1348 = vadd.f32 0.0, %v1347
      %v1349 = vpop.f32.mrf.mxu0
      %v1350 = vadd.f32 0.0, %v1349
      %1351 = vdwg.mxu0
      %v1352 = vadd.f32 %v1162, %v1273
      %v1353 = vadd.f32 %v1163, %v1275
      %v1354 = vadd.f32 %v1164, %v1278
      %v1355 = vadd.f32 %v1165, %v1280
      %v1356 = vadd.f32 %v1166, %v1283
      %v1357 = vadd.f32 %v1167, %v1285
      %v1358 = vadd.f32 %v1168, %v1288
      %v1359 = vadd.f32 %v1169, %v1290
      %v1360 = vadd.f32 %v1170, %v1293
      %v1361 = vadd.f32 %v1171, %v1295
      %v1362 = vadd.f32 %v1172, %v1298
      %v1363 = vadd.f32 %v1173, %v1300
      %v1364 = vadd.f32 %v1174, %v1303
      %v1365 = vadd.f32 %v1175, %v1305
      %v1366 = vadd.f32 %v1176, %v1308
      %v1367 = vadd.f32 %v1177, %v1310
      %v1368 = vadd.f32 %v1178, %v1313
      %v1369 = vadd.f32 %v1179, %v1315
      %v1370 = vadd.f32 %v1180, %v1318
      %v1371 = vadd.f32 %v1181, %v1320
      %v1372 = vadd.f32 %v1182, %v1323
      %v1373 = vadd.f32 %v1183, %v1325
      %v1374 = vadd.f32 %v1184, %v1328
      %v1375 = vadd.f32 %v1185, %v1330
      %v1376 = vadd.f32 %v1186, %v1333
      %v1377 = vadd.f32 %v1187, %v1335
      %v1378 = vadd.f32 %v1188, %v1338
      %v1379 = vadd.f32 %v1189, %v1340
      %v1380 = vadd.f32 %v1190, %v1343
      %v1381 = vadd.f32 %v1191, %v1345
      %v1382 = vadd.f32 %v1192, %v1348
      %v1383 = vadd.f32 %v1193, %v1350
      %v1384 = vmul.f32 %v808, %v295
      %v1385 = vmul.f32 %v839, %v296
      %v1386 = vpack.c.bf16 %v1385, %v1384
      %s1387 = scalar_lea.vmem %s1, 10
      %v1388 = vld [vmem:[%s1387] sm:$0x3]
      %v1390 = vsel %vm493, %v1386, 0
      %v1393 = vsel %vm542, %v1388, 0
      %1395 = vmatpush.bf16.msra.mxu0 0
      %1396 = vmatpush.bf16.msra.mxu0 0
      %1397 = vmatpush.bf16.msra.mxu0 0
      %1398 = vmatpush.bf16.msra.mxu0 0
      %1399 = vmatpush.bf16.msra.mxu0 0
      %1400 = vmatpush.bf16.msra.mxu0 0
      %1401 = vmatpush.bf16.msra.mxu0 0
      %1402 = vmatpush.bf16.msra.mxu0 %v1393
      %1403 = vmatmul.bf16.gmra.mxu0 %v894
      %v1404 = vpop.f32.mrf.mxu0
      %v1405 = vadd.f32 0.0, %v1404
      %v1406 = vpop.f32.mrf.mxu0
      %v1407 = vadd.f32 0.0, %v1406
      %1408 = vmatmul.bf16.gmra.mxu0 %v897
      %v1409 = vpop.f32.mrf.mxu0
      %v1410 = vadd.f32 0.0, %v1409
      %v1411 = vpop.f32.mrf.mxu0
      %v1412 = vadd.f32 0.0, %v1411
      %1413 = vmatmul.bf16.gmra.mxu0 %v900
      %v1414 = vpop.f32.mrf.mxu0
      %v1415 = vadd.f32 0.0, %v1414
      %v1416 = vpop.f32.mrf.mxu0
      %v1417 = vadd.f32 0.0, %v1416
      %1418 = vmatmul.bf16.gmra.mxu0 %v903
      %v1419 = vpop.f32.mrf.mxu0
      %v1420 = vadd.f32 0.0, %v1419
      %v1421 = vpop.f32.mrf.mxu0
      %v1422 = vadd.f32 0.0, %v1421
      %1423 = vmatmul.bf16.gmra.mxu0 %v906
      %v1424 = vpop.f32.mrf.mxu0
      %v1425 = vadd.f32 0.0, %v1424
      %v1426 = vpop.f32.mrf.mxu0
      %v1427 = vadd.f32 0.0, %v1426
      %1428 = vmatmul.bf16.gmra.mxu0 %v909
      %v1429 = vpop.f32.mrf.mxu0
      %v1430 = vadd.f32 0.0, %v1429
      %v1431 = vpop.f32.mrf.mxu0
      %v1432 = vadd.f32 0.0, %v1431
      %1433 = vmatmul.bf16.gmra.mxu0 %v912
      %v1434 = vpop.f32.mrf.mxu0
      %v1435 = vadd.f32 0.0, %v1434
      %v1436 = vpop.f32.mrf.mxu0
      %v1437 = vadd.f32 0.0, %v1436
      %1438 = vmatmul.bf16.gmra.mxu0 %v915
      %v1439 = vpop.f32.mrf.mxu0
      %v1440 = vadd.f32 0.0, %v1439
      %v1441 = vpop.f32.mrf.mxu0
      %v1442 = vadd.f32 0.0, %v1441
      %1443 = vmatmul.bf16.gmra.mxu0 %v918
      %v1444 = vpop.f32.mrf.mxu0
      %v1445 = vadd.f32 0.0, %v1444
      %v1446 = vpop.f32.mrf.mxu0
      %v1447 = vadd.f32 0.0, %v1446
      %1448 = vmatmul.bf16.gmra.mxu0 %v921
      %v1449 = vpop.f32.mrf.mxu0
      %v1450 = vadd.f32 0.0, %v1449
      %v1451 = vpop.f32.mrf.mxu0
      %v1452 = vadd.f32 0.0, %v1451
      %1453 = vmatmul.bf16.gmra.mxu0 %v924
      %v1454 = vpop.f32.mrf.mxu0
      %v1455 = vadd.f32 0.0, %v1454
      %v1456 = vpop.f32.mrf.mxu0
      %v1457 = vadd.f32 0.0, %v1456
      %1458 = vmatmul.bf16.gmra.mxu0 %v927
      %v1459 = vpop.f32.mrf.mxu0
      %v1460 = vadd.f32 0.0, %v1459
      %v1461 = vpop.f32.mrf.mxu0
      %v1462 = vadd.f32 0.0, %v1461
      %1463 = vmatmul.bf16.gmra.mxu0 %v930
      %v1464 = vpop.f32.mrf.mxu0
      %v1465 = vadd.f32 0.0, %v1464
      %v1466 = vpop.f32.mrf.mxu0
      %v1467 = vadd.f32 0.0, %v1466
      %1468 = vmatmul.bf16.gmra.mxu0 %v933
      %v1469 = vpop.f32.mrf.mxu0
      %v1470 = vadd.f32 0.0, %v1469
      %v1471 = vpop.f32.mrf.mxu0
      %v1472 = vadd.f32 0.0, %v1471
      %1473 = vmatmul.bf16.gmra.mxu0 %v936
      %v1474 = vpop.f32.mrf.mxu0
      %v1475 = vadd.f32 0.0, %v1474
      %v1476 = vpop.f32.mrf.mxu0
      %v1477 = vadd.f32 0.0, %v1476
      %1478 = vmatmul.bf16.gmra.mxu0 %v1390
      %v1479 = vpop.f32.mrf.mxu0
      %v1480 = vadd.f32 0.0, %v1479
      %v1481 = vpop.f32.mrf.mxu0
      %v1482 = vadd.f32 0.0, %v1481
      %1483 = vdwg.mxu0
      %v1484 = vadd.f32 %v1352, %v1405
      %v1485 = vadd.f32 %v1353, %v1407
      %v1486 = vadd.f32 %v1354, %v1410
      %v1487 = vadd.f32 %v1355, %v1412
      %v1488 = vadd.f32 %v1356, %v1415
      %v1489 = vadd.f32 %v1357, %v1417
      %v1490 = vadd.f32 %v1358, %v1420
      %v1491 = vadd.f32 %v1359, %v1422
      %v1492 = vadd.f32 %v1360, %v1425
      %v1493 = vadd.f32 %v1361, %v1427
      %v1494 = vadd.f32 %v1362, %v1430
      %v1495 = vadd.f32 %v1363, %v1432
      %v1496 = vadd.f32 %v1364, %v1435
      %v1497 = vadd.f32 %v1365, %v1437
      %v1498 = vadd.f32 %v1366, %v1440
      %v1499 = vadd.f32 %v1367, %v1442
      %v1500 = vadd.f32 %v1368, %v1445
      %v1501 = vadd.f32 %v1369, %v1447
      %v1502 = vadd.f32 %v1370, %v1450
      %v1503 = vadd.f32 %v1371, %v1452
      %v1504 = vadd.f32 %v1372, %v1455
      %v1505 = vadd.f32 %v1373, %v1457
      %v1506 = vadd.f32 %v1374, %v1460
      %v1507 = vadd.f32 %v1375, %v1462
      %v1508 = vadd.f32 %v1376, %v1465
      %v1509 = vadd.f32 %v1377, %v1467
      %v1510 = vadd.f32 %v1378, %v1470
      %v1511 = vadd.f32 %v1379, %v1472
      %v1512 = vadd.f32 %v1380, %v1475
      %v1513 = vadd.f32 %v1381, %v1477
      %v1514 = vadd.f32 %v1382, %v1480
      %v1515 = vadd.f32 %v1383, %v1482
      %v1516 = vmul.f32 %v393, %v287
      %v1517 = vmul.f32 %v392, %v287
      %v1518 = vpack.c.bf16 %v1517, %v1516
      %s1519 = scalar_lea.vmem %s1, 12
      %v1520 = vld [vmem:[%s1519] sm:$0x3]
      %v1522 = vsel %vm493, %v1518, 0
      %v1525 = vsel %vm542, %v1520, 0
      %1527 = vmatpush.bf16.msra.mxu0 0
      %1528 = vmatpush.bf16.msra.mxu0 0
      %1529 = vmatpush.bf16.msra.mxu0 0
      %1530 = vmatpush.bf16.msra.mxu0 0
      %1531 = vmatpush.bf16.msra.mxu0 0
      %1532 = vmatpush.bf16.msra.mxu0 0
      %1533 = vmatpush.bf16.msra.mxu0 0
      %1534 = vmatpush.bf16.msra.mxu0 %v1525
      %1535 = vmatmul.bf16.gmra.mxu0 %v642
      %v1536 = vpop.f32.mrf.mxu0
      %v1537 = vadd.f32 0.0, %v1536
      %v1538 = vpop.f32.mrf.mxu0
      %v1539 = vadd.f32 0.0, %v1538
      %1540 = vmatmul.bf16.gmra.mxu0 %v645
      %v1541 = vpop.f32.mrf.mxu0
      %v1542 = vadd.f32 0.0, %v1541
      %v1543 = vpop.f32.mrf.mxu0
      %v1544 = vadd.f32 0.0, %v1543
      %1545 = vmatmul.bf16.gmra.mxu0 %v648
      %v1546 = vpop.f32.mrf.mxu0
      %v1547 = vadd.f32 0.0, %v1546
      %v1548 = vpop.f32.mrf.mxu0
      %v1549 = vadd.f32 0.0, %v1548
      %1550 = vmatmul.bf16.gmra.mxu0 %v651
      %v1551 = vpop.f32.mrf.mxu0
      %v1552 = vadd.f32 0.0, %v1551
      %v1553 = vpop.f32.mrf.mxu0
      %v1554 = vadd.f32 0.0, %v1553
      %1555 = vmatmul.bf16.gmra.mxu0 %v654
      %v1556 = vpop.f32.mrf.mxu0
      %v1557 = vadd.f32 0.0, %v1556
      %v1558 = vpop.f32.mrf.mxu0
      %v1559 = vadd.f32 0.0, %v1558
      %1560 = vmatmul.bf16.gmra.mxu0 %v657
      %v1561 = vpop.f32.mrf.mxu0
      %v1562 = vadd.f32 0.0, %v1561
      %v1563 = vpop.f32.mrf.mxu0
      %v1564 = vadd.f32 0.0, %v1563
      %1565 = vmatmul.bf16.gmra.mxu0 %v660
      %v1566 = vpop.f32.mrf.mxu0
      %v1567 = vadd.f32 0.0, %v1566
      %v1568 = vpop.f32.mrf.mxu0
      %v1569 = vadd.f32 0.0, %v1568
      %1570 = vmatmul.bf16.gmra.mxu0 %v663
      %v1571 = vpop.f32.mrf.mxu0
      %v1572 = vadd.f32 0.0, %v1571
      %v1573 = vpop.f32.mrf.mxu0
      %v1574 = vadd.f32 0.0, %v1573
      %1575 = vmatmul.bf16.gmra.mxu0 %v666
      %v1576 = vpop.f32.mrf.mxu0
      %v1577 = vadd.f32 0.0, %v1576
      %v1578 = vpop.f32.mrf.mxu0
      %v1579 = vadd.f32 0.0, %v1578
      %1580 = vmatmul.bf16.gmra.mxu0 %v669
      %v1581 = vpop.f32.mrf.mxu0
      %v1582 = vadd.f32 0.0, %v1581
      %v1583 = vpop.f32.mrf.mxu0
      %v1584 = vadd.f32 0.0, %v1583
      %1585 = vmatmul.bf16.gmra.mxu0 %v672
      %v1586 = vpop.f32.mrf.mxu0
      %v1587 = vadd.f32 0.0, %v1586
      %v1588 = vpop.f32.mrf.mxu0
      %v1589 = vadd.f32 0.0, %v1588
      %1590 = vmatmul.bf16.gmra.mxu0 %v675
      %v1591 = vpop.f32.mrf.mxu0
      %v1592 = vadd.f32 0.0, %v1591
      %v1593 = vpop.f32.mrf.mxu0
      %v1594 = vadd.f32 0.0, %v1593
      %1595 = vmatmul.bf16.gmra.mxu0 %v678
      %v1596 = vpop.f32.mrf.mxu0
      %v1597 = vadd.f32 0.0, %v1596
      %v1598 = vpop.f32.mrf.mxu0
      %v1599 = vadd.f32 0.0, %v1598
      %1600 = vmatmul.bf16.gmra.mxu0 %v681
      %v1601 = vpop.f32.mrf.mxu0
      %v1602 = vadd.f32 0.0, %v1601
      %v1603 = vpop.f32.mrf.mxu0
      %v1604 = vadd.f32 0.0, %v1603
      %1605 = vmatmul.bf16.gmra.mxu0 %v1068
      %v1606 = vpop.f32.mrf.mxu0
      %v1607 = vadd.f32 0.0, %v1606
      %v1608 = vpop.f32.mrf.mxu0
      %v1609 = vadd.f32 0.0, %v1608
      %1610 = vmatmul.bf16.gmra.mxu0 %v1522
      %v1611 = vpop.f32.mrf.mxu0
      %v1612 = vadd.f32 0.0, %v1611
      %v1613 = vpop.f32.mrf.mxu0
      %v1614 = vadd.f32 0.0, %v1613
      %1615 = vdwg.mxu0
      %v1616 = vadd.f32 %v1484, %v1537
      %v1617 = vadd.f32 %v1485, %v1539
      %v1618 = vadd.f32 %v1486, %v1542
      %v1619 = vadd.f32 %v1487, %v1544
      %v1620 = vadd.f32 %v1488, %v1547
      %v1621 = vadd.f32 %v1489, %v1549
      %v1622 = vadd.f32 %v1490, %v1552
      %v1623 = vadd.f32 %v1491, %v1554
      %v1624 = vadd.f32 %v1492, %v1557
      %v1625 = vadd.f32 %v1493, %v1559
      %v1626 = vadd.f32 %v1494, %v1562
      %v1627 = vadd.f32 %v1495, %v1564
      %v1628 = vadd.f32 %v1496, %v1567
      %v1629 = vadd.f32 %v1497, %v1569
      %v1630 = vadd.f32 %v1498, %v1572
      %v1631 = vadd.f32 %v1499, %v1574
      %v1632 = vadd.f32 %v1500, %v1577
      %v1633 = vadd.f32 %v1501, %v1579
      %v1634 = vadd.f32 %v1502, %v1582
      %v1635 = vadd.f32 %v1503, %v1584
      %v1636 = vadd.f32 %v1504, %v1587
      %v1637 = vadd.f32 %v1505, %v1589
      %v1638 = vadd.f32 %v1506, %v1592
      %v1639 = vadd.f32 %v1507, %v1594
      %v1640 = vadd.f32 %v1508, %v1597
      %v1641 = vadd.f32 %v1509, %v1599
      %v1642 = vadd.f32 %v1510, %v1602
      %v1643 = vadd.f32 %v1511, %v1604
      %v1644 = vadd.f32 %v1512, %v1607
      %v1645 = vadd.f32 %v1513, %v1609
      %v1646 = vadd.f32 %v1514, %v1612
      %v1647 = vadd.f32 %v1515, %v1614
      %v1648 = vmul.f32 %v327, %v290
      %v1649 = vmul.f32 %v328, %v290
      %v1650 = vmul.f32 %v297, %v287
      %v1651 = vmul.f32 %v298, %v287
      %v1652 = vpack.c.bf16 %v1649, %v1648
      %v1653 = vpack.c.bf16 %v1651, %v1650
      %s1654 = scalar_lea.vmem %s1, 14
      %v1655 = vld [vmem:[%s1654] sm:$0x3]
      %v1657 = vsel %vm493, %v1652, 0
      %v1660 = vsel %vm493, %v1653, 0
      %v1663 = vsel %vm542, %v1655, 0
      %1665 = vmatpush.bf16.msra.mxu0 0
      %1666 = vmatpush.bf16.msra.mxu0 0
      %1667 = vmatpush.bf16.msra.mxu0 0
      %1668 = vmatpush.bf16.msra.mxu0 0
      %1669 = vmatpush.bf16.msra.mxu0 0
      %1670 = vmatpush.bf16.msra.mxu0 0
      %1671 = vmatpush.bf16.msra.mxu0 0
      %1672 = vmatpush.bf16.msra.mxu0 %v1663
      %1673 = vmatmul.bf16.gmra.mxu0 %v501
      %v1674 = vpop.f32.mrf.mxu0
      %v1675 = vadd.f32 0.0, %v1674
      %v1676 = vpop.f32.mrf.mxu0
      %v1677 = vadd.f32 0.0, %v1676
      %1678 = vmatmul.bf16.gmra.mxu0 %v504
      %v1679 = vpop.f32.mrf.mxu0
      %v1680 = vadd.f32 0.0, %v1679
      %v1681 = vpop.f32.mrf.mxu0
      %v1682 = vadd.f32 0.0, %v1681
      %1683 = vmatmul.bf16.gmra.mxu0 %v507
      %v1684 = vpop.f32.mrf.mxu0
      %v1685 = vadd.f32 0.0, %v1684
      %v1686 = vpop.f32.mrf.mxu0
      %v1687 = vadd.f32 0.0, %v1686
      %1688 = vmatmul.bf16.gmra.mxu0 %v510
      %v1689 = vpop.f32.mrf.mxu0
      %v1690 = vadd.f32 0.0, %v1689
      %v1691 = vpop.f32.mrf.mxu0
      %v1692 = vadd.f32 0.0, %v1691
      %1693 = vmatmul.bf16.gmra.mxu0 %v513
      %v1694 = vpop.f32.mrf.mxu0
      %v1695 = vadd.f32 0.0, %v1694
      %v1696 = vpop.f32.mrf.mxu0
      %v1697 = vadd.f32 0.0, %v1696
      %1698 = vmatmul.bf16.gmra.mxu0 %v516
      %v1699 = vpop.f32.mrf.mxu0
      %v1700 = vadd.f32 0.0, %v1699
      %v1701 = vpop.f32.mrf.mxu0
      %v1702 = vadd.f32 0.0, %v1701
      %1703 = vmatmul.bf16.gmra.mxu0 %v519
      %v1704 = vpop.f32.mrf.mxu0
      %v1705 = vadd.f32 0.0, %v1704
      %v1706 = vpop.f32.mrf.mxu0
      %v1707 = vadd.f32 0.0, %v1706
      %1708 = vmatmul.bf16.gmra.mxu0 %v522
      %v1709 = vpop.f32.mrf.mxu0
      %v1710 = vadd.f32 0.0, %v1709
      %v1711 = vpop.f32.mrf.mxu0
      %v1712 = vadd.f32 0.0, %v1711
      %1713 = vmatmul.bf16.gmra.mxu0 %v525
      %v1714 = vpop.f32.mrf.mxu0
      %v1715 = vadd.f32 0.0, %v1714
      %v1716 = vpop.f32.mrf.mxu0
      %v1717 = vadd.f32 0.0, %v1716
      %1718 = vmatmul.bf16.gmra.mxu0 %v528
      %v1719 = vpop.f32.mrf.mxu0
      %v1720 = vadd.f32 0.0, %v1719
      %v1721 = vpop.f32.mrf.mxu0
      %v1722 = vadd.f32 0.0, %v1721
      %1723 = vmatmul.bf16.gmra.mxu0 %v531
      %v1724 = vpop.f32.mrf.mxu0
      %v1725 = vadd.f32 0.0, %v1724
      %v1726 = vpop.f32.mrf.mxu0
      %v1727 = vadd.f32 0.0, %v1726
      %1728 = vmatmul.bf16.gmra.mxu0 %v534
      %v1729 = vpop.f32.mrf.mxu0
      %v1730 = vadd.f32 0.0, %v1729
      %v1731 = vpop.f32.mrf.mxu0
      %v1732 = vadd.f32 0.0, %v1731
      %1733 = vmatmul.bf16.gmra.mxu0 %v537
      %v1734 = vpop.f32.mrf.mxu0
      %v1735 = vadd.f32 0.0, %v1734
      %v1736 = vpop.f32.mrf.mxu0
      %v1737 = vadd.f32 0.0, %v1736
      %1738 = vmatmul.bf16.gmra.mxu0 %v540
      %v1739 = vpop.f32.mrf.mxu0
      %v1740 = vadd.f32 0.0, %v1739
      %v1741 = vpop.f32.mrf.mxu0
      %v1742 = vadd.f32 0.0, %v1741
      %1743 = vmatmul.bf16.gmra.mxu0 %v1657
      %v1744 = vpop.f32.mrf.mxu0
      %v1745 = vadd.f32 0.0, %v1744
      %v1746 = vpop.f32.mrf.mxu0
      %v1747 = vadd.f32 0.0, %v1746
      %1748 = vmatmul.bf16.gmra.mxu0 %v1660
      %v1749 = vpop.f32.mrf.mxu0
      %v1750 = vadd.f32 0.0, %v1749
      %v1751 = vpop.f32.mrf.mxu0
      %v1752 = vadd.f32 0.0, %v1751
      %1753 = vdwg.mxu0
      %v1754 = vadd.f32 %v1616, %v1675
      %v1755 = vadd.f32 %v1617, %v1677
      %v1756 = vadd.f32 %v1618, %v1680
      %v1757 = vadd.f32 %v1619, %v1682
      %v1758 = vadd.f32 %v1620, %v1685
      %v1759 = vadd.f32 %v1621, %v1687
      %v1760 = vadd.f32 %v1622, %v1690
      %v1761 = vadd.f32 %v1623, %v1692
      %v1762 = vadd.f32 %v1624, %v1695
      %v1763 = vadd.f32 %v1625, %v1697
      %v1764 = vadd.f32 %v1626, %v1700
      %v1765 = vadd.f32 %v1627, %v1702
      %v1766 = vadd.f32 %v1628, %v1705
      %v1767 = vadd.f32 %v1629, %v1707
      %v1768 = vadd.f32 %v1630, %v1710
      %v1769 = vadd.f32 %v1631, %v1712
      %v1770 = vadd.f32 %v1632, %v1715
      %v1771 = vadd.f32 %v1633, %v1717
      %v1772 = vadd.f32 %v1634, %v1720
      %v1773 = vadd.f32 %v1635, %v1722
      %v1774 = vadd.f32 %v1636, %v1725
      %v1775 = vadd.f32 %v1637, %v1727
      %v1776 = vadd.f32 %v1638, %v1730
      %v1777 = vadd.f32 %v1639, %v1732
      %v1778 = vadd.f32 %v1640, %v1735
      %v1779 = vadd.f32 %v1641, %v1737
      %v1780 = vadd.f32 %v1642, %v1740
      %v1781 = vadd.f32 %v1643, %v1742
      %v1782 = vadd.f32 %v1644, %v1745
      %v1783 = vadd.f32 %v1645, %v1747
      %v1784 = vadd.f32 %v1646, %v1750
      %v1785 = vadd.f32 %v1647, %v1752
      %v1786 = vmul.f32 %v838, %v287
      %v1787 = vmul.f32 %v837, %v287
      %v1788 = vpack.c.bf16 %v1787, %v1786
      %s1789 = scalar_lea.vmem %s1, 16
      %v1790 = vld [vmem:[%s1789] sm:$0x3]
      %v1792 = vsel %vm493, %v1788, 0
      %v1795 = vsel %vm542, %v1790, 0
      %1797 = vmatpush.bf16.msra.mxu0 0
      %1798 = vmatpush.bf16.msra.mxu0 0
      %1799 = vmatpush.bf16.msra.mxu0 0
      %1800 = vmatpush.bf16.msra.mxu0 0
      %1801 = vmatpush.bf16.msra.mxu0 0
      %1802 = vmatpush.bf16.msra.mxu0 0
      %1803 = vmatpush.bf16.msra.mxu0 0
      %1804 = vmatpush.bf16.msra.mxu0 %v1795
      %1805 = vmatmul.bf16.gmra.mxu0 %v897
      %v1806 = vpop.f32.mrf.mxu0
      %v1807 = vadd.f32 0.0, %v1806
      %v1808 = vpop.f32.mrf.mxu0
      %v1809 = vadd.f32 0.0, %v1808
      %1810 = vmatmul.bf16.gmra.mxu0 %v900
      %v1811 = vpop.f32.mrf.mxu0
      %v1812 = vadd.f32 0.0, %v1811
      %v1813 = vpop.f32.mrf.mxu0
      %v1814 = vadd.f32 0.0, %v1813
      %1815 = vmatmul.bf16.gmra.mxu0 %v903
      %v1816 = vpop.f32.mrf.mxu0
      %v1817 = vadd.f32 0.0, %v1816
      %v1818 = vpop.f32.mrf.mxu0
      %v1819 = vadd.f32 0.0, %v1818
      %1820 = vmatmul.bf16.gmra.mxu0 %v906
      %v1821 = vpop.f32.mrf.mxu0
      %v1822 = vadd.f32 0.0, %v1821
      %v1823 = vpop.f32.mrf.mxu0
      %v1824 = vadd.f32 0.0, %v1823
      %1825 = vmatmul.bf16.gmra.mxu0 %v909
      %v1826 = vpop.f32.mrf.mxu0
      %v1827 = vadd.f32 0.0, %v1826
      %v1828 = vpop.f32.mrf.mxu0
      %v1829 = vadd.f32 0.0, %v1828
      %1830 = vmatmul.bf16.gmra.mxu0 %v912
      %v1831 = vpop.f32.mrf.mxu0
      %v1832 = vadd.f32 0.0, %v1831
      %v1833 = vpop.f32.mrf.mxu0
      %v1834 = vadd.f32 0.0, %v1833
      %1835 = vmatmul.bf16.gmra.mxu0 %v915
      %v1836 = vpop.f32.mrf.mxu0
      %v1837 = vadd.f32 0.0, %v1836
      %v1838 = vpop.f32.mrf.mxu0
      %v1839 = vadd.f32 0.0, %v1838
      %1840 = vmatmul.bf16.gmra.mxu0 %v918
      %v1841 = vpop.f32.mrf.mxu0
      %v1842 = vadd.f32 0.0, %v1841
      %v1843 = vpop.f32.mrf.mxu0
      %v1844 = vadd.f32 0.0, %v1843
      %1845 = vmatmul.bf16.gmra.mxu0 %v921
      %v1846 = vpop.f32.mrf.mxu0
      %v1847 = vadd.f32 0.0, %v1846
      %v1848 = vpop.f32.mrf.mxu0
      %v1849 = vadd.f32 0.0, %v1848
      %1850 = vmatmul.bf16.gmra.mxu0 %v924
      %v1851 = vpop.f32.mrf.mxu0
      %v1852 = vadd.f32 0.0, %v1851
      %v1853 = vpop.f32.mrf.mxu0
      %v1854 = vadd.f32 0.0, %v1853
      %1855 = vmatmul.bf16.gmra.mxu0 %v927
      %v1856 = vpop.f32.mrf.mxu0
      %v1857 = vadd.f32 0.0, %v1856
      %v1858 = vpop.f32.mrf.mxu0
      %v1859 = vadd.f32 0.0, %v1858
      %1860 = vmatmul.bf16.gmra.mxu0 %v930
      %v1861 = vpop.f32.mrf.mxu0
      %v1862 = vadd.f32 0.0, %v1861
      %v1863 = vpop.f32.mrf.mxu0
      %v1864 = vadd.f32 0.0, %v1863
      %1865 = vmatmul.bf16.gmra.mxu0 %v933
      %v1866 = vpop.f32.mrf.mxu0
      %v1867 = vadd.f32 0.0, %v1866
      %v1868 = vpop.f32.mrf.mxu0
      %v1869 = vadd.f32 0.0, %v1868
      %1870 = vmatmul.bf16.gmra.mxu0 %v936
      %v1871 = vpop.f32.mrf.mxu0
      %v1872 = vadd.f32 0.0, %v1871
      %v1873 = vpop.f32.mrf.mxu0
      %v1874 = vadd.f32 0.0, %v1873
      %1875 = vmatmul.bf16.gmra.mxu0 %v1390
      %v1876 = vpop.f32.mrf.mxu0
      %v1877 = vadd.f32 0.0, %v1876
      %v1878 = vpop.f32.mrf.mxu0
      %v1879 = vadd.f32 0.0, %v1878
      %1880 = vmatmul.bf16.gmra.mxu0 %v1792
      %v1881 = vpop.f32.mrf.mxu0
      %v1882 = vadd.f32 0.0, %v1881
      %v1883 = vpop.f32.mrf.mxu0
      %v1884 = vadd.f32 0.0, %v1883
      %1885 = vdwg.mxu0
      %v1886 = vadd.f32 %v1754, %v1807
      %v1887 = vadd.f32 %v1755, %v1809
      %v1888 = vadd.f32 %v1756, %v1812
      %v1889 = vadd.f32 %v1757, %v1814
      %v1890 = vadd.f32 %v1758, %v1817
      %v1891 = vadd.f32 %v1759, %v1819
      %v1892 = vadd.f32 %v1760, %v1822
      %v1893 = vadd.f32 %v1761, %v1824
      %v1894 = vadd.f32 %v1762, %v1827
      %v1895 = vadd.f32 %v1763, %v1829
      %v1896 = vadd.f32 %v1764, %v1832
      %v1897 = vadd.f32 %v1765, %v1834
      %v1898 = vadd.f32 %v1766, %v1837
      %v1899 = vadd.f32 %v1767, %v1839
      %v1900 = vadd.f32 %v1768, %v1842
      %v1901 = vadd.f32 %v1769, %v1844
      %v1902 = vadd.f32 %v1770, %v1847
      %v1903 = vadd.f32 %v1771, %v1849
      %v1904 = vadd.f32 %v1772, %v1852
      %v1905 = vadd.f32 %v1773, %v1854
      %v1906 = vadd.f32 %v1774, %v1857
      %v1907 = vadd.f32 %v1775, %v1859
      %v1908 = vadd.f32 %v1776, %v1862
      %v1909 = vadd.f32 %v1777, %v1864
      %v1910 = vadd.f32 %v1778, %v1867
      %v1911 = vadd.f32 %v1779, %v1869
      %v1912 = vadd.f32 %v1780, %v1872
      %v1913 = vadd.f32 %v1781, %v1874
      %v1914 = vadd.f32 %v1782, %v1877
      %v1915 = vadd.f32 %v1783, %v1879
      %v1916 = vadd.f32 %v1784, %v1882
      %v1917 = vadd.f32 %v1785, %v1884
      %v1918 = vld [vmem:[%s2] sm:$0x1]
      %v1920 = vperm.slane %v1918, 0
      %v1922 = vadd.f32 %v1886, %v1920
      %v1923 = vadd.f32 %v1887, %v1920
      %v1924 = vadd.f32 %v1888, %v1920
      %v1925 = vadd.f32 %v1889, %v1920
      %v1926 = vadd.f32 %v1890, %v1920
      %v1927 = vadd.f32 %v1891, %v1920
      %v1928 = vadd.f32 %v1892, %v1920
      %v1929 = vadd.f32 %v1893, %v1920
      %v1930 = vadd.f32 %v1894, %v1920
      %v1931 = vadd.f32 %v1895, %v1920
      %v1932 = vadd.f32 %v1896, %v1920
      %v1933 = vadd.f32 %v1897, %v1920
      %v1934 = vadd.f32 %v1898, %v1920
      %v1935 = vadd.f32 %v1899, %v1920
      %v1936 = vadd.f32 %v1900, %v1920
      %v1937 = vadd.f32 %v1901, %v1920
      %v1938 = vadd.f32 %v1902, %v1920
      %v1939 = vadd.f32 %v1903, %v1920
      %v1940 = vadd.f32 %v1904, %v1920
      %v1941 = vadd.f32 %v1905, %v1920
      %v1942 = vadd.f32 %v1906, %v1920
      %v1943 = vadd.f32 %v1907, %v1920
      %v1944 = vadd.f32 %v1908, %v1920
      %v1945 = vadd.f32 %v1909, %v1920
      %v1946 = vadd.f32 %v1910, %v1920
      %v1947 = vadd.f32 %v1911, %v1920
      %v1948 = vadd.f32 %v1912, %v1920
      %v1949 = vadd.f32 %v1913, %v1920
      %v1950 = vadd.f32 %v1914, %v1920
      %v1951 = vadd.f32 %v1915, %v1920
      %v1952 = vadd.f32 %v1916, %v1920
      %v1953 = vadd.f32 %v1917, %v1920
      %vm1954 = vcmp.gt.f32.partialorder %v1922, 0.0
      %vm1955 = vcmp.gt.f32.partialorder %v1923, 0.0
      %vm1956 = vcmp.gt.f32.partialorder %v1924, 0.0
      %vm1957 = vcmp.gt.f32.partialorder %v1925, 0.0
      %vm1958 = vcmp.gt.f32.partialorder %v1926, 0.0
      %vm1959 = vcmp.gt.f32.partialorder %v1927, 0.0
      %vm1960 = vcmp.gt.f32.partialorder %v1928, 0.0
      %vm1961 = vcmp.gt.f32.partialorder %v1929, 0.0
      %vm1962 = vcmp.gt.f32.partialorder %v1930, 0.0
      %vm1963 = vcmp.gt.f32.partialorder %v1931, 0.0
      %vm1964 = vcmp.gt.f32.partialorder %v1932, 0.0
      %vm1965 = vcmp.gt.f32.partialorder %v1933, 0.0
      %vm1966 = vcmp.gt.f32.partialorder %v1934, 0.0
      %vm1967 = vcmp.gt.f32.partialorder %v1935, 0.0
      %vm1968 = vcmp.gt.f32.partialorder %v1936, 0.0
      %vm1969 = vcmp.gt.f32.partialorder %v1937, 0.0
      %vm1970 = vcmp.gt.f32.partialorder %v1938, 0.0
      %vm1971 = vcmp.gt.f32.partialorder %v1939, 0.0
      %vm1972 = vcmp.gt.f32.partialorder %v1940, 0.0
      %vm1973 = vcmp.gt.f32.partialorder %v1941, 0.0
      %vm1974 = vcmp.gt.f32.partialorder %v1942, 0.0
      %vm1975 = vcmp.gt.f32.partialorder %v1943, 0.0
      %vm1976 = vcmp.gt.f32.partialorder %v1944, 0.0
      %vm1977 = vcmp.gt.f32.partialorder %v1945, 0.0
      %vm1978 = vcmp.gt.f32.partialorder %v1946, 0.0
      %vm1979 = vcmp.gt.f32.partialorder %v1947, 0.0
      %vm1980 = vcmp.gt.f32.partialorder %v1948, 0.0
      %vm1981 = vcmp.gt.f32.partialorder %v1949, 0.0
      %vm1982 = vcmp.gt.f32.partialorder %v1950, 0.0
      %vm1983 = vcmp.gt.f32.partialorder %v1951, 0.0
      %vm1984 = vcmp.gt.f32.partialorder %v1952, 0.0
      %vm1985 = vcmp.gt.f32.partialorder %v1953, 0.0
      %v1986 = vld [vmem:[%s3] sm:$0x1]
      %v1988 = vperm.slane %v1986, 0
      %v1990 = vmul.f32 %v1988, %v1922
      %v1991 = vmul.f32 %v1988, %v1923
      %v1992 = vmul.f32 %v1988, %v1924
      %v1993 = vmul.f32 %v1988, %v1925
      %v1994 = vmul.f32 %v1988, %v1926
      %v1995 = vmul.f32 %v1988, %v1927
      %v1996 = vmul.f32 %v1988, %v1928
      %v1997 = vmul.f32 %v1988, %v1929
      %v1998 = vmul.f32 %v1988, %v1930
      %v1999 = vmul.f32 %v1988, %v1931
      %v2000 = vmul.f32 %v1988, %v1932
      %v2001 = vmul.f32 %v1988, %v1933
      %v2002 = vmul.f32 %v1988, %v1934
      %v2003 = vmul.f32 %v1988, %v1935
      %v2004 = vmul.f32 %v1988, %v1936
      %v2005 = vmul.f32 %v1988, %v1937
      %v2006 = vmul.f32 %v1988, %v1938
      %v2007 = vmul.f32 %v1988, %v1939
      %v2008 = vmul.f32 %v1988, %v1940
      %v2009 = vmul.f32 %v1988, %v1941
      %v2010 = vmul.f32 %v1988, %v1942
      %v2011 = vmul.f32 %v1988, %v1943
      %v2012 = vmul.f32 %v1988, %v1944
      %v2013 = vmul.f32 %v1988, %v1945
      %v2014 = vmul.f32 %v1988, %v1946
      %v2015 = vmul.f32 %v1988, %v1947
      %v2016 = vmul.f32 %v1988, %v1948
      %v2017 = vmul.f32 %v1988, %v1949
      %v2018 = vmul.f32 %v1988, %v1950
      %v2019 = vmul.f32 %v1988, %v1951
      %v2020 = vmul.f32 %v1988, %v1952
      %v2021 = vmul.f32 %v1988, %v1953
      %v2022 = vsel %vm1954, %v1922, %v1990
      %v2023 = vsel %vm1955, %v1923, %v1991
      %v2024 = vsel %vm1956, %v1924, %v1992
      %v2025 = vsel %vm1957, %v1925, %v1993
      %v2026 = vsel %vm1958, %v1926, %v1994
      %v2027 = vsel %vm1959, %v1927, %v1995
      %v2028 = vsel %vm1960, %v1928, %v1996
      %v2029 = vsel %vm1961, %v1929, %v1997
      %v2030 = vsel %vm1962, %v1930, %v1998
      %v2031 = vsel %vm1963, %v1931, %v1999
      %v2032 = vsel %vm1964, %v1932, %v2000
      %v2033 = vsel %vm1965, %v1933, %v2001
      %v2034 = vsel %vm1966, %v1934, %v2002
      %v2035 = vsel %vm1967, %v1935, %v2003
      %v2036 = vsel %vm1968, %v1936, %v2004
      %v2037 = vsel %vm1969, %v1937, %v2005
      %v2038 = vsel %vm1970, %v1938, %v2006
      %v2039 = vsel %vm1971, %v1939, %v2007
      %v2040 = vsel %vm1972, %v1940, %v2008
      %v2041 = vsel %vm1973, %v1941, %v2009
      %v2042 = vsel %vm1974, %v1942, %v2010
      %v2043 = vsel %vm1975, %v1943, %v2011
      %v2044 = vsel %vm1976, %v1944, %v2012
      %v2045 = vsel %vm1977, %v1945, %v2013
      %v2046 = vsel %vm1978, %v1946, %v2014
      %v2047 = vsel %vm1979, %v1947, %v2015
      %v2048 = vsel %vm1980, %v1948, %v2016
      %v2049 = vsel %vm1981, %v1949, %v2017
      %v2050 = vsel %vm1982, %v1950, %v2018
      %v2051 = vsel %vm1983, %v1951, %v2019
      %v2052 = vsel %vm1984, %v1952, %v2020
      %v2053 = vsel %vm1985, %v1953, %v2021
      %v2054 = vrot.slane %v2022, 7
      %v2055 = vrot.slane %v2023, 7
      %v2056 = vrot.slane %v2024, 7
      %v2057 = vrot.slane %v2025, 7
      %v2058 = vrot.slane %v2026, 7
      %v2059 = vrot.slane %v2027, 7
      %v2060 = vrot.slane %v2028, 7
      %v2061 = vrot.slane %v2029, 7
      %v2062 = vrot.slane %v2030, 7
      %v2063 = vrot.slane %v2031, 7
      %v2064 = vrot.slane %v2032, 7
      %v2065 = vrot.slane %v2033, 7
      %v2066 = vrot.slane %v2034, 7
      %v2067 = vrot.slane %v2035, 7
      %v2068 = vrot.slane %v2036, 7
      %v2069 = vrot.slane %v2037, 7
      %v2070 = vrot.slane %v2038, 7
      %v2071 = vrot.slane %v2039, 7
      %v2072 = vrot.slane %v2040, 7
      %v2073 = vrot.slane %v2041, 7
      %v2074 = vrot.slane %v2042, 7
      %v2075 = vrot.slane %v2043, 7
      %v2076 = vrot.slane %v2044, 7
      %v2077 = vrot.slane %v2045, 7
      %v2078 = vrot.slane %v2046, 7
      %v2079 = vrot.slane %v2047, 7
      %v2080 = vrot.slane %v2048, 7
      %v2081 = vrot.slane %v2049, 7
      %v2082 = vrot.slane %v2050, 7
      %v2083 = vrot.slane %v2051, 7
      %v2084 = vrot.slane %v2052, 7
      %v2085 = vrot.slane %v2053, 7
      %v2086 = vsel %vm361, %v2084, %v2085
      %v2087 = vsel %vm361, %v2083, %v2084
      %v2088 = vsel %vm361, %v2082, %v2083
      %v2089 = vsel %vm361, %v2081, %v2082
      %v2090 = vsel %vm361, %v2080, %v2081
      %v2091 = vsel %vm361, %v2079, %v2080
      %v2092 = vsel %vm361, %v2078, %v2079
      %v2093 = vsel %vm361, %v2077, %v2078
      %v2094 = vsel %vm361, %v2076, %v2077
      %v2095 = vsel %vm361, %v2075, %v2076
      %v2096 = vsel %vm361, %v2074, %v2075
      %v2097 = vsel %vm361, %v2073, %v2074
      %v2098 = vsel %vm361, %v2072, %v2073
      %v2099 = vsel %vm361, %v2071, %v2072
      %v2100 = vsel %vm361, %v2070, %v2071
      %v2101 = vsel %vm361, %v2069, %v2070
      %v2102 = vsel %vm361, %v2068, %v2069
      %v2103 = vsel %vm361, %v2067, %v2068
      %v2104 = vsel %vm361, %v2066, %v2067
      %v2105 = vsel %vm361, %v2065, %v2066
      %v2106 = vsel %vm361, %v2064, %v2065
      %v2107 = vsel %vm361, %v2063, %v2064
      %v2108 = vsel %vm361, %v2062, %v2063
      %v2109 = vsel %vm361, %v2061, %v2062
      %v2110 = vsel %vm361, %v2060, %v2061
      %v2111 = vsel %vm361, %v2059, %v2060
      %v2112 = vsel %vm361, %v2058, %v2059
      %v2113 = vsel %vm361, %v2057, %v2058
      %v2114 = vsel %vm361, %v2056, %v2057
      %v2115 = vsel %vm361, %v2055, %v2056
      %v2116 = vsel %vm361, %v2054, %v2055
      %v2117 = vsel %vm361, %v2085, %v2054
      %v2118 = vmul.f32 %v2087, %v287
      %v2119 = vmul.f32 %v2086, %v287
      %v2120 = vmul.f32 %v2117, %v288
      %v2121 = vmul.f32 %v2116, %v289
      %v2122 = vmul.f32 %v2115, %v288
      %v2123 = vmul.f32 %v2114, %v289
      %v2124 = vmul.f32 %v2113, %v288
      %v2125 = vmul.f32 %v2112, %v289
      %v2126 = vmul.f32 %v2111, %v288
      %v2127 = vmul.f32 %v2110, %v289
      %v2128 = vmul.f32 %v2109, %v288
      %v2129 = vmul.f32 %v2108, %v289
      %v2130 = vmul.f32 %v2107, %v288
      %v2131 = vmul.f32 %v2106, %v289
      %v2132 = vmul.f32 %v2105, %v288
      %v2133 = vmul.f32 %v2104, %v289
      %v2134 = vmul.f32 %v2103, %v288
      %v2135 = vmul.f32 %v2102, %v289
      %v2136 = vmul.f32 %v2101, %v288
      %v2137 = vmul.f32 %v2100, %v289
      %v2138 = vmul.f32 %v2099, %v288
      %v2139 = vmul.f32 %v2098, %v289
      %v2140 = vmul.f32 %v2097, %v288
      %v2141 = vmul.f32 %v2096, %v289
      %v2142 = vmul.f32 %v2095, %v288
      %v2143 = vmul.f32 %v2094, %v289
      %v2144 = vmul.f32 %v2093, %v288
      %v2145 = vmul.f32 %v2092, %v289
      %v2146 = vmul.f32 %v2091, %v288
      %v2147 = vmul.f32 %v2090, %v289
      %v2148 = vmul.f32 %v2089, %v288
      %v2149 = vmul.f32 %v2088, %v289
      %v2150 = vpack.c.bf16 %v2119, %v2118
      %v2151 = vpack.c.bf16 %v2121, %v2120
      %v2152 = vpack.c.bf16 %v2123, %v2122
      %v2153 = vpack.c.bf16 %v2125, %v2124
      %v2154 = vpack.c.bf16 %v2127, %v2126
      %v2155 = vpack.c.bf16 %v2129, %v2128
      %v2156 = vpack.c.bf16 %v2131, %v2130
      %v2157 = vpack.c.bf16 %v2133, %v2132
      %v2158 = vpack.c.bf16 %v2135, %v2134
      %v2159 = vpack.c.bf16 %v2137, %v2136
      %v2160 = vpack.c.bf16 %v2139, %v2138
      %v2161 = vpack.c.bf16 %v2141, %v2140
      %v2162 = vpack.c.bf16 %v2143, %v2142
      %v2163 = vpack.c.bf16 %v2145, %v2144
      %v2164 = vpack.c.bf16 %v2147, %v2146
      %v2165 = vpack.c.bf16 %v2149, %v2148
      %v2166 = vld [vmem:[%s4] sm:$0xf]
      %v2167 = vld [vmem:[%s4 + $0x4] sm:$0xf]
      %v2168 = vld [vmem:[%s4 + $0x8] sm:$0xf]
      %v2169 = vld [vmem:[%s4 + $0xc] sm:$0xf]
      %v2170 = vld [vmem:[%s4 + $0x10] sm:$0xf]
      %v2171 = vld [vmem:[%s4 + $0x14] sm:$0xf]
      %v2172 = vld [vmem:[%s4 + $0x18] sm:$0xf]
      %v2173 = vld [vmem:[%s4 + $0x1c] sm:$0xf]
      %v2174 = vld [vmem:[%s4 + $0x20] sm:$0xf]
      %v2175 = vld [vmem:[%s4 + $0x24] sm:$0xf]
      %v2176 = vld [vmem:[%s4 + $0x28] sm:$0xf]
      %v2177 = vld [vmem:[%s4 + $0x2c] sm:$0xf]
      %v2178 = vld [vmem:[%s4 + $0x30] sm:$0xf]
      %v2179 = vld [vmem:[%s4 + $0x34] sm:$0xf]
      %v2180 = vld [vmem:[%s4 + $0x38] sm:$0xf]
      %v2181 = vld [vmem:[%s4 + $0x3c] sm:$0xf]
      %v2182 = vmul.f32 %v2052, %v287
      %v2183 = vmul.f32 %v2053, %v287
      %v2184 = vmul.f32 %v2022, %v290
      %v2185 = vmul.f32 %v2023, %v290
      %v2186 = vmul.f32 %v2024, %v290
      %v2187 = vmul.f32 %v2025, %v290
      %v2188 = vmul.f32 %v2026, %v290
      %v2189 = vmul.f32 %v2027, %v290
      %v2190 = vmul.f32 %v2028, %v290
      %v2191 = vmul.f32 %v2029, %v290
      %v2192 = vmul.f32 %v2030, %v290
      %v2193 = vmul.f32 %v2031, %v290
      %v2194 = vmul.f32 %v2032, %v290
      %v2195 = vmul.f32 %v2033, %v290
      %v2196 = vmul.f32 %v2034, %v290
      %v2197 = vmul.f32 %v2035, %v290
      %v2198 = vmul.f32 %v2036, %v290
      %v2199 = vmul.f32 %v2037, %v290
      %v2200 = vmul.f32 %v2038, %v290
      %v2201 = vmul.f32 %v2039, %v290
      %v2202 = vmul.f32 %v2040, %v290
      %v2203 = vmul.f32 %v2041, %v290
      %v2204 = vmul.f32 %v2042, %v290
      %v2205 = vmul.f32 %v2043, %v290
      %v2206 = vmul.f32 %v2044, %v290
      %v2207 = vmul.f32 %v2045, %v290
      %v2208 = vmul.f32 %v2046, %v290
      %v2209 = vmul.f32 %v2047, %v290
      %v2210 = vmul.f32 %v2048, %v290
      %v2211 = vmul.f32 %v2049, %v290
      %v2212 = vmul.f32 %v2050, %v290
      %v2213 = vmul.f32 %v2051, %v290
      %v2214 = vpack.c.bf16 %v2183, %v2182
      %v2215 = vpack.c.bf16 %v2185, %v2184
      %v2216 = vpack.c.bf16 %v2187, %v2186
      %v2217 = vpack.c.bf16 %v2189, %v2188
      %v2218 = vpack.c.bf16 %v2191, %v2190
      %v2219 = vpack.c.bf16 %v2193, %v2192
      %v2220 = vpack.c.bf16 %v2195, %v2194
      %v2221 = vpack.c.bf16 %v2197, %v2196
      %v2222 = vpack.c.bf16 %v2199, %v2198
      %v2223 = vpack.c.bf16 %v2201, %v2200
      %v2224 = vpack.c.bf16 %v2203, %v2202
      %v2225 = vpack.c.bf16 %v2205, %v2204
      %v2226 = vpack.c.bf16 %v2207, %v2206
      %v2227 = vpack.c.bf16 %v2209, %v2208
      %v2228 = vpack.c.bf16 %v2211, %v2210
      %v2229 = vpack.c.bf16 %v2213, %v2212
      %s2230 = scalar_lea.vmem %s4, 64
      %v2231 = vld [vmem:[%s2230] sm:$0xf]
      %v2232 = vld [vmem:[%s2230 + $0x4] sm:$0xf]
      %v2233 = vld [vmem:[%s2230 + $0x8] sm:$0xf]
      %v2234 = vld [vmem:[%s2230 + $0xc] sm:$0xf]
      %v2235 = vld [vmem:[%s2230 + $0x10] sm:$0xf]
      %v2236 = vld [vmem:[%s2230 + $0x14] sm:$0xf]
      %v2237 = vld [vmem:[%s2230 + $0x18] sm:$0xf]
      %v2238 = vld [vmem:[%s2230 + $0x1c] sm:$0xf]
      %v2239 = vld [vmem:[%s2230 + $0x20] sm:$0xf]
      %v2240 = vld [vmem:[%s2230 + $0x24] sm:$0xf]
      %v2241 = vld [vmem:[%s2230 + $0x28] sm:$0xf]
      %v2242 = vld [vmem:[%s2230 + $0x2c] sm:$0xf]
      %v2243 = vld [vmem:[%s2230 + $0x30] sm:$0xf]
      %v2244 = vld [vmem:[%s2230 + $0x34] sm:$0xf]
      %v2245 = vld [vmem:[%s2230 + $0x38] sm:$0xf]
      %v2246 = vld [vmem:[%s2230 + $0x3c] sm:$0xf]
      %v2263 = vunpack.c.l.b16 %v2231
      %v2264 = vunpack.c.l.b16 %v2232
      %v2265 = vunpack.c.l.b16 %v2233
      %v2266 = vunpack.c.l.b16 %v2234
      %v2267 = vunpack.c.l.b16 %v2235
      %v2268 = vunpack.c.l.b16 %v2236
      %v2269 = vunpack.c.l.b16 %v2237
      %v2270 = vunpack.c.l.b16 %v2238
      %v2271 = vunpack.c.l.b16 %v2239
      %v2272 = vunpack.c.l.b16 %v2240
      %v2273 = vunpack.c.l.b16 %v2241
      %v2274 = vunpack.c.l.b16 %v2242
      %v2275 = vunpack.c.l.b16 %v2243
      %v2276 = vunpack.c.l.b16 %v2244
      %v2277 = vunpack.c.l.b16 %v2245
      %v2278 = vunpack.c.l.b16 %v2246
      %v2279 = vpack.c.b16 %v2264, %v2263
      %v2280 = vpack.c.b16 %v2266, %v2265
      %v2281 = vpack.c.b16 %v2268, %v2267
      %v2282 = vpack.c.b16 %v2270, %v2269
      %v2283 = vpack.c.b16 %v2272, %v2271
      %v2284 = vpack.c.b16 %v2274, %v2273
      %v2285 = vpack.c.b16 %v2276, %v2275
      %v2286 = vpack.c.b16 %v2278, %v2277
      %2295 = vmatpush.bf16.msra.mxu0 %v2286
      %2296 = vmatpush.bf16.msra.mxu0 %v2285
      %2297 = vmatpush.bf16.msra.mxu0 %v2284
      %2298 = vmatpush.bf16.msra.mxu0 %v2283
      %2299 = vmatpush.bf16.msra.mxu0 %v2282
      %2300 = vmatpush.bf16.msra.mxu0 %v2281
      %2301 = vmatpush.bf16.msra.mxu0 %v2280
      %2302 = vmatpush.bf16.msra.mxu0 %v2279
      %2303 = vmatmul.bf16.gmra.mxu0 %v2214
      %v2304 = vpop.f32.mrf.mxu0
      %v2305 = vadd.f32 0.0, %v2304
      %v2306 = vpop.f32.mrf.mxu0
      %v2307 = vadd.f32 0.0, %v2306
      %2308 = vmatmul.bf16.gmra.mxu0 %v2215
      %v2309 = vpop.f32.mrf.mxu0
      %v2310 = vadd.f32 0.0, %v2309
      %v2311 = vpop.f32.mrf.mxu0
      %v2312 = vadd.f32 0.0, %v2311
      %2313 = vmatmul.bf16.gmra.mxu0 %v2216
      %v2314 = vpop.f32.mrf.mxu0
      %v2315 = vadd.f32 0.0, %v2314
      %v2316 = vpop.f32.mrf.mxu0
      %v2317 = vadd.f32 0.0, %v2316
      %2318 = vmatmul.bf16.gmra.mxu0 %v2217
      %v2319 = vpop.f32.mrf.mxu0
      %v2320 = vadd.f32 0.0, %v2319
      %v2321 = vpop.f32.mrf.mxu0
      %v2322 = vadd.f32 0.0, %v2321
      %2323 = vmatmul.bf16.gmra.mxu0 %v2218
      %v2324 = vpop.f32.mrf.mxu0
      %v2325 = vadd.f32 0.0, %v2324
      %v2326 = vpop.f32.mrf.mxu0
      %v2327 = vadd.f32 0.0, %v2326
      %2328 = vmatmul.bf16.gmra.mxu0 %v2219
      %v2329 = vpop.f32.mrf.mxu0
      %v2330 = vadd.f32 0.0, %v2329
      %v2331 = vpop.f32.mrf.mxu0
      %v2332 = vadd.f32 0.0, %v2331
      %2333 = vmatmul.bf16.gmra.mxu0 %v2220
      %v2334 = vpop.f32.mrf.mxu0
      %v2335 = vadd.f32 0.0, %v2334
      %v2336 = vpop.f32.mrf.mxu0
      %v2337 = vadd.f32 0.0, %v2336
      %2338 = vmatmul.bf16.gmra.mxu0 %v2221
      %v2339 = vpop.f32.mrf.mxu0
      %v2340 = vadd.f32 0.0, %v2339
      %v2341 = vpop.f32.mrf.mxu0
      %v2342 = vadd.f32 0.0, %v2341
      %2343 = vmatmul.bf16.gmra.mxu0 %v2222
      %v2344 = vpop.f32.mrf.mxu0
      %v2345 = vadd.f32 0.0, %v2344
      %v2346 = vpop.f32.mrf.mxu0
      %v2347 = vadd.f32 0.0, %v2346
      %2348 = vmatmul.bf16.gmra.mxu0 %v2223
      %v2349 = vpop.f32.mrf.mxu0
      %v2350 = vadd.f32 0.0, %v2349
      %v2351 = vpop.f32.mrf.mxu0
      %v2352 = vadd.f32 0.0, %v2351
      %2353 = vmatmul.bf16.gmra.mxu0 %v2224
      %v2354 = vpop.f32.mrf.mxu0
      %v2355 = vadd.f32 0.0, %v2354
      %v2356 = vpop.f32.mrf.mxu0
      %v2357 = vadd.f32 0.0, %v2356
      %2358 = vmatmul.bf16.gmra.mxu0 %v2225
      %v2359 = vpop.f32.mrf.mxu0
      %v2360 = vadd.f32 0.0, %v2359
      %v2361 = vpop.f32.mrf.mxu0
      %v2362 = vadd.f32 0.0, %v2361
      %2363 = vmatmul.bf16.gmra.mxu0 %v2226
      %v2364 = vpop.f32.mrf.mxu0
      %v2365 = vadd.f32 0.0, %v2364
      %v2366 = vpop.f32.mrf.mxu0
      %v2367 = vadd.f32 0.0, %v2366
      %2368 = vmatmul.bf16.gmra.mxu0 %v2227
      %v2369 = vpop.f32.mrf.mxu0
      %v2370 = vadd.f32 0.0, %v2369
      %v2371 = vpop.f32.mrf.mxu0
      %v2372 = vadd.f32 0.0, %v2371
      %2373 = vmatmul.bf16.gmra.mxu0 %v2228
      %v2374 = vpop.f32.mrf.mxu0
      %v2375 = vadd.f32 0.0, %v2374
      %v2376 = vpop.f32.mrf.mxu0
      %v2377 = vadd.f32 0.0, %v2376
      %2378 = vmatmul.bf16.gmra.mxu0 %v2229
      %v2379 = vpop.f32.mrf.mxu0
      %v2380 = vadd.f32 0.0, %v2379
      %v2381 = vpop.f32.mrf.mxu0
      %v2382 = vadd.f32 0.0, %v2381
      %2383 = vdwg.mxu0
      %v2400 = vunpack.c.l.b16 %v2166
      %v2401 = vunpack.c.l.b16 %v2167
      %v2402 = vunpack.c.l.b16 %v2168
      %v2403 = vunpack.c.l.b16 %v2169
      %v2404 = vunpack.c.l.b16 %v2170
      %v2405 = vunpack.c.l.b16 %v2171
      %v2406 = vunpack.c.l.b16 %v2172
      %v2407 = vunpack.c.l.b16 %v2173
      %v2408 = vunpack.c.l.b16 %v2174
      %v2409 = vunpack.c.l.b16 %v2175
      %v2410 = vunpack.c.l.b16 %v2176
      %v2411 = vunpack.c.l.b16 %v2177
      %v2412 = vunpack.c.l.b16 %v2178
      %v2413 = vunpack.c.l.b16 %v2179
      %v2414 = vunpack.c.l.b16 %v2180
      %v2415 = vunpack.c.l.b16 %v2181
      %v2416 = vpack.c.b16 %v2401, %v2400
      %v2417 = vpack.c.b16 %v2403, %v2402
      %v2418 = vpack.c.b16 %v2405, %v2404
      %v2419 = vpack.c.b16 %v2407, %v2406
      %v2420 = vpack.c.b16 %v2409, %v2408
      %v2421 = vpack.c.b16 %v2411, %v2410
      %v2422 = vpack.c.b16 %v2413, %v2412
      %v2423 = vpack.c.b16 %v2415, %v2414
      %2432 = vmatpush.bf16.msra.mxu0 %v2423
      %2433 = vmatpush.bf16.msra.mxu0 %v2422
      %2434 = vmatpush.bf16.msra.mxu0 %v2421
      %2435 = vmatpush.bf16.msra.mxu0 %v2420
      %2436 = vmatpush.bf16.msra.mxu0 %v2419
      %2437 = vmatpush.bf16.msra.mxu0 %v2418
      %2438 = vmatpush.bf16.msra.mxu0 %v2417
      %2439 = vmatpush.bf16.msra.mxu0 %v2416
      %2440 = vmatmul.bf16.gmra.mxu0 %v2150
      %v2441 = vpop.f32.mrf.mxu0
      %v2442 = vadd.f32 %v2305, %v2441
      %v2443 = vpop.f32.mrf.mxu0
      %v2444 = vadd.f32 %v2307, %v2443
      %2445 = vmatmul.bf16.gmra.mxu0 %v2151
      %v2446 = vpop.f32.mrf.mxu0
      %v2447 = vadd.f32 %v2310, %v2446
      %v2448 = vpop.f32.mrf.mxu0
      %v2449 = vadd.f32 %v2312, %v2448
      %2450 = vmatmul.bf16.gmra.mxu0 %v2152
      %v2451 = vpop.f32.mrf.mxu0
      %v2452 = vadd.f32 %v2315, %v2451
      %v2453 = vpop.f32.mrf.mxu0
      %v2454 = vadd.f32 %v2317, %v2453
      %2455 = vmatmul.bf16.gmra.mxu0 %v2153
      %v2456 = vpop.f32.mrf.mxu0
      %v2457 = vadd.f32 %v2320, %v2456
      %v2458 = vpop.f32.mrf.mxu0
      %v2459 = vadd.f32 %v2322, %v2458
      %2460 = vmatmul.bf16.gmra.mxu0 %v2154
      %v2461 = vpop.f32.mrf.mxu0
      %v2462 = vadd.f32 %v2325, %v2461
      %v2463 = vpop.f32.mrf.mxu0
      %v2464 = vadd.f32 %v2327, %v2463
      %2465 = vmatmul.bf16.gmra.mxu0 %v2155
      %v2466 = vpop.f32.mrf.mxu0
      %v2467 = vadd.f32 %v2330, %v2466
      %v2468 = vpop.f32.mrf.mxu0
      %v2469 = vadd.f32 %v2332, %v2468
      %2470 = vmatmul.bf16.gmra.mxu0 %v2156
      %v2471 = vpop.f32.mrf.mxu0
      %v2472 = vadd.f32 %v2335, %v2471
      %v2473 = vpop.f32.mrf.mxu0
      %v2474 = vadd.f32 %v2337, %v2473
      %2475 = vmatmul.bf16.gmra.mxu0 %v2157
      %v2476 = vpop.f32.mrf.mxu0
      %v2477 = vadd.f32 %v2340, %v2476
      %v2478 = vpop.f32.mrf.mxu0
      %v2479 = vadd.f32 %v2342, %v2478
      %2480 = vmatmul.bf16.gmra.mxu0 %v2158
      %v2481 = vpop.f32.mrf.mxu0
      %v2482 = vadd.f32 %v2345, %v2481
      %v2483 = vpop.f32.mrf.mxu0
      %v2484 = vadd.f32 %v2347, %v2483
      %2485 = vmatmul.bf16.gmra.mxu0 %v2159
      %v2486 = vpop.f32.mrf.mxu0
      %v2487 = vadd.f32 %v2350, %v2486
      %v2488 = vpop.f32.mrf.mxu0
      %v2489 = vadd.f32 %v2352, %v2488
      %2490 = vmatmul.bf16.gmra.mxu0 %v2160
      %v2491 = vpop.f32.mrf.mxu0
      %v2492 = vadd.f32 %v2355, %v2491
      %v2493 = vpop.f32.mrf.mxu0
      %v2494 = vadd.f32 %v2357, %v2493
      %2495 = vmatmul.bf16.gmra.mxu0 %v2161
      %v2496 = vpop.f32.mrf.mxu0
      %v2497 = vadd.f32 %v2360, %v2496
      %v2498 = vpop.f32.mrf.mxu0
      %v2499 = vadd.f32 %v2362, %v2498
      %2500 = vmatmul.bf16.gmra.mxu0 %v2162
      %v2501 = vpop.f32.mrf.mxu0
      %v2502 = vadd.f32 %v2365, %v2501
      %v2503 = vpop.f32.mrf.mxu0
      %v2504 = vadd.f32 %v2367, %v2503
      %2505 = vmatmul.bf16.gmra.mxu0 %v2163
      %v2506 = vpop.f32.mrf.mxu0
      %v2507 = vadd.f32 %v2370, %v2506
      %v2508 = vpop.f32.mrf.mxu0
      %v2509 = vadd.f32 %v2372, %v2508
      %2510 = vmatmul.bf16.gmra.mxu0 %v2164
      %v2511 = vpop.f32.mrf.mxu0
      %v2512 = vadd.f32 %v2375, %v2511
      %v2513 = vpop.f32.mrf.mxu0
      %v2514 = vadd.f32 %v2377, %v2513
      %2515 = vmatmul.bf16.gmra.mxu0 %v2165
      %v2516 = vpop.f32.mrf.mxu0
      %v2517 = vadd.f32 %v2380, %v2516
      %v2518 = vpop.f32.mrf.mxu0
      %v2519 = vadd.f32 %v2382, %v2518
      %2520 = vdwg.mxu0
      %v2521 = vrot.slane %v2022, 1
      %v2522 = vrot.slane %v2023, 1
      %v2523 = vrot.slane %v2024, 1
      %v2524 = vrot.slane %v2025, 1
      %v2525 = vrot.slane %v2026, 1
      %v2526 = vrot.slane %v2027, 1
      %v2527 = vrot.slane %v2028, 1
      %v2528 = vrot.slane %v2029, 1
      %v2529 = vrot.slane %v2030, 1
      %v2530 = vrot.slane %v2031, 1
      %v2531 = vrot.slane %v2032, 1
      %v2532 = vrot.slane %v2033, 1
      %v2533 = vrot.slane %v2034, 1
      %v2534 = vrot.slane %v2035, 1
      %v2535 = vrot.slane %v2036, 1
      %v2536 = vrot.slane %v2037, 1
      %v2537 = vrot.slane %v2038, 1
      %v2538 = vrot.slane %v2039, 1
      %v2539 = vrot.slane %v2040, 1
      %v2540 = vrot.slane %v2041, 1
      %v2541 = vrot.slane %v2042, 1
      %v2542 = vrot.slane %v2043, 1
      %v2543 = vrot.slane %v2044, 1
      %v2544 = vrot.slane %v2045, 1
      %v2545 = vrot.slane %v2046, 1
      %v2546 = vrot.slane %v2047, 1
      %v2547 = vrot.slane %v2048, 1
      %v2548 = vrot.slane %v2049, 1
      %v2549 = vrot.slane %v2050, 1
      %v2550 = vrot.slane %v2051, 1
      %v2551 = vrot.slane %v2052, 1
      %v2552 = vrot.slane %v2053, 1
      %v2553 = vsel %vm807, %v2551, %v2552
      %v2554 = vsel %vm807, %v2550, %v2551
      %v2555 = vsel %vm807, %v2549, %v2550
      %v2556 = vsel %vm807, %v2548, %v2549
      %v2557 = vsel %vm807, %v2547, %v2548
      %v2558 = vsel %vm807, %v2546, %v2547
      %v2559 = vsel %vm807, %v2545, %v2546
      %v2560 = vsel %vm807, %v2544, %v2545
      %v2561 = vsel %vm807, %v2543, %v2544
      %v2562 = vsel %vm807, %v2542, %v2543
      %v2563 = vsel %vm807, %v2541, %v2542
      %v2564 = vsel %vm807, %v2540, %v2541
      %v2565 = vsel %vm807, %v2539, %v2540
      %v2566 = vsel %vm807, %v2538, %v2539
      %v2567 = vsel %vm807, %v2537, %v2538
      %v2568 = vsel %vm807, %v2536, %v2537
      %v2569 = vsel %vm807, %v2535, %v2536
      %v2570 = vsel %vm807, %v2534, %v2535
      %v2571 = vsel %vm807, %v2533, %v2534
      %v2572 = vsel %vm807, %v2532, %v2533
      %v2573 = vsel %vm807, %v2531, %v2532
      %v2574 = vsel %vm807, %v2530, %v2531
      %v2575 = vsel %vm807, %v2529, %v2530
      %v2576 = vsel %vm807, %v2528, %v2529
      %v2577 = vsel %vm807, %v2527, %v2528
      %v2578 = vsel %vm807, %v2526, %v2527
      %v2579 = vsel %vm807, %v2525, %v2526
      %v2580 = vsel %vm807, %v2524, %v2525
      %v2581 = vsel %vm807, %v2523, %v2524
      %v2582 = vsel %vm807, %v2522, %v2523
      %v2583 = vsel %vm807, %v2521, %v2522
      %v2584 = vsel %vm807, %v2552, %v2521
      %v2585 = vmul.f32 %v2553, %v287
      %v2586 = vmul.f32 %v2584, %v287
      %v2587 = vmul.f32 %v2583, %v295
      %v2588 = vmul.f32 %v2582, %v296
      %v2589 = vmul.f32 %v2581, %v295
      %v2590 = vmul.f32 %v2580, %v296
      %v2591 = vmul.f32 %v2579, %v295
      %v2592 = vmul.f32 %v2578, %v296
      %v2593 = vmul.f32 %v2577, %v295
      %v2594 = vmul.f32 %v2576, %v296
      %v2595 = vmul.f32 %v2575, %v295
      %v2596 = vmul.f32 %v2574, %v296
      %v2597 = vmul.f32 %v2573, %v295
      %v2598 = vmul.f32 %v2572, %v296
      %v2599 = vmul.f32 %v2571, %v295
      %v2600 = vmul.f32 %v2570, %v296
      %v2601 = vmul.f32 %v2569, %v295
      %v2602 = vmul.f32 %v2568, %v296
      %v2603 = vmul.f32 %v2567, %v295
      %v2604 = vmul.f32 %v2566, %v296
      %v2605 = vmul.f32 %v2565, %v295
      %v2606 = vmul.f32 %v2564, %v296
      %v2607 = vmul.f32 %v2563, %v295
      %v2608 = vmul.f32 %v2562, %v296
      %v2609 = vmul.f32 %v2561, %v295
      %v2610 = vmul.f32 %v2560, %v296
      %v2611 = vmul.f32 %v2559, %v295
      %v2612 = vmul.f32 %v2558, %v296
      %v2613 = vmul.f32 %v2557, %v295
      %v2614 = vmul.f32 %v2556, %v296
      %v2615 = vmul.f32 %v2555, %v295
      %v2616 = vmul.f32 %v2554, %v296
      %v2617 = vpack.c.bf16 %v2586, %v2585
      %v2618 = vpack.c.bf16 %v2588, %v2587
      %v2619 = vpack.c.bf16 %v2590, %v2589
      %v2620 = vpack.c.bf16 %v2592, %v2591
      %v2621 = vpack.c.bf16 %v2594, %v2593
      %v2622 = vpack.c.bf16 %v2596, %v2595
      %v2623 = vpack.c.bf16 %v2598, %v2597
      %v2624 = vpack.c.bf16 %v2600, %v2599
      %v2625 = vpack.c.bf16 %v2602, %v2601
      %v2626 = vpack.c.bf16 %v2604, %v2603
      %v2627 = vpack.c.bf16 %v2606, %v2605
      %v2628 = vpack.c.bf16 %v2608, %v2607
      %v2629 = vpack.c.bf16 %v2610, %v2609
      %v2630 = vpack.c.bf16 %v2612, %v2611
      %v2631 = vpack.c.bf16 %v2614, %v2613
      %v2632 = vpack.c.bf16 %v2616, %v2615
      %s2633 = scalar_lea.vmem %s4, 128
      %v2634 = vld [vmem:[%s2633] sm:$0xf]
      %v2635 = vld [vmem:[%s2633 + $0x4] sm:$0xf]
      %v2636 = vld [vmem:[%s2633 + $0x8] sm:$0xf]
      %v2637 = vld [vmem:[%s2633 + $0xc] sm:$0xf]
      %v2638 = vld [vmem:[%s2633 + $0x10] sm:$0xf]
      %v2639 = vld [vmem:[%s2633 + $0x14] sm:$0xf]
      %v2640 = vld [vmem:[%s2633 + $0x18] sm:$0xf]
      %v2641 = vld [vmem:[%s2633 + $0x1c] sm:$0xf]
      %v2642 = vld [vmem:[%s2633 + $0x20] sm:$0xf]
      %v2643 = vld [vmem:[%s2633 + $0x24] sm:$0xf]
      %v2644 = vld [vmem:[%s2633 + $0x28] sm:$0xf]
      %v2645 = vld [vmem:[%s2633 + $0x2c] sm:$0xf]
      %v2646 = vld [vmem:[%s2633 + $0x30] sm:$0xf]
      %v2647 = vld [vmem:[%s2633 + $0x34] sm:$0xf]
      %v2648 = vld [vmem:[%s2633 + $0x38] sm:$0xf]
      %v2649 = vld [vmem:[%s2633 + $0x3c] sm:$0xf]
      %v2666 = vunpack.c.l.b16 %v2634
      %v2667 = vunpack.c.l.b16 %v2635
      %v2668 = vunpack.c.l.b16 %v2636
      %v2669 = vunpack.c.l.b16 %v2637
      %v2670 = vunpack.c.l.b16 %v2638
      %v2671 = vunpack.c.l.b16 %v2639
      %v2672 = vunpack.c.l.b16 %v2640
      %v2673 = vunpack.c.l.b16 %v2641
      %v2674 = vunpack.c.l.b16 %v2642
      %v2675 = vunpack.c.l.b16 %v2643
      %v2676 = vunpack.c.l.b16 %v2644
      %v2677 = vunpack.c.l.b16 %v2645
      %v2678 = vunpack.c.l.b16 %v2646
      %v2679 = vunpack.c.l.b16 %v2647
      %v2680 = vunpack.c.l.b16 %v2648
      %v2681 = vunpack.c.l.b16 %v2649
      %v2682 = vpack.c.b16 %v2667, %v2666
      %v2683 = vpack.c.b16 %v2669, %v2668
      %v2684 = vpack.c.b16 %v2671, %v2670
      %v2685 = vpack.c.b16 %v2673, %v2672
      %v2686 = vpack.c.b16 %v2675, %v2674
      %v2687 = vpack.c.b16 %v2677, %v2676
      %v2688 = vpack.c.b16 %v2679, %v2678
      %v2689 = vpack.c.b16 %v2681, %v2680
      %2698 = vmatpush.bf16.msra.mxu0 %v2689
      %2699 = vmatpush.bf16.msra.mxu0 %v2688
      %2700 = vmatpush.bf16.msra.mxu0 %v2687
      %2701 = vmatpush.bf16.msra.mxu0 %v2686
      %2702 = vmatpush.bf16.msra.mxu0 %v2685
      %2703 = vmatpush.bf16.msra.mxu0 %v2684
      %2704 = vmatpush.bf16.msra.mxu0 %v2683
      %2705 = vmatpush.bf16.msra.mxu0 %v2682
      %2706 = vmatmul.bf16.gmra.mxu0 %v2617
      %v2707 = vpop.f32.mrf.mxu0
      %v2708 = vadd.f32 0.0, %v2707
      %v2709 = vpop.f32.mrf.mxu0
      %v2710 = vadd.f32 0.0, %v2709
      %2711 = vmatmul.bf16.gmra.mxu0 %v2618
      %v2712 = vpop.f32.mrf.mxu0
      %v2713 = vadd.f32 0.0, %v2712
      %v2714 = vpop.f32.mrf.mxu0
      %v2715 = vadd.f32 0.0, %v2714
      %2716 = vmatmul.bf16.gmra.mxu0 %v2619
      %v2717 = vpop.f32.mrf.mxu0
      %v2718 = vadd.f32 0.0, %v2717
      %v2719 = vpop.f32.mrf.mxu0
      %v2720 = vadd.f32 0.0, %v2719
      %2721 = vmatmul.bf16.gmra.mxu0 %v2620
      %v2722 = vpop.f32.mrf.mxu0
      %v2723 = vadd.f32 0.0, %v2722
      %v2724 = vpop.f32.mrf.mxu0
      %v2725 = vadd.f32 0.0, %v2724
      %2726 = vmatmul.bf16.gmra.mxu0 %v2621
      %v2727 = vpop.f32.mrf.mxu0
      %v2728 = vadd.f32 0.0, %v2727
      %v2729 = vpop.f32.mrf.mxu0
      %v2730 = vadd.f32 0.0, %v2729
      %2731 = vmatmul.bf16.gmra.mxu0 %v2622
      %v2732 = vpop.f32.mrf.mxu0
      %v2733 = vadd.f32 0.0, %v2732
      %v2734 = vpop.f32.mrf.mxu0
      %v2735 = vadd.f32 0.0, %v2734
      %2736 = vmatmul.bf16.gmra.mxu0 %v2623
      %v2737 = vpop.f32.mrf.mxu0
      %v2738 = vadd.f32 0.0, %v2737
      %v2739 = vpop.f32.mrf.mxu0
      %v2740 = vadd.f32 0.0, %v2739
      %2741 = vmatmul.bf16.gmra.mxu0 %v2624
      %v2742 = vpop.f32.mrf.mxu0
      %v2743 = vadd.f32 0.0, %v2742
      %v2744 = vpop.f32.mrf.mxu0
      %v2745 = vadd.f32 0.0, %v2744
      %2746 = vmatmul.bf16.gmra.mxu0 %v2625
      %v2747 = vpop.f32.mrf.mxu0
      %v2748 = vadd.f32 0.0, %v2747
      %v2749 = vpop.f32.mrf.mxu0
      %v2750 = vadd.f32 0.0, %v2749
      %2751 = vmatmul.bf16.gmra.mxu0 %v2626
      %v2752 = vpop.f32.mrf.mxu0
      %v2753 = vadd.f32 0.0, %v2752
      %v2754 = vpop.f32.mrf.mxu0
      %v2755 = vadd.f32 0.0, %v2754
      %2756 = vmatmul.bf16.gmra.mxu0 %v2627
      %v2757 = vpop.f32.mrf.mxu0
      %v2758 = vadd.f32 0.0, %v2757
      %v2759 = vpop.f32.mrf.mxu0
      %v2760 = vadd.f32 0.0, %v2759
      %2761 = vmatmul.bf16.gmra.mxu0 %v2628
      %v2762 = vpop.f32.mrf.mxu0
      %v2763 = vadd.f32 0.0, %v2762
      %v2764 = vpop.f32.mrf.mxu0
      %v2765 = vadd.f32 0.0, %v2764
      %2766 = vmatmul.bf16.gmra.mxu0 %v2629
      %v2767 = vpop.f32.mrf.mxu0
      %v2768 = vadd.f32 0.0, %v2767
      %v2769 = vpop.f32.mrf.mxu0
      %v2770 = vadd.f32 0.0, %v2769
      %2771 = vmatmul.bf16.gmra.mxu0 %v2630
      %v2772 = vpop.f32.mrf.mxu0
      %v2773 = vadd.f32 0.0, %v2772
      %v2774 = vpop.f32.mrf.mxu0
      %v2775 = vadd.f32 0.0, %v2774
      %2776 = vmatmul.bf16.gmra.mxu0 %v2631
      %v2777 = vpop.f32.mrf.mxu0
      %v2778 = vadd.f32 0.0, %v2777
      %v2779 = vpop.f32.mrf.mxu0
      %v2780 = vadd.f32 0.0, %v2779
      %2781 = vmatmul.bf16.gmra.mxu0 %v2632
      %v2782 = vpop.f32.mrf.mxu0
      %v2783 = vadd.f32 0.0, %v2782
      %v2784 = vpop.f32.mrf.mxu0
      %v2785 = vadd.f32 0.0, %v2784
      %2786 = vdwg.mxu0
      %v2787 = vadd.f32 %v2442, %v2708
      %v2788 = vadd.f32 %v2444, %v2710
      %v2789 = vadd.f32 %v2447, %v2713
      %v2790 = vadd.f32 %v2449, %v2715
      %v2791 = vadd.f32 %v2452, %v2718
      %v2792 = vadd.f32 %v2454, %v2720
      %v2793 = vadd.f32 %v2457, %v2723
      %v2794 = vadd.f32 %v2459, %v2725
      %v2795 = vadd.f32 %v2462, %v2728
      %v2796 = vadd.f32 %v2464, %v2730
      %v2797 = vadd.f32 %v2467, %v2733
      %v2798 = vadd.f32 %v2469, %v2735
      %v2799 = vadd.f32 %v2472, %v2738
      %v2800 = vadd.f32 %v2474, %v2740
      %v2801 = vadd.f32 %v2477, %v2743
      %v2802 = vadd.f32 %v2479, %v2745
      %v2803 = vadd.f32 %v2482, %v2748
      %v2804 = vadd.f32 %v2484, %v2750
      %v2805 = vadd.f32 %v2487, %v2753
      %v2806 = vadd.f32 %v2489, %v2755
      %v2807 = vadd.f32 %v2492, %v2758
      %v2808 = vadd.f32 %v2494, %v2760
      %v2809 = vadd.f32 %v2497, %v2763
      %v2810 = vadd.f32 %v2499, %v2765
      %v2811 = vadd.f32 %v2502, %v2768
      %v2812 = vadd.f32 %v2504, %v2770
      %v2813 = vadd.f32 %v2507, %v2773
      %v2814 = vadd.f32 %v2509, %v2775
      %v2815 = vadd.f32 %v2512, %v2778
      %v2816 = vadd.f32 %v2514, %v2780
      %v2817 = vadd.f32 %v2517, %v2783
      %v2818 = vadd.f32 %v2519, %v2785
      %v2819 = vmul.f32 %v2087, %v288
      %v2820 = vmul.f32 %v2086, %v289
      %v2821 = vpack.c.bf16 %v2820, %v2819
      %s2822 = scalar_lea.vmem %s4, 192
      %v2823 = vld [vmem:[%s2822] sm:$0xf]
      %v2824 = vld [vmem:[%s2822 + $0x4] sm:$0xf]
      %v2825 = vld [vmem:[%s2822 + $0x8] sm:$0xf]
      %v2826 = vld [vmem:[%s2822 + $0xc] sm:$0xf]
      %v2827 = vld [vmem:[%s2822 + $0x10] sm:$0xf]
      %v2828 = vld [vmem:[%s2822 + $0x14] sm:$0xf]
      %v2829 = vld [vmem:[%s2822 + $0x18] sm:$0xf]
      %v2830 = vld [vmem:[%s2822 + $0x1c] sm:$0xf]
      %v2831 = vld [vmem:[%s2822 + $0x20] sm:$0xf]
      %v2832 = vld [vmem:[%s2822 + $0x24] sm:$0xf]
      %v2833 = vld [vmem:[%s2822 + $0x28] sm:$0xf]
      %v2834 = vld [vmem:[%s2822 + $0x2c] sm:$0xf]
      %v2835 = vld [vmem:[%s2822 + $0x30] sm:$0xf]
      %v2836 = vld [vmem:[%s2822 + $0x34] sm:$0xf]
      %v2837 = vld [vmem:[%s2822 + $0x38] sm:$0xf]
      %v2838 = vld [vmem:[%s2822 + $0x3c] sm:$0xf]
      %v2855 = vunpack.c.l.b16 %v2823
      %v2856 = vunpack.c.l.b16 %v2824
      %v2857 = vunpack.c.l.b16 %v2825
      %v2858 = vunpack.c.l.b16 %v2826
      %v2859 = vunpack.c.l.b16 %v2827
      %v2860 = vunpack.c.l.b16 %v2828
      %v2861 = vunpack.c.l.b16 %v2829
      %v2862 = vunpack.c.l.b16 %v2830
      %v2863 = vunpack.c.l.b16 %v2831
      %v2864 = vunpack.c.l.b16 %v2832
      %v2865 = vunpack.c.l.b16 %v2833
      %v2866 = vunpack.c.l.b16 %v2834
      %v2867 = vunpack.c.l.b16 %v2835
      %v2868 = vunpack.c.l.b16 %v2836
      %v2869 = vunpack.c.l.b16 %v2837
      %v2870 = vunpack.c.l.b16 %v2838
      %v2871 = vpack.c.b16 %v2856, %v2855
      %v2872 = vpack.c.b16 %v2858, %v2857
      %v2873 = vpack.c.b16 %v2860, %v2859
      %v2874 = vpack.c.b16 %v2862, %v2861
      %v2875 = vpack.c.b16 %v2864, %v2863
      %v2876 = vpack.c.b16 %v2866, %v2865
      %v2877 = vpack.c.b16 %v2868, %v2867
      %v2878 = vpack.c.b16 %v2870, %v2869
      %2887 = vmatpush.bf16.msra.mxu0 %v2878
      %2888 = vmatpush.bf16.msra.mxu0 %v2877
      %2889 = vmatpush.bf16.msra.mxu0 %v2876
      %2890 = vmatpush.bf16.msra.mxu0 %v2875
      %2891 = vmatpush.bf16.msra.mxu0 %v2874
      %2892 = vmatpush.bf16.msra.mxu0 %v2873
      %2893 = vmatpush.bf16.msra.mxu0 %v2872
      %2894 = vmatpush.bf16.msra.mxu0 %v2871
      %2895 = vmatmul.bf16.gmra.mxu0 %v2151
      %v2896 = vpop.f32.mrf.mxu0
      %v2897 = vadd.f32 0.0, %v2896
      %v2898 = vpop.f32.mrf.mxu0
      %v2899 = vadd.f32 0.0, %v2898
      %2900 = vmatmul.bf16.gmra.mxu0 %v2152
      %v2901 = vpop.f32.mrf.mxu0
      %v2902 = vadd.f32 0.0, %v2901
      %v2903 = vpop.f32.mrf.mxu0
      %v2904 = vadd.f32 0.0, %v2903
      %2905 = vmatmul.bf16.gmra.mxu0 %v2153
      %v2906 = vpop.f32.mrf.mxu0
      %v2907 = vadd.f32 0.0, %v2906
      %v2908 = vpop.f32.mrf.mxu0
      %v2909 = vadd.f32 0.0, %v2908
      %2910 = vmatmul.bf16.gmra.mxu0 %v2154
      %v2911 = vpop.f32.mrf.mxu0
      %v2912 = vadd.f32 0.0, %v2911
      %v2913 = vpop.f32.mrf.mxu0
      %v2914 = vadd.f32 0.0, %v2913
      %2915 = vmatmul.bf16.gmra.mxu0 %v2155
      %v2916 = vpop.f32.mrf.mxu0
      %v2917 = vadd.f32 0.0, %v2916
      %v2918 = vpop.f32.mrf.mxu0
      %v2919 = vadd.f32 0.0, %v2918
      %2920 = vmatmul.bf16.gmra.mxu0 %v2156
      %v2921 = vpop.f32.mrf.mxu0
      %v2922 = vadd.f32 0.0, %v2921
      %v2923 = vpop.f32.mrf.mxu0
      %v2924 = vadd.f32 0.0, %v2923
      %2925 = vmatmul.bf16.gmra.mxu0 %v2157
      %v2926 = vpop.f32.mrf.mxu0
      %v2927 = vadd.f32 0.0, %v2926
      %v2928 = vpop.f32.mrf.mxu0
      %v2929 = vadd.f32 0.0, %v2928
      %2930 = vmatmul.bf16.gmra.mxu0 %v2158
      %v2931 = vpop.f32.mrf.mxu0
      %v2932 = vadd.f32 0.0, %v2931
      %v2933 = vpop.f32.mrf.mxu0
      %v2934 = vadd.f32 0.0, %v2933
      %2935 = vmatmul.bf16.gmra.mxu0 %v2159
      %v2936 = vpop.f32.mrf.mxu0
      %v2937 = vadd.f32 0.0, %v2936
      %v2938 = vpop.f32.mrf.mxu0
      %v2939 = vadd.f32 0.0, %v2938
      %2940 = vmatmul.bf16.gmra.mxu0 %v2160
      %v2941 = vpop.f32.mrf.mxu0
      %v2942 = vadd.f32 0.0, %v2941
      %v2943 = vpop.f32.mrf.mxu0
      %v2944 = vadd.f32 0.0, %v2943
      %2945 = vmatmul.bf16.gmra.mxu0 %v2161
      %v2946 = vpop.f32.mrf.mxu0
      %v2947 = vadd.f32 0.0, %v2946
      %v2948 = vpop.f32.mrf.mxu0
      %v2949 = vadd.f32 0.0, %v2948
      %2950 = vmatmul.bf16.gmra.mxu0 %v2162
      %v2951 = vpop.f32.mrf.mxu0
      %v2952 = vadd.f32 0.0, %v2951
      %v2953 = vpop.f32.mrf.mxu0
      %v2954 = vadd.f32 0.0, %v2953
      %2955 = vmatmul.bf16.gmra.mxu0 %v2163
      %v2956 = vpop.f32.mrf.mxu0
      %v2957 = vadd.f32 0.0, %v2956
      %v2958 = vpop.f32.mrf.mxu0
      %v2959 = vadd.f32 0.0, %v2958
      %2960 = vmatmul.bf16.gmra.mxu0 %v2164
      %v2961 = vpop.f32.mrf.mxu0
      %v2962 = vadd.f32 0.0, %v2961
      %v2963 = vpop.f32.mrf.mxu0
      %v2964 = vadd.f32 0.0, %v2963
      %2965 = vmatmul.bf16.gmra.mxu0 %v2165
      %v2966 = vpop.f32.mrf.mxu0
      %v2967 = vadd.f32 0.0, %v2966
      %v2968 = vpop.f32.mrf.mxu0
      %v2969 = vadd.f32 0.0, %v2968
      %2970 = vmatmul.bf16.gmra.mxu0 %v2821
      %v2971 = vpop.f32.mrf.mxu0
      %v2972 = vadd.f32 0.0, %v2971
      %v2973 = vpop.f32.mrf.mxu0
      %v2974 = vadd.f32 0.0, %v2973
      %2975 = vdwg.mxu0
      %v2976 = vadd.f32 %v2787, %v2897
      %v2977 = vadd.f32 %v2788, %v2899
      %v2978 = vadd.f32 %v2789, %v2902
      %v2979 = vadd.f32 %v2790, %v2904
      %v2980 = vadd.f32 %v2791, %v2907
      %v2981 = vadd.f32 %v2792, %v2909
      %v2982 = vadd.f32 %v2793, %v2912
      %v2983 = vadd.f32 %v2794, %v2914
      %v2984 = vadd.f32 %v2795, %v2917
      %v2985 = vadd.f32 %v2796, %v2919
      %v2986 = vadd.f32 %v2797, %v2922
      %v2987 = vadd.f32 %v2798, %v2924
      %v2988 = vadd.f32 %v2799, %v2927
      %v2989 = vadd.f32 %v2800, %v2929
      %v2990 = vadd.f32 %v2801, %v2932
      %v2991 = vadd.f32 %v2802, %v2934
      %v2992 = vadd.f32 %v2803, %v2937
      %v2993 = vadd.f32 %v2804, %v2939
      %v2994 = vadd.f32 %v2805, %v2942
      %v2995 = vadd.f32 %v2806, %v2944
      %v2996 = vadd.f32 %v2807, %v2947
      %v2997 = vadd.f32 %v2808, %v2949
      %v2998 = vadd.f32 %v2809, %v2952
      %v2999 = vadd.f32 %v2810, %v2954
      %v3000 = vadd.f32 %v2811, %v2957
      %v3001 = vadd.f32 %v2812, %v2959
      %v3002 = vadd.f32 %v2813, %v2962
      %v3003 = vadd.f32 %v2814, %v2964
      %v3004 = vadd.f32 %v2815, %v2967
      %v3005 = vadd.f32 %v2816, %v2969
      %v3006 = vadd.f32 %v2817, %v2972
      %v3007 = vadd.f32 %v2818, %v2974
      %v3008 = vpack.c.bf16 %v2023, %v2022
      %v3009 = vpack.c.bf16 %v2025, %v2024
      %v3010 = vpack.c.bf16 %v2027, %v2026
      %v3011 = vpack.c.bf16 %v2029, %v2028
      %v3012 = vpack.c.bf16 %v2031, %v2030
      %v3013 = vpack.c.bf16 %v2033, %v2032
      %v3014 = vpack.c.bf16 %v2035, %v2034
      %v3015 = vpack.c.bf16 %v2037, %v2036
      %v3016 = vpack.c.bf16 %v2039, %v2038
      %v3017 = vpack.c.bf16 %v2041, %v2040
      %v3018 = vpack.c.bf16 %v2043, %v2042
      %v3019 = vpack.c.bf16 %v2045, %v2044
      %v3020 = vpack.c.bf16 %v2047, %v2046
      %v3021 = vpack.c.bf16 %v2049, %v2048
      %v3022 = vpack.c.bf16 %v2051, %v2050
      %v3023 = vpack.c.bf16 %v2053, %v2052
      %s3024 = scalar_lea.vmem %s4, 256
      %v3025 = vld [vmem:[%s3024] sm:$0xf]
      %v3026 = vld [vmem:[%s3024 + $0x4] sm:$0xf]
      %v3027 = vld [vmem:[%s3024 + $0x8] sm:$0xf]
      %v3028 = vld [vmem:[%s3024 + $0xc] sm:$0xf]
      %v3029 = vld [vmem:[%s3024 + $0x10] sm:$0xf]
      %v3030 = vld [vmem:[%s3024 + $0x14] sm:$0xf]
      %v3031 = vld [vmem:[%s3024 + $0x18] sm:$0xf]
      %v3032 = vld [vmem:[%s3024 + $0x1c] sm:$0xf]
      %v3033 = vld [vmem:[%s3024 + $0x20] sm:$0xf]
      %v3034 = vld [vmem:[%s3024 + $0x24] sm:$0xf]
      %v3035 = vld [vmem:[%s3024 + $0x28] sm:$0xf]
      %v3036 = vld [vmem:[%s3024 + $0x2c] sm:$0xf]
      %v3037 = vld [vmem:[%s3024 + $0x30] sm:$0xf]
      %v3038 = vld [vmem:[%s3024 + $0x34] sm:$0xf]
      %v3039 = vld [vmem:[%s3024 + $0x38] sm:$0xf]
      %v3040 = vld [vmem:[%s3024 + $0x3c] sm:$0xf]
      %v3057 = vunpack.c.l.b16 %v3025
      %v3058 = vunpack.c.l.b16 %v3026
      %v3059 = vunpack.c.l.b16 %v3027
      %v3060 = vunpack.c.l.b16 %v3028
      %v3061 = vunpack.c.l.b16 %v3029
      %v3062 = vunpack.c.l.b16 %v3030
      %v3063 = vunpack.c.l.b16 %v3031
      %v3064 = vunpack.c.l.b16 %v3032
      %v3065 = vunpack.c.l.b16 %v3033
      %v3066 = vunpack.c.l.b16 %v3034
      %v3067 = vunpack.c.l.b16 %v3035
      %v3068 = vunpack.c.l.b16 %v3036
      %v3069 = vunpack.c.l.b16 %v3037
      %v3070 = vunpack.c.l.b16 %v3038
      %v3071 = vunpack.c.l.b16 %v3039
      %v3072 = vunpack.c.l.b16 %v3040
      %v3073 = vpack.c.b16 %v3058, %v3057
      %v3074 = vpack.c.b16 %v3060, %v3059
      %v3075 = vpack.c.b16 %v3062, %v3061
      %v3076 = vpack.c.b16 %v3064, %v3063
      %v3077 = vpack.c.b16 %v3066, %v3065
      %v3078 = vpack.c.b16 %v3068, %v3067
      %v3079 = vpack.c.b16 %v3070, %v3069
      %v3080 = vpack.c.b16 %v3072, %v3071
      %3089 = vmatpush.bf16.msra.mxu0 %v3080
      %3090 = vmatpush.bf16.msra.mxu0 %v3079
      %3091 = vmatpush.bf16.msra.mxu0 %v3078
      %3092 = vmatpush.bf16.msra.mxu0 %v3077
      %3093 = vmatpush.bf16.msra.mxu0 %v3076
      %3094 = vmatpush.bf16.msra.mxu0 %v3075
      %3095 = vmatpush.bf16.msra.mxu0 %v3074
      %3096 = vmatpush.bf16.msra.mxu0 %v3073
      %3097 = vmatmul.bf16.gmra.mxu0 %v3008
      %v3098 = vpop.f32.mrf.mxu0
      %v3099 = vadd.f32 0.0, %v3098
      %v3100 = vpop.f32.mrf.mxu0
      %v3101 = vadd.f32 0.0, %v3100
      %3102 = vmatmul.bf16.gmra.mxu0 %v3009
      %v3103 = vpop.f32.mrf.mxu0
      %v3104 = vadd.f32 0.0, %v3103
      %v3105 = vpop.f32.mrf.mxu0
      %v3106 = vadd.f32 0.0, %v3105
      %3107 = vmatmul.bf16.gmra.mxu0 %v3010
      %v3108 = vpop.f32.mrf.mxu0
      %v3109 = vadd.f32 0.0, %v3108
      %v3110 = vpop.f32.mrf.mxu0
      %v3111 = vadd.f32 0.0, %v3110
      %3112 = vmatmul.bf16.gmra.mxu0 %v3011
      %v3113 = vpop.f32.mrf.mxu0
      %v3114 = vadd.f32 0.0, %v3113
      %v3115 = vpop.f32.mrf.mxu0
      %v3116 = vadd.f32 0.0, %v3115
      %3117 = vmatmul.bf16.gmra.mxu0 %v3012
      %v3118 = vpop.f32.mrf.mxu0
      %v3119 = vadd.f32 0.0, %v3118
      %v3120 = vpop.f32.mrf.mxu0
      %v3121 = vadd.f32 0.0, %v3120
      %3122 = vmatmul.bf16.gmra.mxu0 %v3013
      %v3123 = vpop.f32.mrf.mxu0
      %v3124 = vadd.f32 0.0, %v3123
      %v3125 = vpop.f32.mrf.mxu0
      %v3126 = vadd.f32 0.0, %v3125
      %3127 = vmatmul.bf16.gmra.mxu0 %v3014
      %v3128 = vpop.f32.mrf.mxu0
      %v3129 = vadd.f32 0.0, %v3128
      %v3130 = vpop.f32.mrf.mxu0
      %v3131 = vadd.f32 0.0, %v3130
      %3132 = vmatmul.bf16.gmra.mxu0 %v3015
      %v3133 = vpop.f32.mrf.mxu0
      %v3134 = vadd.f32 0.0, %v3133
      %v3135 = vpop.f32.mrf.mxu0
      %v3136 = vadd.f32 0.0, %v3135
      %3137 = vmatmul.bf16.gmra.mxu0 %v3016
      %v3138 = vpop.f32.mrf.mxu0
      %v3139 = vadd.f32 0.0, %v3138
      %v3140 = vpop.f32.mrf.mxu0
      %v3141 = vadd.f32 0.0, %v3140
      %3142 = vmatmul.bf16.gmra.mxu0 %v3017
      %v3143 = vpop.f32.mrf.mxu0
      %v3144 = vadd.f32 0.0, %v3143
      %v3145 = vpop.f32.mrf.mxu0
      %v3146 = vadd.f32 0.0, %v3145
      %3147 = vmatmul.bf16.gmra.mxu0 %v3018
      %v3148 = vpop.f32.mrf.mxu0
      %v3149 = vadd.f32 0.0, %v3148
      %v3150 = vpop.f32.mrf.mxu0
      %v3151 = vadd.f32 0.0, %v3150
      %3152 = vmatmul.bf16.gmra.mxu0 %v3019
      %v3153 = vpop.f32.mrf.mxu0
      %v3154 = vadd.f32 0.0, %v3153
      %v3155 = vpop.f32.mrf.mxu0
      %v3156 = vadd.f32 0.0, %v3155
      %3157 = vmatmul.bf16.gmra.mxu0 %v3020
      %v3158 = vpop.f32.mrf.mxu0
      %v3159 = vadd.f32 0.0, %v3158
      %v3160 = vpop.f32.mrf.mxu0
      %v3161 = vadd.f32 0.0, %v3160
      %3162 = vmatmul.bf16.gmra.mxu0 %v3021
      %v3163 = vpop.f32.mrf.mxu0
      %v3164 = vadd.f32 0.0, %v3163
      %v3165 = vpop.f32.mrf.mxu0
      %v3166 = vadd.f32 0.0, %v3165
      %3167 = vmatmul.bf16.gmra.mxu0 %v3022
      %v3168 = vpop.f32.mrf.mxu0
      %v3169 = vadd.f32 0.0, %v3168
      %v3170 = vpop.f32.mrf.mxu0
      %v3171 = vadd.f32 0.0, %v3170
      %3172 = vmatmul.bf16.gmra.mxu0 %v3023
      %v3173 = vpop.f32.mrf.mxu0
      %v3174 = vadd.f32 0.0, %v3173
      %v3175 = vpop.f32.mrf.mxu0
      %v3176 = vadd.f32 0.0, %v3175
      %3177 = vdwg.mxu0
      %v3178 = vadd.f32 %v2976, %v3099
      %v3179 = vadd.f32 %v2977, %v3101
      %v3180 = vadd.f32 %v2978, %v3104
      %v3181 = vadd.f32 %v2979, %v3106
      %v3182 = vadd.f32 %v2980, %v3109
      %v3183 = vadd.f32 %v2981, %v3111
      %v3184 = vadd.f32 %v2982, %v3114
      %v3185 = vadd.f32 %v2983, %v3116
      %v3186 = vadd.f32 %v2984, %v3119
      %v3187 = vadd.f32 %v2985, %v3121
      %v3188 = vadd.f32 %v2986, %v3124
      %v3189 = vadd.f32 %v2987, %v3126
      %v3190 = vadd.f32 %v2988, %v3129
      %v3191 = vadd.f32 %v2989, %v3131
      %v3192 = vadd.f32 %v2990, %v3134
      %v3193 = vadd.f32 %v2991, %v3136
      %v3194 = vadd.f32 %v2992, %v3139
      %v3195 = vadd.f32 %v2993, %v3141
      %v3196 = vadd.f32 %v2994, %v3144
      %v3197 = vadd.f32 %v2995, %v3146
      %v3198 = vadd.f32 %v2996, %v3149
      %v3199 = vadd.f32 %v2997, %v3151
      %v3200 = vadd.f32 %v2998, %v3154
      %v3201 = vadd.f32 %v2999, %v3156
      %v3202 = vadd.f32 %v3000, %v3159
      %v3203 = vadd.f32 %v3001, %v3161
      %v3204 = vadd.f32 %v3002, %v3164
      %v3205 = vadd.f32 %v3003, %v3166
      %v3206 = vadd.f32 %v3004, %v3169
      %v3207 = vadd.f32 %v3005, %v3171
      %v3208 = vadd.f32 %v3006, %v3174
      %v3209 = vadd.f32 %v3007, %v3176
      %v3210 = vmul.f32 %v2553, %v295
      %v3211 = vmul.f32 %v2584, %v296
      %v3212 = vpack.c.bf16 %v3211, %v3210
      %s3213 = scalar_lea.vmem %s4, 320
      %v3214 = vld [vmem:[%s3213] sm:$0xf]
      %v3215 = vld [vmem:[%s3213 + $0x4] sm:$0xf]
      %v3216 = vld [vmem:[%s3213 + $0x8] sm:$0xf]
      %v3217 = vld [vmem:[%s3213 + $0xc] sm:$0xf]
      %v3218 = vld [vmem:[%s3213 + $0x10] sm:$0xf]
      %v3219 = vld [vmem:[%s3213 + $0x14] sm:$0xf]
      %v3220 = vld [vmem:[%s3213 + $0x18] sm:$0xf]
      %v3221 = vld [vmem:[%s3213 + $0x1c] sm:$0xf]
      %v3222 = vld [vmem:[%s3213 + $0x20] sm:$0xf]
      %v3223 = vld [vmem:[%s3213 + $0x24] sm:$0xf]
      %v3224 = vld [vmem:[%s3213 + $0x28] sm:$0xf]
      %v3225 = vld [vmem:[%s3213 + $0x2c] sm:$0xf]
      %v3226 = vld [vmem:[%s3213 + $0x30] sm:$0xf]
      %v3227 = vld [vmem:[%s3213 + $0x34] sm:$0xf]
      %v3228 = vld [vmem:[%s3213 + $0x38] sm:$0xf]
      %v3229 = vld [vmem:[%s3213 + $0x3c] sm:$0xf]
      %v3246 = vunpack.c.l.b16 %v3214
      %v3247 = vunpack.c.l.b16 %v3215
      %v3248 = vunpack.c.l.b16 %v3216
      %v3249 = vunpack.c.l.b16 %v3217
      %v3250 = vunpack.c.l.b16 %v3218
      %v3251 = vunpack.c.l.b16 %v3219
      %v3252 = vunpack.c.l.b16 %v3220
      %v3253 = vunpack.c.l.b16 %v3221
      %v3254 = vunpack.c.l.b16 %v3222
      %v3255 = vunpack.c.l.b16 %v3223
      %v3256 = vunpack.c.l.b16 %v3224
      %v3257 = vunpack.c.l.b16 %v3225
      %v3258 = vunpack.c.l.b16 %v3226
      %v3259 = vunpack.c.l.b16 %v3227
      %v3260 = vunpack.c.l.b16 %v3228
      %v3261 = vunpack.c.l.b16 %v3229
      %v3262 = vpack.c.b16 %v3247, %v3246
      %v3263 = vpack.c.b16 %v3249, %v3248
      %v3264 = vpack.c.b16 %v3251, %v3250
      %v3265 = vpack.c.b16 %v3253, %v3252
      %v3266 = vpack.c.b16 %v3255, %v3254
      %v3267 = vpack.c.b16 %v3257, %v3256
      %v3268 = vpack.c.b16 %v3259, %v3258
      %v3269 = vpack.c.b16 %v3261, %v3260
      %3278 = vmatpush.bf16.msra.mxu0 %v3269
      %3279 = vmatpush.bf16.msra.mxu0 %v3268
      %3280 = vmatpush.bf16.msra.mxu0 %v3267
      %3281 = vmatpush.bf16.msra.mxu0 %v3266
      %3282 = vmatpush.bf16.msra.mxu0 %v3265
      %3283 = vmatpush.bf16.msra.mxu0 %v3264
      %3284 = vmatpush.bf16.msra.mxu0 %v3263
      %3285 = vmatpush.bf16.msra.mxu0 %v3262
      %3286 = vmatmul.bf16.gmra.mxu0 %v2618
      %v3287 = vpop.f32.mrf.mxu0
      %v3288 = vadd.f32 0.0, %v3287
      %v3289 = vpop.f32.mrf.mxu0
      %v3290 = vadd.f32 0.0, %v3289
      %3291 = vmatmul.bf16.gmra.mxu0 %v2619
      %v3292 = vpop.f32.mrf.mxu0
      %v3293 = vadd.f32 0.0, %v3292
      %v3294 = vpop.f32.mrf.mxu0
      %v3295 = vadd.f32 0.0, %v3294
      %3296 = vmatmul.bf16.gmra.mxu0 %v2620
      %v3297 = vpop.f32.mrf.mxu0
      %v3298 = vadd.f32 0.0, %v3297
      %v3299 = vpop.f32.mrf.mxu0
      %v3300 = vadd.f32 0.0, %v3299
      %3301 = vmatmul.bf16.gmra.mxu0 %v2621
      %v3302 = vpop.f32.mrf.mxu0
      %v3303 = vadd.f32 0.0, %v3302
      %v3304 = vpop.f32.mrf.mxu0
      %v3305 = vadd.f32 0.0, %v3304
      %3306 = vmatmul.bf16.gmra.mxu0 %v2622
      %v3307 = vpop.f32.mrf.mxu0
      %v3308 = vadd.f32 0.0, %v3307
      %v3309 = vpop.f32.mrf.mxu0
      %v3310 = vadd.f32 0.0, %v3309
      %3311 = vmatmul.bf16.gmra.mxu0 %v2623
      %v3312 = vpop.f32.mrf.mxu0
      %v3313 = vadd.f32 0.0, %v3312
      %v3314 = vpop.f32.mrf.mxu0
      %v3315 = vadd.f32 0.0, %v3314
      %3316 = vmatmul.bf16.gmra.mxu0 %v2624
      %v3317 = vpop.f32.mrf.mxu0
      %v3318 = vadd.f32 0.0, %v3317
      %v3319 = vpop.f32.mrf.mxu0
      %v3320 = vadd.f32 0.0, %v3319
      %3321 = vmatmul.bf16.gmra.mxu0 %v2625
      %v3322 = vpop.f32.mrf.mxu0
      %v3323 = vadd.f32 0.0, %v3322
      %v3324 = vpop.f32.mrf.mxu0
      %v3325 = vadd.f32 0.0, %v3324
      %3326 = vmatmul.bf16.gmra.mxu0 %v2626
      %v3327 = vpop.f32.mrf.mxu0
      %v3328 = vadd.f32 0.0, %v3327
      %v3329 = vpop.f32.mrf.mxu0
      %v3330 = vadd.f32 0.0, %v3329
      %3331 = vmatmul.bf16.gmra.mxu0 %v2627
      %v3332 = vpop.f32.mrf.mxu0
      %v3333 = vadd.f32 0.0, %v3332
      %v3334 = vpop.f32.mrf.mxu0
      %v3335 = vadd.f32 0.0, %v3334
      %3336 = vmatmul.bf16.gmra.mxu0 %v2628
      %v3337 = vpop.f32.mrf.mxu0
      %v3338 = vadd.f32 0.0, %v3337
      %v3339 = vpop.f32.mrf.mxu0
      %v3340 = vadd.f32 0.0, %v3339
      %3341 = vmatmul.bf16.gmra.mxu0 %v2629
      %v3342 = vpop.f32.mrf.mxu0
      %v3343 = vadd.f32 0.0, %v3342
      %v3344 = vpop.f32.mrf.mxu0
      %v3345 = vadd.f32 0.0, %v3344
      %3346 = vmatmul.bf16.gmra.mxu0 %v2630
      %v3347 = vpop.f32.mrf.mxu0
      %v3348 = vadd.f32 0.0, %v3347
      %v3349 = vpop.f32.mrf.mxu0
      %v3350 = vadd.f32 0.0, %v3349
      %3351 = vmatmul.bf16.gmra.mxu0 %v2631
      %v3352 = vpop.f32.mrf.mxu0
      %v3353 = vadd.f32 0.0, %v3352
      %v3354 = vpop.f32.mrf.mxu0
      %v3355 = vadd.f32 0.0, %v3354
      %3356 = vmatmul.bf16.gmra.mxu0 %v2632
      %v3357 = vpop.f32.mrf.mxu0
      %v3358 = vadd.f32 0.0, %v3357
      %v3359 = vpop.f32.mrf.mxu0
      %v3360 = vadd.f32 0.0, %v3359
      %3361 = vmatmul.bf16.gmra.mxu0 %v3212
      %v3362 = vpop.f32.mrf.mxu0
      %v3363 = vadd.f32 0.0, %v3362
      %v3364 = vpop.f32.mrf.mxu0
      %v3365 = vadd.f32 0.0, %v3364
      %3366 = vdwg.mxu0
      %v3367 = vadd.f32 %v3178, %v3288
      %v3368 = vadd.f32 %v3179, %v3290
      %v3369 = vadd.f32 %v3180, %v3293
      %v3370 = vadd.f32 %v3181, %v3295
      %v3371 = vadd.f32 %v3182, %v3298
      %v3372 = vadd.f32 %v3183, %v3300
      %v3373 = vadd.f32 %v3184, %v3303
      %v3374 = vadd.f32 %v3185, %v3305
      %v3375 = vadd.f32 %v3186, %v3308
      %v3376 = vadd.f32 %v3187, %v3310
      %v3377 = vadd.f32 %v3188, %v3313
      %v3378 = vadd.f32 %v3189, %v3315
      %v3379 = vadd.f32 %v3190, %v3318
      %v3380 = vadd.f32 %v3191, %v3320
      %v3381 = vadd.f32 %v3192, %v3323
      %v3382 = vadd.f32 %v3193, %v3325
      %v3383 = vadd.f32 %v3194, %v3328
      %v3384 = vadd.f32 %v3195, %v3330
      %v3385 = vadd.f32 %v3196, %v3333
      %v3386 = vadd.f32 %v3197, %v3335
      %v3387 = vadd.f32 %v3198, %v3338
      %v3388 = vadd.f32 %v3199, %v3340
      %v3389 = vadd.f32 %v3200, %v3343
      %v3390 = vadd.f32 %v3201, %v3345
      %v3391 = vadd.f32 %v3202, %v3348
      %v3392 = vadd.f32 %v3203, %v3350
      %v3393 = vadd.f32 %v3204, %v3353
      %v3394 = vadd.f32 %v3205, %v3355
      %v3395 = vadd.f32 %v3206, %v3358
      %v3396 = vadd.f32 %v3207, %v3360
      %v3397 = vadd.f32 %v3208, %v3363
      %v3398 = vadd.f32 %v3209, %v3365
      %v3399 = vmul.f32 %v2117, %v287
      %v3400 = vmul.f32 %v2116, %v287
      %v3401 = vpack.c.bf16 %v3400, %v3399
      %s3402 = scalar_lea.vmem %s4, 384
      %v3403 = vld [vmem:[%s3402] sm:$0xf]
      %v3404 = vld [vmem:[%s3402 + $0x4] sm:$0xf]
      %v3405 = vld [vmem:[%s3402 + $0x8] sm:$0xf]
      %v3406 = vld [vmem:[%s3402 + $0xc] sm:$0xf]
      %v3407 = vld [vmem:[%s3402 + $0x10] sm:$0xf]
      %v3408 = vld [vmem:[%s3402 + $0x14] sm:$0xf]
      %v3409 = vld [vmem:[%s3402 + $0x18] sm:$0xf]
      %v3410 = vld [vmem:[%s3402 + $0x1c] sm:$0xf]
      %v3411 = vld [vmem:[%s3402 + $0x20] sm:$0xf]
      %v3412 = vld [vmem:[%s3402 + $0x24] sm:$0xf]
      %v3413 = vld [vmem:[%s3402 + $0x28] sm:$0xf]
      %v3414 = vld [vmem:[%s3402 + $0x2c] sm:$0xf]
      %v3415 = vld [vmem:[%s3402 + $0x30] sm:$0xf]
      %v3416 = vld [vmem:[%s3402 + $0x34] sm:$0xf]
      %v3417 = vld [vmem:[%s3402 + $0x38] sm:$0xf]
      %v3418 = vld [vmem:[%s3402 + $0x3c] sm:$0xf]
      %v3435 = vunpack.c.l.b16 %v3403
      %v3436 = vunpack.c.l.b16 %v3404
      %v3437 = vunpack.c.l.b16 %v3405
      %v3438 = vunpack.c.l.b16 %v3406
      %v3439 = vunpack.c.l.b16 %v3407
      %v3440 = vunpack.c.l.b16 %v3408
      %v3441 = vunpack.c.l.b16 %v3409
      %v3442 = vunpack.c.l.b16 %v3410
      %v3443 = vunpack.c.l.b16 %v3411
      %v3444 = vunpack.c.l.b16 %v3412
      %v3445 = vunpack.c.l.b16 %v3413
      %v3446 = vunpack.c.l.b16 %v3414
      %v3447 = vunpack.c.l.b16 %v3415
      %v3448 = vunpack.c.l.b16 %v3416
      %v3449 = vunpack.c.l.b16 %v3417
      %v3450 = vunpack.c.l.b16 %v3418
      %v3451 = vpack.c.b16 %v3436, %v3435
      %v3452 = vpack.c.b16 %v3438, %v3437
      %v3453 = vpack.c.b16 %v3440, %v3439
      %v3454 = vpack.c.b16 %v3442, %v3441
      %v3455 = vpack.c.b16 %v3444, %v3443
      %v3456 = vpack.c.b16 %v3446, %v3445
      %v3457 = vpack.c.b16 %v3448, %v3447
      %v3458 = vpack.c.b16 %v3450, %v3449
      %3467 = vmatpush.bf16.msra.mxu0 %v3458
      %3468 = vmatpush.bf16.msra.mxu0 %v3457
      %3469 = vmatpush.bf16.msra.mxu0 %v3456
      %3470 = vmatpush.bf16.msra.mxu0 %v3455
      %3471 = vmatpush.bf16.msra.mxu0 %v3454
      %3472 = vmatpush.bf16.msra.mxu0 %v3453
      %3473 = vmatpush.bf16.msra.mxu0 %v3452
      %3474 = vmatpush.bf16.msra.mxu0 %v3451
      %3475 = vmatmul.bf16.gmra.mxu0 %v2152
      %v3476 = vpop.f32.mrf.mxu0
      %v3477 = vadd.f32 0.0, %v3476
      %v3478 = vpop.f32.mrf.mxu0
      %v3479 = vadd.f32 0.0, %v3478
      %3480 = vmatmul.bf16.gmra.mxu0 %v2153
      %v3481 = vpop.f32.mrf.mxu0
      %v3482 = vadd.f32 0.0, %v3481
      %v3483 = vpop.f32.mrf.mxu0
      %v3484 = vadd.f32 0.0, %v3483
      %3485 = vmatmul.bf16.gmra.mxu0 %v2154
      %v3486 = vpop.f32.mrf.mxu0
      %v3487 = vadd.f32 0.0, %v3486
      %v3488 = vpop.f32.mrf.mxu0
      %v3489 = vadd.f32 0.0, %v3488
      %3490 = vmatmul.bf16.gmra.mxu0 %v2155
      %v3491 = vpop.f32.mrf.mxu0
      %v3492 = vadd.f32 0.0, %v3491
      %v3493 = vpop.f32.mrf.mxu0
      %v3494 = vadd.f32 0.0, %v3493
      %3495 = vmatmul.bf16.gmra.mxu0 %v2156
      %v3496 = vpop.f32.mrf.mxu0
      %v3497 = vadd.f32 0.0, %v3496
      %v3498 = vpop.f32.mrf.mxu0
      %v3499 = vadd.f32 0.0, %v3498
      %3500 = vmatmul.bf16.gmra.mxu0 %v2157
      %v3501 = vpop.f32.mrf.mxu0
      %v3502 = vadd.f32 0.0, %v3501
      %v3503 = vpop.f32.mrf.mxu0
      %v3504 = vadd.f32 0.0, %v3503
      %3505 = vmatmul.bf16.gmra.mxu0 %v2158
      %v3506 = vpop.f32.mrf.mxu0
      %v3507 = vadd.f32 0.0, %v3506
      %v3508 = vpop.f32.mrf.mxu0
      %v3509 = vadd.f32 0.0, %v3508
      %3510 = vmatmul.bf16.gmra.mxu0 %v2159
      %v3511 = vpop.f32.mrf.mxu0
      %v3512 = vadd.f32 0.0, %v3511
      %v3513 = vpop.f32.mrf.mxu0
      %v3514 = vadd.f32 0.0, %v3513
      %3515 = vmatmul.bf16.gmra.mxu0 %v2160
      %v3516 = vpop.f32.mrf.mxu0
      %v3517 = vadd.f32 0.0, %v3516
      %v3518 = vpop.f32.mrf.mxu0
      %v3519 = vadd.f32 0.0, %v3518
      %3520 = vmatmul.bf16.gmra.mxu0 %v2161
      %v3521 = vpop.f32.mrf.mxu0
      %v3522 = vadd.f32 0.0, %v3521
      %v3523 = vpop.f32.mrf.mxu0
      %v3524 = vadd.f32 0.0, %v3523
      %3525 = vmatmul.bf16.gmra.mxu0 %v2162
      %v3526 = vpop.f32.mrf.mxu0
      %v3527 = vadd.f32 0.0, %v3526
      %v3528 = vpop.f32.mrf.mxu0
      %v3529 = vadd.f32 0.0, %v3528
      %3530 = vmatmul.bf16.gmra.mxu0 %v2163
      %v3531 = vpop.f32.mrf.mxu0
      %v3532 = vadd.f32 0.0, %v3531
      %v3533 = vpop.f32.mrf.mxu0
      %v3534 = vadd.f32 0.0, %v3533
      %3535 = vmatmul.bf16.gmra.mxu0 %v2164
      %v3536 = vpop.f32.mrf.mxu0
      %v3537 = vadd.f32 0.0, %v3536
      %v3538 = vpop.f32.mrf.mxu0
      %v3539 = vadd.f32 0.0, %v3538
      %3540 = vmatmul.bf16.gmra.mxu0 %v2165
      %v3541 = vpop.f32.mrf.mxu0
      %v3542 = vadd.f32 0.0, %v3541
      %v3543 = vpop.f32.mrf.mxu0
      %v3544 = vadd.f32 0.0, %v3543
      %3545 = vmatmul.bf16.gmra.mxu0 %v2821
      %v3546 = vpop.f32.mrf.mxu0
      %v3547 = vadd.f32 0.0, %v3546
      %v3548 = vpop.f32.mrf.mxu0
      %v3549 = vadd.f32 0.0, %v3548
      %3550 = vmatmul.bf16.gmra.mxu0 %v3401
      %v3551 = vpop.f32.mrf.mxu0
      %v3552 = vadd.f32 0.0, %v3551
      %v3553 = vpop.f32.mrf.mxu0
      %v3554 = vadd.f32 0.0, %v3553
      %3555 = vdwg.mxu0
      %v3556 = vadd.f32 %v3367, %v3477
      %v3557 = vadd.f32 %v3368, %v3479
      %v3558 = vadd.f32 %v3369, %v3482
      %v3559 = vadd.f32 %v3370, %v3484
      %v3560 = vadd.f32 %v3371, %v3487
      %v3561 = vadd.f32 %v3372, %v3489
      %v3562 = vadd.f32 %v3373, %v3492
      %v3563 = vadd.f32 %v3374, %v3494
      %v3564 = vadd.f32 %v3375, %v3497
      %v3565 = vadd.f32 %v3376, %v3499
      %v3566 = vadd.f32 %v3377, %v3502
      %v3567 = vadd.f32 %v3378, %v3504
      %v3568 = vadd.f32 %v3379, %v3507
      %v3569 = vadd.f32 %v3380, %v3509
      %v3570 = vadd.f32 %v3381, %v3512
      %v3571 = vadd.f32 %v3382, %v3514
      %v3572 = vadd.f32 %v3383, %v3517
      %v3573 = vadd.f32 %v3384, %v3519
      %v3574 = vadd.f32 %v3385, %v3522
      %v3575 = vadd.f32 %v3386, %v3524
      %v3576 = vadd.f32 %v3387, %v3527
      %v3577 = vadd.f32 %v3388, %v3529
      %v3578 = vadd.f32 %v3389, %v3532
      %v3579 = vadd.f32 %v3390, %v3534
      %v3580 = vadd.f32 %v3391, %v3537
      %v3581 = vadd.f32 %v3392, %v3539
      %v3582 = vadd.f32 %v3393, %v3542
      %v3583 = vadd.f32 %v3394, %v3544
      %v3584 = vadd.f32 %v3395, %v3547
      %v3585 = vadd.f32 %v3396, %v3549
      %v3586 = vadd.f32 %v3397, %v3552
      %v3587 = vadd.f32 %v3398, %v3554
      %v3588 = vmul.f32 %v2052, %v290
      %v3589 = vmul.f32 %v2053, %v290
      %v3590 = vmul.f32 %v2022, %v287
      %v3591 = vmul.f32 %v2023, %v287
      %v3592 = vpack.c.bf16 %v3589, %v3588
      %v3593 = vpack.c.bf16 %v3591, %v3590
      %s3594 = scalar_lea.vmem %s4, 448
      %v3595 = vld [vmem:[%s3594] sm:$0xf]
      %v3596 = vld [vmem:[%s3594 + $0x4] sm:$0xf]
      %v3597 = vld [vmem:[%s3594 + $0x8] sm:$0xf]
      %v3598 = vld [vmem:[%s3594 + $0xc] sm:$0xf]
      %v3599 = vld [vmem:[%s3594 + $0x10] sm:$0xf]
      %v3600 = vld [vmem:[%s3594 + $0x14] sm:$0xf]
      %v3601 = vld [vmem:[%s3594 + $0x18] sm:$0xf]
      %v3602 = vld [vmem:[%s3594 + $0x1c] sm:$0xf]
      %v3603 = vld [vmem:[%s3594 + $0x20] sm:$0xf]
      %v3604 = vld [vmem:[%s3594 + $0x24] sm:$0xf]
      %v3605 = vld [vmem:[%s3594 + $0x28] sm:$0xf]
      %v3606 = vld [vmem:[%s3594 + $0x2c] sm:$0xf]
      %v3607 = vld [vmem:[%s3594 + $0x30] sm:$0xf]
      %v3608 = vld [vmem:[%s3594 + $0x34] sm:$0xf]
      %v3609 = vld [vmem:[%s3594 + $0x38] sm:$0xf]
      %v3610 = vld [vmem:[%s3594 + $0x3c] sm:$0xf]
      %v3627 = vunpack.c.l.b16 %v3595
      %v3628 = vunpack.c.l.b16 %v3596
      %v3629 = vunpack.c.l.b16 %v3597
      %v3630 = vunpack.c.l.b16 %v3598
      %v3631 = vunpack.c.l.b16 %v3599
      %v3632 = vunpack.c.l.b16 %v3600
      %v3633 = vunpack.c.l.b16 %v3601
      %v3634 = vunpack.c.l.b16 %v3602
      %v3635 = vunpack.c.l.b16 %v3603
      %v3636 = vunpack.c.l.b16 %v3604
      %v3637 = vunpack.c.l.b16 %v3605
      %v3638 = vunpack.c.l.b16 %v3606
      %v3639 = vunpack.c.l.b16 %v3607
      %v3640 = vunpack.c.l.b16 %v3608
      %v3641 = vunpack.c.l.b16 %v3609
      %v3642 = vunpack.c.l.b16 %v3610
      %v3643 = vpack.c.b16 %v3628, %v3627
      %v3644 = vpack.c.b16 %v3630, %v3629
      %v3645 = vpack.c.b16 %v3632, %v3631
      %v3646 = vpack.c.b16 %v3634, %v3633
      %v3647 = vpack.c.b16 %v3636, %v3635
      %v3648 = vpack.c.b16 %v3638, %v3637
      %v3649 = vpack.c.b16 %v3640, %v3639
      %v3650 = vpack.c.b16 %v3642, %v3641
      %3659 = vmatpush.bf16.msra.mxu0 %v3650
      %3660 = vmatpush.bf16.msra.mxu0 %v3649
      %3661 = vmatpush.bf16.msra.mxu0 %v3648
      %3662 = vmatpush.bf16.msra.mxu0 %v3647
      %3663 = vmatpush.bf16.msra.mxu0 %v3646
      %3664 = vmatpush.bf16.msra.mxu0 %v3645
      %3665 = vmatpush.bf16.msra.mxu0 %v3644
      %3666 = vmatpush.bf16.msra.mxu0 %v3643
      %3667 = vmatmul.bf16.gmra.mxu0 %v2216
      %v3668 = vpop.f32.mrf.mxu0
      %v3669 = vadd.f32 0.0, %v3668
      %v3670 = vpop.f32.mrf.mxu0
      %v3671 = vadd.f32 0.0, %v3670
      %3672 = vmatmul.bf16.gmra.mxu0 %v2217
      %v3673 = vpop.f32.mrf.mxu0
      %v3674 = vadd.f32 0.0, %v3673
      %v3675 = vpop.f32.mrf.mxu0
      %v3676 = vadd.f32 0.0, %v3675
      %3677 = vmatmul.bf16.gmra.mxu0 %v2218
      %v3678 = vpop.f32.mrf.mxu0
      %v3679 = vadd.f32 0.0, %v3678
      %v3680 = vpop.f32.mrf.mxu0
      %v3681 = vadd.f32 0.0, %v3680
      %3682 = vmatmul.bf16.gmra.mxu0 %v2219
      %v3683 = vpop.f32.mrf.mxu0
      %v3684 = vadd.f32 0.0, %v3683
      %v3685 = vpop.f32.mrf.mxu0
      %v3686 = vadd.f32 0.0, %v3685
      %3687 = vmatmul.bf16.gmra.mxu0 %v2220
      %v3688 = vpop.f32.mrf.mxu0
      %v3689 = vadd.f32 0.0, %v3688
      %v3690 = vpop.f32.mrf.mxu0
      %v3691 = vadd.f32 0.0, %v3690
      %3692 = vmatmul.bf16.gmra.mxu0 %v2221
      %v3693 = vpop.f32.mrf.mxu0
      %v3694 = vadd.f32 0.0, %v3693
      %v3695 = vpop.f32.mrf.mxu0
      %v3696 = vadd.f32 0.0, %v3695
      %3697 = vmatmul.bf16.gmra.mxu0 %v2222
      %v3698 = vpop.f32.mrf.mxu0
      %v3699 = vadd.f32 0.0, %v3698
      %v3700 = vpop.f32.mrf.mxu0
      %v3701 = vadd.f32 0.0, %v3700
      %3702 = vmatmul.bf16.gmra.mxu0 %v2223
      %v3703 = vpop.f32.mrf.mxu0
      %v3704 = vadd.f32 0.0, %v3703
      %v3705 = vpop.f32.mrf.mxu0
      %v3706 = vadd.f32 0.0, %v3705
      %3707 = vmatmul.bf16.gmra.mxu0 %v2224
      %v3708 = vpop.f32.mrf.mxu0
      %v3709 = vadd.f32 0.0, %v3708
      %v3710 = vpop.f32.mrf.mxu0
      %v3711 = vadd.f32 0.0, %v3710
      %3712 = vmatmul.bf16.gmra.mxu0 %v2225
      %v3713 = vpop.f32.mrf.mxu0
      %v3714 = vadd.f32 0.0, %v3713
      %v3715 = vpop.f32.mrf.mxu0
      %v3716 = vadd.f32 0.0, %v3715
      %3717 = vmatmul.bf16.gmra.mxu0 %v2226
      %v3718 = vpop.f32.mrf.mxu0
      %v3719 = vadd.f32 0.0, %v3718
      %v3720 = vpop.f32.mrf.mxu0
      %v3721 = vadd.f32 0.0, %v3720
      %3722 = vmatmul.bf16.gmra.mxu0 %v2227
      %v3723 = vpop.f32.mrf.mxu0
      %v3724 = vadd.f32 0.0, %v3723
      %v3725 = vpop.f32.mrf.mxu0
      %v3726 = vadd.f32 0.0, %v3725
      %3727 = vmatmul.bf16.gmra.mxu0 %v2228
      %v3728 = vpop.f32.mrf.mxu0
      %v3729 = vadd.f32 0.0, %v3728
      %v3730 = vpop.f32.mrf.mxu0
      %v3731 = vadd.f32 0.0, %v3730
      %3732 = vmatmul.bf16.gmra.mxu0 %v2229
      %v3733 = vpop.f32.mrf.mxu0
      %v3734 = vadd.f32 0.0, %v3733
      %v3735 = vpop.f32.mrf.mxu0
      %v3736 = vadd.f32 0.0, %v3735
      %3737 = vmatmul.bf16.gmra.mxu0 %v3592
      %v3738 = vpop.f32.mrf.mxu0
      %v3739 = vadd.f32 0.0, %v3738
      %v3740 = vpop.f32.mrf.mxu0
      %v3741 = vadd.f32 0.0, %v3740
      %3742 = vmatmul.bf16.gmra.mxu0 %v3593
      %v3743 = vpop.f32.mrf.mxu0
      %v3744 = vadd.f32 0.0, %v3743
      %v3745 = vpop.f32.mrf.mxu0
      %v3746 = vadd.f32 0.0, %v3745
      %3747 = vdwg.mxu0
      %v3748 = vadd.f32 %v3556, %v3669
      %v3749 = vadd.f32 %v3557, %v3671
      %v3750 = vadd.f32 %v3558, %v3674
      %v3751 = vadd.f32 %v3559, %v3676
      %v3752 = vadd.f32 %v3560, %v3679
      %v3753 = vadd.f32 %v3561, %v3681
      %v3754 = vadd.f32 %v3562, %v3684
      %v3755 = vadd.f32 %v3563, %v3686
      %v3756 = vadd.f32 %v3564, %v3689
      %v3757 = vadd.f32 %v3565, %v3691
      %v3758 = vadd.f32 %v3566, %v3694
      %v3759 = vadd.f32 %v3567, %v3696
      %v3760 = vadd.f32 %v3568, %v3699
      %v3761 = vadd.f32 %v3569, %v3701
      %v3762 = vadd.f32 %v3570, %v3704
      %v3763 = vadd.f32 %v3571, %v3706
      %v3764 = vadd.f32 %v3572, %v3709
      %v3765 = vadd.f32 %v3573, %v3711
      %v3766 = vadd.f32 %v3574, %v3714
      %v3767 = vadd.f32 %v3575, %v3716
      %v3768 = vadd.f32 %v3576, %v3719
      %v3769 = vadd.f32 %v3577, %v3721
      %v3770 = vadd.f32 %v3578, %v3724
      %v3771 = vadd.f32 %v3579, %v3726
      %v3772 = vadd.f32 %v3580, %v3729
      %v3773 = vadd.f32 %v3581, %v3731
      %v3774 = vadd.f32 %v3582, %v3734
      %v3775 = vadd.f32 %v3583, %v3736
      %v3776 = vadd.f32 %v3584, %v3739
      %v3777 = vadd.f32 %v3585, %v3741
      %v3778 = vadd.f32 %v3586, %v3744
      %v3779 = vadd.f32 %v3587, %v3746
      %v3780 = vmul.f32 %v2583, %v287
      %v3781 = vmul.f32 %v2582, %v287
      %v3782 = vpack.c.bf16 %v3781, %v3780
      %s3783 = scalar_lea.vmem %s4, 512
      %v3784 = vld [vmem:[%s3783] sm:$0xf]
      %v3785 = vld [vmem:[%s3783 + $0x4] sm:$0xf]
      %v3786 = vld [vmem:[%s3783 + $0x8] sm:$0xf]
      %v3787 = vld [vmem:[%s3783 + $0xc] sm:$0xf]
      %v3788 = vld [vmem:[%s3783 + $0x10] sm:$0xf]
      %v3789 = vld [vmem:[%s3783 + $0x14] sm:$0xf]
      %v3790 = vld [vmem:[%s3783 + $0x18] sm:$0xf]
      %v3791 = vld [vmem:[%s3783 + $0x1c] sm:$0xf]
      %v3792 = vld [vmem:[%s3783 + $0x20] sm:$0xf]
      %v3793 = vld [vmem:[%s3783 + $0x24] sm:$0xf]
      %v3794 = vld [vmem:[%s3783 + $0x28] sm:$0xf]
      %v3795 = vld [vmem:[%s3783 + $0x2c] sm:$0xf]
      %v3796 = vld [vmem:[%s3783 + $0x30] sm:$0xf]
      %v3797 = vld [vmem:[%s3783 + $0x34] sm:$0xf]
      %v3798 = vld [vmem:[%s3783 + $0x38] sm:$0xf]
      %v3799 = vld [vmem:[%s3783 + $0x3c] sm:$0xf]
      %v3816 = vunpack.c.l.b16 %v3784
      %v3817 = vunpack.c.l.b16 %v3785
      %v3818 = vunpack.c.l.b16 %v3786
      %v3819 = vunpack.c.l.b16 %v3787
      %v3820 = vunpack.c.l.b16 %v3788
      %v3821 = vunpack.c.l.b16 %v3789
      %v3822 = vunpack.c.l.b16 %v3790
      %v3823 = vunpack.c.l.b16 %v3791
      %v3824 = vunpack.c.l.b16 %v3792
      %v3825 = vunpack.c.l.b16 %v3793
      %v3826 = vunpack.c.l.b16 %v3794
      %v3827 = vunpack.c.l.b16 %v3795
      %v3828 = vunpack.c.l.b16 %v3796
      %v3829 = vunpack.c.l.b16 %v3797
      %v3830 = vunpack.c.l.b16 %v3798
      %v3831 = vunpack.c.l.b16 %v3799
      %v3832 = vpack.c.b16 %v3817, %v3816
      %v3833 = vpack.c.b16 %v3819, %v3818
      %v3834 = vpack.c.b16 %v3821, %v3820
      %v3835 = vpack.c.b16 %v3823, %v3822
      %v3836 = vpack.c.b16 %v3825, %v3824
      %v3837 = vpack.c.b16 %v3827, %v3826
      %v3838 = vpack.c.b16 %v3829, %v3828
      %v3839 = vpack.c.b16 %v3831, %v3830
      %3848 = vmatpush.bf16.msra.mxu0 %v3839
      %3849 = vmatpush.bf16.msra.mxu0 %v3838
      %3850 = vmatpush.bf16.msra.mxu0 %v3837
      %3851 = vmatpush.bf16.msra.mxu0 %v3836
      %3852 = vmatpush.bf16.msra.mxu0 %v3835
      %3853 = vmatpush.bf16.msra.mxu0 %v3834
      %3854 = vmatpush.bf16.msra.mxu0 %v3833
      %3855 = vmatpush.bf16.msra.mxu0 %v3832
      %3856 = vmatmul.bf16.gmra.mxu0 %v2619
      %v3857 = vpop.f32.mrf.mxu0
      %v3858 = vadd.f32 0.0, %v3857
      %v3859 = vpop.f32.mrf.mxu0
      %v3860 = vadd.f32 0.0, %v3859
      %3861 = vmatmul.bf16.gmra.mxu0 %v2620
      %v3862 = vpop.f32.mrf.mxu0
      %v3863 = vadd.f32 0.0, %v3862
      %v3864 = vpop.f32.mrf.mxu0
      %v3865 = vadd.f32 0.0, %v3864
      %3866 = vmatmul.bf16.gmra.mxu0 %v2621
      %v3867 = vpop.f32.mrf.mxu0
      %v3868 = vadd.f32 0.0, %v3867
      %v3869 = vpop.f32.mrf.mxu0
      %v3870 = vadd.f32 0.0, %v3869
      %3871 = vmatmul.bf16.gmra.mxu0 %v2622
      %v3872 = vpop.f32.mrf.mxu0
      %v3873 = vadd.f32 0.0, %v3872
      %v3874 = vpop.f32.mrf.mxu0
      %v3875 = vadd.f32 0.0, %v3874
      %3876 = vmatmul.bf16.gmra.mxu0 %v2623
      %v3877 = vpop.f32.mrf.mxu0
      %v3878 = vadd.f32 0.0, %v3877
      %v3879 = vpop.f32.mrf.mxu0
      %v3880 = vadd.f32 0.0, %v3879
      %3881 = vmatmul.bf16.gmra.mxu0 %v2624
      %v3882 = vpop.f32.mrf.mxu0
      %v3883 = vadd.f32 0.0, %v3882
      %v3884 = vpop.f32.mrf.mxu0
      %v3885 = vadd.f32 0.0, %v3884
      %3886 = vmatmul.bf16.gmra.mxu0 %v2625
      %v3887 = vpop.f32.mrf.mxu0
      %v3888 = vadd.f32 0.0, %v3887
      %v3889 = vpop.f32.mrf.mxu0
      %v3890 = vadd.f32 0.0, %v3889
      %3891 = vmatmul.bf16.gmra.mxu0 %v2626
      %v3892 = vpop.f32.mrf.mxu0
      %v3893 = vadd.f32 0.0, %v3892
      %v3894 = vpop.f32.mrf.mxu0
      %v3895 = vadd.f32 0.0, %v3894
      %3896 = vmatmul.bf16.gmra.mxu0 %v2627
      %v3897 = vpop.f32.mrf.mxu0
      %v3898 = vadd.f32 0.0, %v3897
      %v3899 = vpop.f32.mrf.mxu0
      %v3900 = vadd.f32 0.0, %v3899
      %3901 = vmatmul.bf16.gmra.mxu0 %v2628
      %v3902 = vpop.f32.mrf.mxu0
      %v3903 = vadd.f32 0.0, %v3902
      %v3904 = vpop.f32.mrf.mxu0
      %v3905 = vadd.f32 0.0, %v3904
      %3906 = vmatmul.bf16.gmra.mxu0 %v2629
      %v3907 = vpop.f32.mrf.mxu0
      %v3908 = vadd.f32 0.0, %v3907
      %v3909 = vpop.f32.mrf.mxu0
      %v3910 = vadd.f32 0.0, %v3909
      %3911 = vmatmul.bf16.gmra.mxu0 %v2630
      %v3912 = vpop.f32.mrf.mxu0
      %v3913 = vadd.f32 0.0, %v3912
      %v3914 = vpop.f32.mrf.mxu0
      %v3915 = vadd.f32 0.0, %v3914
      %3916 = vmatmul.bf16.gmra.mxu0 %v2631
      %v3917 = vpop.f32.mrf.mxu0
      %v3918 = vadd.f32 0.0, %v3917
      %v3919 = vpop.f32.mrf.mxu0
      %v3920 = vadd.f32 0.0, %v3919
      %3921 = vmatmul.bf16.gmra.mxu0 %v2632
      %v3922 = vpop.f32.mrf.mxu0
      %v3923 = vadd.f32 0.0, %v3922
      %v3924 = vpop.f32.mrf.mxu0
      %v3925 = vadd.f32 0.0, %v3924
      %3926 = vmatmul.bf16.gmra.mxu0 %v3212
      %v3927 = vpop.f32.mrf.mxu0
      %v3928 = vadd.f32 0.0, %v3927
      %v3929 = vpop.f32.mrf.mxu0
      %v3930 = vadd.f32 0.0, %v3929
      %3931 = vmatmul.bf16.gmra.mxu0 %v3782
      %v3932 = vpop.f32.mrf.mxu0
      %v3933 = vadd.f32 0.0, %v3932
      %v3934 = vpop.f32.mrf.mxu0
      %v3935 = vadd.f32 0.0, %v3934
      %3936 = vdwg.mxu0
      %v3937 = vadd.f32 %v3748, %v3858
      %v3938 = vadd.f32 %v3749, %v3860
      %v3939 = vadd.f32 %v3750, %v3863
      %v3940 = vadd.f32 %v3751, %v3865
      %v3941 = vadd.f32 %v3752, %v3868
      %v3942 = vadd.f32 %v3753, %v3870
      %v3943 = vadd.f32 %v3754, %v3873
      %v3944 = vadd.f32 %v3755, %v3875
      %v3945 = vadd.f32 %v3756, %v3878
      %v3946 = vadd.f32 %v3757, %v3880
      %v3947 = vadd.f32 %v3758, %v3883
      %v3948 = vadd.f32 %v3759, %v3885
      %v3949 = vadd.f32 %v3760, %v3888
      %v3950 = vadd.f32 %v3761, %v3890
      %v3951 = vadd.f32 %v3762, %v3893
      %v3952 = vadd.f32 %v3763, %v3895
      %v3953 = vadd.f32 %v3764, %v3898
      %v3954 = vadd.f32 %v3765, %v3900
      %v3955 = vadd.f32 %v3766, %v3903
      %v3956 = vadd.f32 %v3767, %v3905
      %v3957 = vadd.f32 %v3768, %v3908
      %v3958 = vadd.f32 %v3769, %v3910
      %v3959 = vadd.f32 %v3770, %v3913
      %v3960 = vadd.f32 %v3771, %v3915
      %v3961 = vadd.f32 %v3772, %v3918
      %v3962 = vadd.f32 %v3773, %v3920
      %v3963 = vadd.f32 %v3774, %v3923
      %v3964 = vadd.f32 %v3775, %v3925
      %v3965 = vadd.f32 %v3776, %v3928
      %v3966 = vadd.f32 %v3777, %v3930
      %v3967 = vadd.f32 %v3778, %v3933
      %v3968 = vadd.f32 %v3779, %v3935
      %v3969 = vld [vmem:[%s5] sm:$0x1]
      %v3971 = vperm.slane %v3969, 0
      %v3973 = vadd.f32 %v3937, %v3971
      %v3974 = vadd.f32 %v3938, %v3971
      %v3975 = vadd.f32 %v3939, %v3971
      %v3976 = vadd.f32 %v3940, %v3971
      %v3977 = vadd.f32 %v3941, %v3971
      %v3978 = vadd.f32 %v3942, %v3971
      %v3979 = vadd.f32 %v3943, %v3971
      %v3980 = vadd.f32 %v3944, %v3971
      %v3981 = vadd.f32 %v3945, %v3971
      %v3982 = vadd.f32 %v3946, %v3971
      %v3983 = vadd.f32 %v3947, %v3971
      %v3984 = vadd.f32 %v3948, %v3971
      %v3985 = vadd.f32 %v3949, %v3971
      %v3986 = vadd.f32 %v3950, %v3971
      %v3987 = vadd.f32 %v3951, %v3971
      %v3988 = vadd.f32 %v3952, %v3971
      %v3989 = vadd.f32 %v3953, %v3971
      %v3990 = vadd.f32 %v3954, %v3971
      %v3991 = vadd.f32 %v3955, %v3971
      %v3992 = vadd.f32 %v3956, %v3971
      %v3993 = vadd.f32 %v3957, %v3971
      %v3994 = vadd.f32 %v3958, %v3971
      %v3995 = vadd.f32 %v3959, %v3971
      %v3996 = vadd.f32 %v3960, %v3971
      %v3997 = vadd.f32 %v3961, %v3971
      %v3998 = vadd.f32 %v3962, %v3971
      %v3999 = vadd.f32 %v3963, %v3971
      %v4000 = vadd.f32 %v3964, %v3971
      %v4001 = vadd.f32 %v3965, %v3971
      %v4002 = vadd.f32 %v3966, %v3971
      %v4003 = vadd.f32 %v3967, %v3971
      %v4004 = vadd.f32 %v3968, %v3971
      %vm4005 = vcmp.gt.f32.partialorder %v3973, 0.0
      %vm4006 = vcmp.gt.f32.partialorder %v3974, 0.0
      %vm4007 = vcmp.gt.f32.partialorder %v3975, 0.0
      %vm4008 = vcmp.gt.f32.partialorder %v3976, 0.0
      %vm4009 = vcmp.gt.f32.partialorder %v3977, 0.0
      %vm4010 = vcmp.gt.f32.partialorder %v3978, 0.0
      %vm4011 = vcmp.gt.f32.partialorder %v3979, 0.0
      %vm4012 = vcmp.gt.f32.partialorder %v3980, 0.0
      %vm4013 = vcmp.gt.f32.partialorder %v3981, 0.0
      %vm4014 = vcmp.gt.f32.partialorder %v3982, 0.0
      %vm4015 = vcmp.gt.f32.partialorder %v3983, 0.0
      %vm4016 = vcmp.gt.f32.partialorder %v3984, 0.0
      %vm4017 = vcmp.gt.f32.partialorder %v3985, 0.0
      %vm4018 = vcmp.gt.f32.partialorder %v3986, 0.0
      %vm4019 = vcmp.gt.f32.partialorder %v3987, 0.0
      %vm4020 = vcmp.gt.f32.partialorder %v3988, 0.0
      %vm4021 = vcmp.gt.f32.partialorder %v3989, 0.0
      %vm4022 = vcmp.gt.f32.partialorder %v3990, 0.0
      %vm4023 = vcmp.gt.f32.partialorder %v3991, 0.0
      %vm4024 = vcmp.gt.f32.partialorder %v3992, 0.0
      %vm4025 = vcmp.gt.f32.partialorder %v3993, 0.0
      %vm4026 = vcmp.gt.f32.partialorder %v3994, 0.0
      %vm4027 = vcmp.gt.f32.partialorder %v3995, 0.0
      %vm4028 = vcmp.gt.f32.partialorder %v3996, 0.0
      %vm4029 = vcmp.gt.f32.partialorder %v3997, 0.0
      %vm4030 = vcmp.gt.f32.partialorder %v3998, 0.0
      %vm4031 = vcmp.gt.f32.partialorder %v3999, 0.0
      %vm4032 = vcmp.gt.f32.partialorder %v4000, 0.0
      %vm4033 = vcmp.gt.f32.partialorder %v4001, 0.0
      %vm4034 = vcmp.gt.f32.partialorder %v4002, 0.0
      %vm4035 = vcmp.gt.f32.partialorder %v4003, 0.0
      %vm4036 = vcmp.gt.f32.partialorder %v4004, 0.0
      %v4037 = vld [vmem:[%s6] sm:$0x1]
      %v4039 = vperm.slane %v4037, 0
      %v4041 = vmul.f32 %v4039, %v3973
      %v4042 = vmul.f32 %v4039, %v3974
      %v4043 = vmul.f32 %v4039, %v3975
      %v4044 = vmul.f32 %v4039, %v3976
      %v4045 = vmul.f32 %v4039, %v3977
      %v4046 = vmul.f32 %v4039, %v3978
      %v4047 = vmul.f32 %v4039, %v3979
      %v4048 = vmul.f32 %v4039, %v3980
      %v4049 = vmul.f32 %v4039, %v3981
      %v4050 = vmul.f32 %v4039, %v3982
      %v4051 = vmul.f32 %v4039, %v3983
      %v4052 = vmul.f32 %v4039, %v3984
      %v4053 = vmul.f32 %v4039, %v3985
      %v4054 = vmul.f32 %v4039, %v3986
      %v4055 = vmul.f32 %v4039, %v3987
      %v4056 = vmul.f32 %v4039, %v3988
      %v4057 = vmul.f32 %v4039, %v3989
      %v4058 = vmul.f32 %v4039, %v3990
      %v4059 = vmul.f32 %v4039, %v3991
      %v4060 = vmul.f32 %v4039, %v3992
      %v4061 = vmul.f32 %v4039, %v3993
      %v4062 = vmul.f32 %v4039, %v3994
      %v4063 = vmul.f32 %v4039, %v3995
      %v4064 = vmul.f32 %v4039, %v3996
      %v4065 = vmul.f32 %v4039, %v3997
      %v4066 = vmul.f32 %v4039, %v3998
      %v4067 = vmul.f32 %v4039, %v3999
      %v4068 = vmul.f32 %v4039, %v4000
      %v4069 = vmul.f32 %v4039, %v4001
      %v4070 = vmul.f32 %v4039, %v4002
      %v4071 = vmul.f32 %v4039, %v4003
      %v4072 = vmul.f32 %v4039, %v4004
      %v4073 = vsel %vm4005, %v3973, %v4041
      %v4074 = vsel %vm4006, %v3974, %v4042
      %v4075 = vsel %vm4007, %v3975, %v4043
      %v4076 = vsel %vm4008, %v3976, %v4044
      %v4077 = vsel %vm4009, %v3977, %v4045
      %v4078 = vsel %vm4010, %v3978, %v4046
      %v4079 = vsel %vm4011, %v3979, %v4047
      %v4080 = vsel %vm4012, %v3980, %v4048
      %v4081 = vsel %vm4013, %v3981, %v4049
      %v4082 = vsel %vm4014, %v3982, %v4050
      %v4083 = vsel %vm4015, %v3983, %v4051
      %v4084 = vsel %vm4016, %v3984, %v4052
      %v4085 = vsel %vm4017, %v3985, %v4053
      %v4086 = vsel %vm4018, %v3986, %v4054
      %v4087 = vsel %vm4019, %v3987, %v4055
      %v4088 = vsel %vm4020, %v3988, %v4056
      %v4089 = vsel %vm4021, %v3989, %v4057
      %v4090 = vsel %vm4022, %v3990, %v4058
      %v4091 = vsel %vm4023, %v3991, %v4059
      %v4092 = vsel %vm4024, %v3992, %v4060
      %v4093 = vsel %vm4025, %v3993, %v4061
      %v4094 = vsel %vm4026, %v3994, %v4062
      %v4095 = vsel %vm4027, %v3995, %v4063
      %v4096 = vsel %vm4028, %v3996, %v4064
      %v4097 = vsel %vm4029, %v3997, %v4065
      %v4098 = vsel %vm4030, %v3998, %v4066
      %v4099 = vsel %vm4031, %v3999, %v4067
      %v4100 = vsel %vm4032, %v4000, %v4068
      %v4101 = vsel %vm4033, %v4001, %v4069
      %v4102 = vsel %vm4034, %v4002, %v4070
      %v4103 = vsel %vm4035, %v4003, %v4071
      %v4104 = vsel %vm4036, %v4004, %v4072
      %4105 = vst [vmem:[%s278] sm:$0xff] %v4073
      %4106 = vst [vmem:[%s278 + $0x8] sm:$0xff] %v4074
      %4107 = vst [vmem:[%s278 + $0x10] sm:$0xff] %v4075
      %4108 = vst [vmem:[%s278 + $0x18] sm:$0xff] %v4076
      %4109 = vst [vmem:[%s278 + $0x20] sm:$0xff] %v4077
      %4110 = vst [vmem:[%s278 + $0x28] sm:$0xff] %v4078
      %4111 = vst [vmem:[%s278 + $0x30] sm:$0xff] %v4079
      %4112 = vst [vmem:[%s278 + $0x38] sm:$0xff] %v4080
      %4113 = vst [vmem:[%s278 + $0x40] sm:$0xff] %v4081
      %4114 = vst [vmem:[%s278 + $0x48] sm:$0xff] %v4082
      %4115 = vst [vmem:[%s278 + $0x50] sm:$0xff] %v4083
      %4116 = vst [vmem:[%s278 + $0x58] sm:$0xff] %v4084
      %4117 = vst [vmem:[%s278 + $0x60] sm:$0xff] %v4085
      %4118 = vst [vmem:[%s278 + $0x68] sm:$0xff] %v4086
      %4119 = vst [vmem:[%s278 + $0x70] sm:$0xff] %v4087
      %4120 = vst [vmem:[%s278 + $0x78] sm:$0xff] %v4088
      %4121 = vst [vmem:[%s278 + $0x80] sm:$0xff] %v4089
      %4122 = vst [vmem:[%s278 + $0x88] sm:$0xff] %v4090
      %4123 = vst [vmem:[%s278 + $0x90] sm:$0xff] %v4091
      %4124 = vst [vmem:[%s278 + $0x98] sm:$0xff] %v4092
      %4125 = vst [vmem:[%s278 + $0xa0] sm:$0xff] %v4093
      %4126 = vst [vmem:[%s278 + $0xa8] sm:$0xff] %v4094
      %4127 = vst [vmem:[%s278 + $0xb0] sm:$0xff] %v4095
      %4128 = vst [vmem:[%s278 + $0xb8] sm:$0xff] %v4096
      %4129 = vst [vmem:[%s278 + $0xc0] sm:$0xff] %v4097
      %4130 = vst [vmem:[%s278 + $0xc8] sm:$0xff] %v4098
      %4131 = vst [vmem:[%s278 + $0xd0] sm:$0xff] %v4099
      %4132 = vst [vmem:[%s278 + $0xd8] sm:$0xff] %v4100
      %4133 = vst [vmem:[%s278 + $0xe0] sm:$0xff] %v4101
      %4134 = vst [vmem:[%s278 + $0xe8] sm:$0xff] %v4102
      %4135 = vst [vmem:[%s278 + $0xf0] sm:$0xff] %v4103
      %4136 = vst [vmem:[%s278 + $0xf8] sm:$0xff] %v4104
      %p4137 = scmp.lt.s32.totalorder %s18, 1
      %s4138 = scalar_select %p4137, %s18, 1
      %s4139 = smul.addr %s4138, 32
      %s4140 = smul.addr %s4139, 8
      %s4141 = scalar_lea.vmem %s7, %s4140
      // Predicated region
      $region49: #{conv_block_pallas.1} parent=47 // pred_check
        %p4142 = pneg %p188
      $region50: #{conv_block_pallas.1} parent=47 // pred_check_branch
        %4144 = sbr.rel (%p4142) target = $region52
      $region51: #{conv_block_pallas.1} parent=47 // pred_region
        _
      $region52: #{conv_block_pallas.1} parent=47 // pred_fallthru
        _
    $region48: #{conv_block_pallas.1} parent=5 // pred_fallthru
      _
    %p4145 = scmp.le.s32.totalorder 2, %s13
    // Predicated region
    $region53: #{conv_block_pallas.1} parent=5 // pred_check
      %p4146 = pneg %p4145
    $region54: #{conv_block_pallas.1} parent=5 // pred_check_branch
      %4148 = sbr.rel (%p4146) target = $region56
    $region55: #{conv_block_pallas.1} parent=5 // pred_region
      %s4149 = ssub.s32 %s13, 2
      // Predicated region
      $region57: #{conv_block_pallas.1} parent=55 // pred_check
        %p4150 = pneg %p194
      $region58: #{conv_block_pallas.1} parent=55 // pred_check_branch
        %4152 = sbr.rel (%p4150) target = $region60
      $region59: #{conv_block_pallas.1} parent=55 // pred_region
        %p4153 = scmp.lt.s32.totalorder %s19, 1
        %s4154 = scalar_select %p4153, %s19, 1
        %s4155 = smul.addr %s4154, 32
        %s4156 = smul.addr %s4155, 8
        %s4157 = scalar_lea.vmem %s7, %s4156
      $region60: #{conv_block_pallas.1} parent=55 // pred_fallthru
        _
    $region56: #{conv_block_pallas.1} parent=5 // pred_fallthru
      _
  $region6: #{conv_block_pallas.1} parent=0 // loop_footer
    %s17 = sadd.s32 1, %s13
  $region7: #{conv_block_pallas.1} parent=0 // loop_footer_branch
    %12 = sbr.rel target = $region3
  $region8: #{conv_block_pallas.1} parent=0 // loop_exit
    _

</llo_original>
